<compile_context>
chip_gen: v7x
topology: tpu7x:2x2x1
jax: 0.10.0
libtpu: 0.0.40
codegen_flags: <defaults>
</compile_context>

<pallas_src>
import jax
import jax.numpy as jnp
from jax.experimental import pallas as pl
from jax.experimental.pallas import tpu as pltpu


# ---------------------------------------------------------------------------
# Kernel
# ---------------------------------------------------------------------------
def _layernorm_f32(x, w, b, eps=1e-5):
    """LayerNorm computed in fp32 (mirrors the fp16-safe LayerNorm subclass)."""
    xf = x.astype(jnp.float32)
    mean = jnp.mean(xf, axis=-1, keepdims=True)
    var = jnp.mean((xf - mean) ** 2, axis=-1, keepdims=True)
    return (xf - mean) * jax.lax.rsqrt(var + eps) * w + b


def _make_resblock_kernel(n_head, mask_per_batch):
    f32 = jnp.float32
    bf16 = jnp.bfloat16

    def kernel(x_ref, mask_ref,
               ln1_w_ref, ln1_b_ref,
               wqkv_ref, bqkv_ref,
               wout_ref, bout_ref,
               ln2_w_ref, ln2_b_ref,
               wfc_ref, bfc_ref,
               wproj_ref, bproj_ref,
               o_ref):
        B, L, D = x_ref.shape
        H = n_head
        hd = D // H

        # Resident (single-buffered) parameters.
        wqkv = wqkv_ref[...]      # (D, 3D)  bf16
        bqkv = bqkv_ref[0]        # (3D,)    f32 (Q scale folded in)
        wout = wout_ref[...]      # (D, D)   bf16
        bout = bout_ref[0]        # (D,)     f32
        wfc = wfc_ref[...]        # (D, 4D)  bf16
        bfc = bfc_ref[0]          # (4D,)    f32
        wproj = wproj_ref[...]    # (4D, D)  bf16
        bproj = bproj_ref[0]      # (D,)     f32
        ln1_w = ln1_w_ref[0]
        ln1_b = ln1_b_ref[0]
        ln2_w = ln2_w_ref[0]
        ln2_b = ln2_b_ref[0]

        if not mask_per_batch:
            shared_mask = mask_ref[0].astype(f32)   # (L, L), loaded once

        # Static unroll over the (small) batch block; all math stays 2-D with
        # L as the MXU M dimension.
        for b in range(B):
            x = x_ref[b].astype(f32)                               # (L, D)
            mask = mask_ref[b].astype(f32) if mask_per_batch else shared_mask

            # ---- attention branch: x + out_proj(MHA(LN1(x))) ----
            h = _layernorm_f32(x, ln1_w, ln1_b)                    # (L, D) f32
            # Fused lane-dense QKV projection (f32 accumulation on the MXU).
            qkv = jnp.dot(h.astype(bf16), wqkv,
                          preferred_element_type=f32) + bqkv       # (L, 3D)

            head_out = []
            for hh in range(H):
                # Free static lane slices of the fused (L, 3D) projection.
                q = qkv[:, hh * hd:(hh + 1) * hd].astype(bf16)          # (L, hd)
                k = qkv[:, D + hh * hd:D + (hh + 1) * hd].astype(bf16)
                v = qkv[:, 2 * D + hh * hd:2 * D + (hh + 1) * hd].astype(bf16)

                # Scores (Q already carries 1/sqrt(hd)); f32 softmax stats.
                s = jnp.einsum('qe,ke->qk', q, k,
                               preferred_element_type=f32) + mask       # (L, L)
                m = jnp.max(s, axis=-1, keepdims=True)
                p = jnp.exp(s - m)                                       # unnormalised
                l = jnp.sum(p, axis=-1, keepdims=True)

                # PV with unnormalised probabilities; normalise the (L, hd)
                # result instead of the (L, L) tensor (EUP reciprocal).
                o = jnp.dot(p.astype(bf16), v, preferred_element_type=f32)
                o = o * pl.reciprocal(l, approx=True)                    # (L, hd)
                head_out.append(o.astype(bf16))

            attn_in = jnp.concatenate(head_out, axis=-1)                 # (L, D) bf16
            attn = jnp.dot(attn_in, wout, preferred_element_type=f32) + bout
            x1 = x + attn

            # ---- MLP branch: x1 + c_proj(QuickGELU(c_fc(LN2(x1)))) ----
            h2 = _layernorm_f32(x1, ln2_w, ln2_b)
            ff = jnp.dot(h2.astype(bf16), wfc,
                         preferred_element_type=f32) + bfc               # (L, 4D)
            ff = ff * jax.nn.sigmoid(1.702 * ff)                          # QuickGELU (f32)
            y = jnp.dot(ff.astype(bf16), wproj,
                        preferred_element_type=f32) + bproj               # (L, D)

            o_ref[b] = (x1 + y).astype(o_ref.dtype)

    return kernel


# ---------------------------------------------------------------------------
# Wrapper
# ---------------------------------------------------------------------------
def residual_attention_block(x, attn_mask, params, n_head, *,
                             vmem_limit_bytes=None, max_batch_block=8):
    """x: (L, N, D) seq-first; attn_mask: (L, L) shared or (N, L, L) per-batch."""
    L, N, D = x.shape
    assert D % n_head == 0, "d_model must be divisible by n_head"
    hd = D // n_head
    scale = 1.0 / float(hd) ** 0.5
    wdt = jnp.bfloat16
    f32 = jnp.float32

    # TODO(synk): keep activations batch-major across the model to drop this
    # HBM round trip (and the inverse transpose below).
    xb = jnp.transpose(x, (1, 0, 2))                   # (N, L, D) for the batch grid

    # --- mask: shared (L, L) is single-buffered & fetched once; (N, L, L) per-batch
    if attn_mask.ndim == 2:
        assert attn_mask.shape == (L, L)
        mask_per_batch = False
        mask_arr = attn_mask.astype(f32)[None]                       # (1, L, L)
    else:
        assert attn_mask.shape == (N, L, L)
        mask_per_batch = True
        mask_arr = attn_mask.astype(f32)

    # --- parameter prep: fused lane-dense layouts, bf16 weights, Q scale folded
    in_w = params["in_proj_w"]                          # (3D, D) torch (out, in)
    in_b = params["in_proj_b"].astype(f32)              # (3D,)
    col_scale = jnp.concatenate(
        [jnp.full((D,), scale, f32), jnp.ones((2 * D,), f32)])       # scale Q columns
    wqkv = (in_w.T.astype(f32) * col_scale[None, :]).astype(wdt)     # (D, 3D)
    bqkv = (in_b * col_scale).reshape(1, 3 * D)

    wout = params["out_proj_w"].T.astype(wdt)                        # (D, D)
    bout = params["out_proj_b"].reshape(1, D).astype(f32)
    wfc = params["c_fc_w"].T.astype(wdt)                             # (D, 4D)
    bfc = params["c_fc_b"].reshape(1, -1).astype(f32)
    wproj = params["c_proj_w"].T.astype(wdt)                         # (4D, D)
    bproj = params["c_proj_b"].reshape(1, -1).astype(f32)

    ln1_w = params["ln1_w"].reshape(1, D).astype(f32)
    ln1_b = params["ln1_b"].reshape(1, D).astype(f32)
    ln2_w = params["ln2_w"].reshape(1, D).astype(f32)
    ln2_b = params["ln2_b"].reshape(1, D).astype(f32)

    const_args = (ln1_w, ln1_b, wqkv, bqkv, wout, bout,
                  ln2_w, ln2_b, wfc, bfc, wproj, bproj)

    # --- VMEM budget from the actual chip generation ---
    try:
        info = pltpu.get_tpu_info()
        vmem_cap = int(getattr(info, "vmem_capacity_bytes", 64 * 2 ** 20))
    except Exception:
        vmem_cap = 64 * 2 ** 20                        # conservative (v7x-sized)

    def nbytes(a):
        return int(a.size) * jnp.dtype(a.dtype).itemsize

    weight_bytes = sum(nbytes(a) for a in const_args)
    act_isz = jnp.dtype(x.dtype).itemsize

    def step_bytes(bblk):
        # x + out blocks, double-buffered
        stream = 2 * 2 * bblk * L * D * act_isz
        stream += (2 * bblk if mask_per_batch else 1) * L * L * 4
        # generous f32 estimate for one batch element's live intermediates
        # (qkv, ff, scores, residuals, bf16 copies)
        interm = int(1.5 * 4 * (14 * L * D + 3 * L * L))
        return weight_bytes + stream + interm

    # Pick the largest batch block (divisor of N) that fits half the chip VMEM.
    budget = int(0.5 * vmem_cap)
    b_blk = 1
    for cand in range(1, min(N, max_batch_block) + 1):
        if N % cand == 0 and step_bytes(cand) <= budget:
            b_blk = cand

    if vmem_limit_bytes is None:
        need = step_bytes(b_blk)
        vmem_limit_bytes = int(min(0.85 * vmem_cap,
                                   max(2 * need, 32 * 2 ** 20)))

    # --- BlockSpecs ---
    if mask_per_batch:
        mask_spec = pl.BlockSpec((b_blk, L, L), lambda i: (i, 0, 0))
    else:
        mask_spec = pl.BlockSpec((1, L, L), lambda i: (0, 0, 0),
                                 pipeline_mode=pl.Buffered(1))

    def const_spec(a):
        nd = a.ndim
        # Constant index across the batch grid -> single buffer (no 2x VMEM).
        return pl.BlockSpec(a.shape, lambda i, _nd=nd: (0,) * _nd,
                            pipeline_mode=pl.Buffered(1))

    in_specs = [
        pl.BlockSpec((b_blk, L, D), lambda i: (i, 0, 0)),   # x tile (double-buffered)
        mask_spec,
    ] + [const_spec(a) for a in const_args]

    kernel = _make_resblock_kernel(n_head, mask_per_batch)

    out = pl.pallas_call(
        kernel,
        out_shape=jax.ShapeDtypeStruct((N, L, D), x.dtype),
        grid=(N // b_blk,),
        in_specs=in_specs,
        out_specs=pl.BlockSpec((b_blk, L, D), lambda i: (i, 0, 0)),
        compiler_params=pltpu.CompilerParams(
            dimension_semantics=("parallel",),
            vmem_limit_bytes=vmem_limit_bytes),
    )(xb, mask_arr, *const_args)

    return jnp.transpose(out, (1, 0, 2)), attn_mask


# ---------------------------------------------------------------------------
# Pure-JAX reference (f32, for correctness check)
# ---------------------------------------------------------------------------
def _reference(x, mask, p, n_head):
    L, N, D = x.shape
    hd = D // n_head

    def ln(v, w, b, eps=1e-5):
        m = v.mean(-1, keepdims=True)
        var = ((v - m) ** 2).mean(-1, keepdims=True)
        return (v - m) / jnp.sqrt(var + eps) * w + b

    h = ln(x, p["ln1_w"], p["ln1_b"])
    qkv = h @ p["in_proj_w"].T + p["in_proj_b"]          # (L, N, 3D)
    q, k, v = jnp.split(qkv, 3, axis=-1)

    def heads(t):  # (L, N, D) -> (N, H, L, hd)
        return jnp.transpose(t.reshape(L, N, n_head, hd), (1, 2, 0, 3))

    qh, kh, vh = heads(q), heads(k), heads(v)
    s = jnp.einsum("nhqd,nhkd->nhqk", qh, kh) / jnp.sqrt(float(hd))
    if mask.ndim == 2:
        s = s + mask[None, None, :, :]
    else:
        s = s + mask[:, None, :, :]
    pattn = jax.nn.softmax(s, axis=-1)
    o = jnp.einsum("nhqk,nhkd->nhqd", pattn, vh)
    o = jnp.transpose(o, (2, 0, 1, 3)).reshape(L, N, D)
    o = o @ p["out_proj_w"].T + p["out_proj_b"]
    x1 = x + o

    h2 = ln(x1, p["ln2_w"], p["ln2_b"])
    ff = h2 @ p["c_fc_w"].T + p["c_fc_b"]
    ff = ff * jax.nn.sigmoid(1.702 * ff)
    ff = ff @ p["c_proj_w"].T + p["c_proj_b"]
    return x1 + ff


# ---------------------------------------------------------------------------
# Main
# ---------------------------------------------------------------------------
if __name__ == "__main__":
    L, N, D, H = 16, 2, 128, 4   # seq, batch, d_model, n_head (lane-dense last dim)

    key = jax.random.PRNGKey(0)
    ks = jax.random.split(key, 12)

    params = {
        "ln1_w": jnp.ones((D,), jnp.float32),
        "ln1_b": jnp.zeros((D,), jnp.float32),
        "in_proj_w": 0.05 * jax.random.normal(ks[0], (3 * D, D), jnp.float32),
        "in_proj_b": 0.05 * jax.random.normal(ks[1], (3 * D,), jnp.float32),
        "out_proj_w": 0.05 * jax.random.normal(ks[2], (D, D), jnp.float32),
        "out_proj_b": 0.05 * jax.random.normal(ks[3], (D,), jnp.float32),
        "ln2_w": jnp.ones((D,), jnp.float32),
        "ln2_b": jnp.zeros((D,), jnp.float32),
        "c_fc_w": 0.05 * jax.random.normal(ks[4], (4 * D, D), jnp.float32),
        "c_fc_b": 0.05 * jax.random.normal(ks[5], (4 * D,), jnp.float32),
        "c_proj_w": 0.05 * jax.random.normal(ks[6], (D, 4 * D), jnp.float32),
        "c_proj_b": 0.05 * jax.random.normal(ks[7], (D,), jnp.float32),
    }

    x = jax.random.normal(ks[8], (L, N, D), jnp.float32)
    # Additive float attention mask (N, L, L): causal, 0 allowed / -1e9 blocked.
    causal = jnp.where(jnp.tril(jnp.ones((L, L), jnp.float32)) > 0, 0.0, -1e9)
    attn_mask = jnp.broadcast_to(causal, (N, L, L))

    out, mask_out = residual_attention_block(x, attn_mask, params, H)
    out = jax.block_until_ready(out)

    ref = _reference(x, attn_mask, params, H)
    max_err = float(jnp.max(jnp.abs(out - ref)))
    # bf16 MXU operands + approx reciprocal -> looser tolerance than pure-f32.
    assert jnp.allclose(out, ref, atol=2e-2, rtol=2e-2), \
        f"mismatch vs reference (max abs err {max_err})"
    assert out.shape == (L, N, D)
    assert mask_out.shape == (N, L, L)

    print("KERNEL_OK")
</pallas_src>

<mosaic_0001>
module attributes {stable_mosaic.version = 11 : i64} {
  func.func @kernel(%arg0: i32, %arg1: memref<2x16x128xf32, #tpu.memory_space<vmem>>, %arg2: memref<2x16x16xf32, #tpu.memory_space<vmem>>, %arg3: memref<1x128xf32, #tpu.memory_space<vmem>>, %arg4: memref<1x128xf32, #tpu.memory_space<vmem>>, %arg5: memref<128x384xbf16, #tpu.memory_space<vmem>>, %arg6: memref<1x384xf32, #tpu.memory_space<vmem>>, %arg7: memref<128x128xbf16, #tpu.memory_space<vmem>>, %arg8: memref<1x128xf32, #tpu.memory_space<vmem>>, %arg9: memref<1x128xf32, #tpu.memory_space<vmem>>, %arg10: memref<1x128xf32, #tpu.memory_space<vmem>>, %arg11: memref<128x512xbf16, #tpu.memory_space<vmem>>, %arg12: memref<1x512xf32, #tpu.memory_space<vmem>>, %arg13: memref<512x128xbf16, #tpu.memory_space<vmem>>, %arg14: memref<1x128xf32, #tpu.memory_space<vmem>>, %arg15: memref<2x16x128xf32, #tpu.memory_space<vmem>>) attributes {dimension_semantics = [#tpu.dimension_semantics<parallel>], iteration_bounds = array<i64: 1>, scalar_prefetch = 0 : i64, scratch_operands = 0 : i64, tpu.core_type = #tpu.core_type<tc>, window_params = [{transform_indices = @transform_0, window_bounds = array<i64: 2, 16, 128>}, {transform_indices = @transform_1, window_bounds = array<i64: 2, 16, 16>}, {pipeline_mode = #tpu.pipeline_mode<synchronous>, transform_indices = @transform_2, window_bounds = array<i64: 1, 128>}, {pipeline_mode = #tpu.pipeline_mode<synchronous>, transform_indices = @transform_3, window_bounds = array<i64: 1, 128>}, {pipeline_mode = #tpu.pipeline_mode<synchronous>, transform_indices = @transform_4, window_bounds = array<i64: 128, 384>}, {pipeline_mode = #tpu.pipeline_mode<synchronous>, transform_indices = @transform_5, window_bounds = array<i64: 1, 384>}, {pipeline_mode = #tpu.pipeline_mode<synchronous>, transform_indices = @transform_6, window_bounds = array<i64: 128, 128>}, {pipeline_mode = #tpu.pipeline_mode<synchronous>, transform_indices = @transform_7, window_bounds = array<i64: 1, 128>}, {pipeline_mode = #tpu.pipeline_mode<synchronous>, transform_indices = @transform_8, window_bounds = array<i64: 1, 128>}, {pipeline_mode = #tpu.pipeline_mode<synchronous>, transform_indices = @transform_9, window_bounds = array<i64: 1, 128>}, {pipeline_mode = #tpu.pipeline_mode<synchronous>, transform_indices = @transform_10, window_bounds = array<i64: 128, 512>}, {pipeline_mode = #tpu.pipeline_mode<synchronous>, transform_indices = @transform_11, window_bounds = array<i64: 1, 512>}, {pipeline_mode = #tpu.pipeline_mode<synchronous>, transform_indices = @transform_12, window_bounds = array<i64: 512, 128>}, {pipeline_mode = #tpu.pipeline_mode<synchronous>, transform_indices = @transform_13, window_bounds = array<i64: 1, 128>}, {transform_indices = @transform_14, window_bounds = array<i64: 2, 16, 128>}]} {
    %c0 = arith.constant 0 : index
    %c0_0 = arith.constant 0 : index
    %0 = vector.load %arg5[%c0, %c0_0] : memref<128x384xbf16, #tpu.memory_space<vmem>>, vector<128x384xbf16>
    %c0_1 = arith.constant 0 : index
    %c0_2 = arith.constant 0 : index
    %1 = vector.load %arg6[%c0_1, %c0_2] : memref<1x384xf32, #tpu.memory_space<vmem>>, vector<1x384xf32>
    %2 = vector.shape_cast %1 : vector<1x384xf32> to vector<384xf32>
    %c0_3 = arith.constant 0 : index
    %c0_4 = arith.constant 0 : index
    %3 = vector.load %arg7[%c0_3, %c0_4] : memref<128x128xbf16, #tpu.memory_space<vmem>>, vector<128x128xbf16>
    %c0_5 = arith.constant 0 : index
    %c0_6 = arith.constant 0 : index
    %4 = vector.load %arg8[%c0_5, %c0_6] : memref<1x128xf32, #tpu.memory_space<vmem>>, vector<1x128xf32>
    %5 = vector.shape_cast %4 : vector<1x128xf32> to vector<128xf32>
    %c0_7 = arith.constant 0 : index
    %c0_8 = arith.constant 0 : index
    %6 = vector.load %arg11[%c0_7, %c0_8] : memref<128x512xbf16, #tpu.memory_space<vmem>>, vector<128x512xbf16>
    %c0_9 = arith.constant 0 : index
    %c0_10 = arith.constant 0 : index
    %7 = vector.load %arg12[%c0_9, %c0_10] : memref<1x512xf32, #tpu.memory_space<vmem>>, vector<1x512xf32>
    %8 = vector.shape_cast %7 : vector<1x512xf32> to vector<512xf32>
    %c0_11 = arith.constant 0 : index
    %c0_12 = arith.constant 0 : index
    %9 = vector.load %arg13[%c0_11, %c0_12] : memref<512x128xbf16, #tpu.memory_space<vmem>>, vector<512x128xbf16>
    %c0_13 = arith.constant 0 : index
    %c0_14 = arith.constant 0 : index
    %10 = vector.load %arg14[%c0_13, %c0_14] : memref<1x128xf32, #tpu.memory_space<vmem>>, vector<1x128xf32>
    %11 = vector.shape_cast %10 : vector<1x128xf32> to vector<128xf32>
    %c0_15 = arith.constant 0 : index
    %c0_16 = arith.constant 0 : index
    %12 = vector.load %arg3[%c0_15, %c0_16] : memref<1x128xf32, #tpu.memory_space<vmem>>, vector<1x128xf32>
    %13 = vector.shape_cast %12 : vector<1x128xf32> to vector<128xf32>
    %c0_17 = arith.constant 0 : index
    %c0_18 = arith.constant 0 : index
    %14 = vector.load %arg4[%c0_17, %c0_18] : memref<1x128xf32, #tpu.memory_space<vmem>>, vector<1x128xf32>
    %15 = vector.shape_cast %14 : vector<1x128xf32> to vector<128xf32>
    %c0_19 = arith.constant 0 : index
    %c0_20 = arith.constant 0 : index
    %16 = vector.load %arg9[%c0_19, %c0_20] : memref<1x128xf32, #tpu.memory_space<vmem>>, vector<1x128xf32>
    %17 = vector.shape_cast %16 : vector<1x128xf32> to vector<128xf32>
    %c0_21 = arith.constant 0 : index
    %c0_22 = arith.constant 0 : index
    %18 = vector.load %arg10[%c0_21, %c0_22] : memref<1x128xf32, #tpu.memory_space<vmem>>, vector<1x128xf32>
    %19 = vector.shape_cast %18 : vector<1x128xf32> to vector<128xf32>
    %c0_23 = arith.constant 0 : index
    %c0_24 = arith.constant 0 : index
    %c0_25 = arith.constant 0 : index
    %20 = vector.load %arg1[%c0_23, %c0_24, %c0_25] : memref<2x16x128xf32, #tpu.memory_space<vmem>>, vector<1x16x128xf32>
    %21 = vector.shape_cast %20 : vector<1x16x128xf32> to vector<16x128xf32>
    %c0_26 = arith.constant 0 : index
    %c0_27 = arith.constant 0 : index
    %c0_28 = arith.constant 0 : index
    %22 = vector.load %arg2[%c0_26, %c0_27, %c0_28] : memref<2x16x16xf32, #tpu.memory_space<vmem>>, vector<1x16x16xf32>
    %23 = vector.shape_cast %22 : vector<1x16x16xf32> to vector<16x16xf32>
    %cst = arith.constant dense<0.000000e+00> : vector<16xf32>
    %24 = vector.multi_reduction <add>, %21, %cst [1] : vector<16x128xf32> to vector<16xf32>
    %25 = vector.shape_cast %24 : vector<16xf32> to vector<16x1xf32>
    %cst_29 = arith.constant 1.280000e+02 : f32
    %26 = vector.broadcast %cst_29 : f32 to vector<16x1xf32>
    %27 = arith.divf %25, %26 : vector<16x1xf32>
    %28 = vector.broadcast %27 : vector<16x1xf32> to vector<16x128xf32>
    %29 = arith.subf %21, %28 : vector<16x128xf32>
    %30 = arith.mulf %29, %29 : vector<16x128xf32>
    %cst_30 = arith.constant dense<0.000000e+00> : vector<16xf32>
    %31 = vector.multi_reduction <add>, %30, %cst_30 [1] : vector<16x128xf32> to vector<16xf32>
    %32 = vector.shape_cast %31 : vector<16xf32> to vector<16x1xf32>
    %cst_31 = arith.constant 1.280000e+02 : f32
    %33 = vector.broadcast %cst_31 : f32 to vector<16x1xf32>
    %34 = arith.divf %32, %33 : vector<16x1xf32>
    %35 = vector.broadcast %27 : vector<16x1xf32> to vector<16x128xf32>
    %36 = arith.subf %21, %35 : vector<16x128xf32>
    %cst_32 = arith.constant 9.99999974E-6 : f32
    %37 = vector.broadcast %cst_32 : f32 to vector<16x1xf32>
    %38 = arith.addf %34, %37 : vector<16x1xf32>
    %39 = math.rsqrt %38 : vector<16x1xf32>
    %40 = vector.broadcast %39 : vector<16x1xf32> to vector<16x128xf32>
    %41 = arith.mulf %36, %40 : vector<16x128xf32>
    %42 = vector.shape_cast %13 : vector<128xf32> to vector<1x128xf32>
    %43 = vector.broadcast %42 : vector<1x128xf32> to vector<16x128xf32>
    %44 = arith.mulf %41, %43 : vector<16x128xf32>
    %45 = vector.shape_cast %15 : vector<128xf32> to vector<1x128xf32>
    %46 = vector.broadcast %45 : vector<1x128xf32> to vector<16x128xf32>
    %47 = arith.addf %44, %46 : vector<16x128xf32>
    %48 = arith.truncf %47 : vector<16x128xf32> to vector<16x128xbf16>
    %cst_33 = arith.constant dense<0.000000e+00> : vector<16x384xf32>
    %49 = tpu.matmul %48, %0, %cst_33 {dimension_numbers = #tpu.dot_dimension_numbers<[1], [0], [0], [1], [0, 0, 1, 1], [], []>} : vector<16x128xbf16>, vector<128x384xbf16>, vector<16x384xf32> -> vector<16x384xf32>
    %50 = vector.shape_cast %2 : vector<384xf32> to vector<1x384xf32>
    %51 = vector.broadcast %50 : vector<1x384xf32> to vector<16x384xf32>
    %52 = arith.addf %49, %51 : vector<16x384xf32>
    %53 = vector.extract_strided_slice %52 {offsets = [0, 0], sizes = [16, 32], strides = [1, 1]} : vector<16x384xf32> to vector<16x32xf32>
    %54 = arith.truncf %53 : vector<16x32xf32> to vector<16x32xbf16>
    %55 = vector.extract_strided_slice %52 {offsets = [0, 128], sizes = [16, 32], strides = [1, 1]} : vector<16x384xf32> to vector<16x32xf32>
    %56 = arith.truncf %55 : vector<16x32xf32> to vector<16x32xbf16>
    %57 = vector.extract_strided_slice %52 {offsets = [0, 256], sizes = [16, 32], strides = [1, 1]} : vector<16x384xf32> to vector<16x32xf32>
    %58 = arith.truncf %57 : vector<16x32xf32> to vector<16x32xbf16>
    "tpu.trace_start"() <{level = 10 : i32, message = "qe,ke->qk"}> : () -> ()
    %cst_34 = arith.constant dense<0.000000e+00> : vector<16x16xf32>
    %59 = tpu.matmul %54, %56, %cst_34 {dimension_numbers = #tpu.dot_dimension_numbers<[1], [1], [0], [0], [0, 0, 1, 0], [], []>} : vector<16x32xbf16>, vector<16x32xbf16>, vector<16x16xf32> -> vector<16x16xf32>
    "tpu.trace_stop"() : () -> ()
    %60 = arith.addf %59, %23 : vector<16x16xf32>
    %cst_35 = arith.constant dense<0xFF800000> : vector<16xf32>
    %61 = vector.multi_reduction <maximumf>, %60, %cst_35 [1] : vector<16x16xf32> to vector<16xf32>
    %62 = vector.shape_cast %61 : vector<16xf32> to vector<16x1xf32>
    %63 = vector.broadcast %62 : vector<16x1xf32> to vector<16x16xf32>
    %64 = arith.subf %60, %63 : vector<16x16xf32>
    %65 = math.exp %64 : vector<16x16xf32>
    %cst_36 = arith.constant dense<0.000000e+00> : vector<16xf32>
    %66 = vector.multi_reduction <add>, %65, %cst_36 [1] : vector<16x16xf32> to vector<16xf32>
    %67 = vector.shape_cast %66 : vector<16xf32> to vector<16x1xf32>
    %68 = arith.truncf %65 : vector<16x16xf32> to vector<16x16xbf16>
    %cst_37 = arith.constant dense<0.000000e+00> : vector<16x32xf32>
    %69 = tpu.matmul %68, %58, %cst_37 {dimension_numbers = #tpu.dot_dimension_numbers<[1], [0], [0], [1], [0, 0, 1, 1], [], []>} : vector<16x16xbf16>, vector<16x32xbf16>, vector<16x32xf32> -> vector<16x32xf32>
    %70 = tpu.reciprocal %67 {approx = true} : vector<16x1xf32> -> vector<16x1xf32>
    %71 = vector.broadcast %70 : vector<16x1xf32> to vector<16x32xf32>
    %72 = arith.mulf %69, %71 : vector<16x32xf32>
    %73 = arith.truncf %72 : vector<16x32xf32> to vector<16x32xbf16>
    %74 = vector.extract_strided_slice %52 {offsets = [0, 32], sizes = [16, 32], strides = [1, 1]} : vector<16x384xf32> to vector<16x32xf32>
    %75 = arith.truncf %74 : vector<16x32xf32> to vector<16x32xbf16>
    %76 = vector.extract_strided_slice %52 {offsets = [0, 160], sizes = [16, 32], strides = [1, 1]} : vector<16x384xf32> to vector<16x32xf32>
    %77 = arith.truncf %76 : vector<16x32xf32> to vector<16x32xbf16>
    %78 = vector.extract_strided_slice %52 {offsets = [0, 288], sizes = [16, 32], strides = [1, 1]} : vector<16x384xf32> to vector<16x32xf32>
    %79 = arith.truncf %78 : vector<16x32xf32> to vector<16x32xbf16>
    "tpu.trace_start"() <{level = 10 : i32, message = "qe,ke->qk"}> : () -> ()
    %cst_38 = arith.constant dense<0.000000e+00> : vector<16x16xf32>
    %80 = tpu.matmul %75, %77, %cst_38 {dimension_numbers = #tpu.dot_dimension_numbers<[1], [1], [0], [0], [0, 0, 1, 0], [], []>} : vector<16x32xbf16>, vector<16x32xbf16>, vector<16x16xf32> -> vector<16x16xf32>
    "tpu.trace_stop"() : () -> ()
    %81 = arith.addf %80, %23 : vector<16x16xf32>
    %cst_39 = arith.constant dense<0xFF800000> : vector<16xf32>
    %82 = vector.multi_reduction <maximumf>, %81, %cst_39 [1] : vector<16x16xf32> to vector<16xf32>
    %83 = vector.shape_cast %82 : vector<16xf32> to vector<16x1xf32>
    %84 = vector.broadcast %83 : vector<16x1xf32> to vector<16x16xf32>
    %85 = arith.subf %81, %84 : vector<16x16xf32>
    %86 = math.exp %85 : vector<16x16xf32>
    %cst_40 = arith.constant dense<0.000000e+00> : vector<16xf32>
    %87 = vector.multi_reduction <add>, %86, %cst_40 [1] : vector<16x16xf32> to vector<16xf32>
    %88 = vector.shape_cast %87 : vector<16xf32> to vector<16x1xf32>
    %89 = arith.truncf %86 : vector<16x16xf32> to vector<16x16xbf16>
    %cst_41 = arith.constant dense<0.000000e+00> : vector<16x32xf32>
    %90 = tpu.matmul %89, %79, %cst_41 {dimension_numbers = #tpu.dot_dimension_numbers<[1], [0], [0], [1], [0, 0, 1, 1], [], []>} : vector<16x16xbf16>, vector<16x32xbf16>, vector<16x32xf32> -> vector<16x32xf32>
    %91 = tpu.reciprocal %88 {approx = true} : vector<16x1xf32> -> vector<16x1xf32>
    %92 = vector.broadcast %91 : vector<16x1xf32> to vector<16x32xf32>
    %93 = arith.mulf %90, %92 : vector<16x32xf32>
    %94 = arith.truncf %93 : vector<16x32xf32> to vector<16x32xbf16>
    %95 = vector.extract_strided_slice %52 {offsets = [0, 64], sizes = [16, 32], strides = [1, 1]} : vector<16x384xf32> to vector<16x32xf32>
    %96 = arith.truncf %95 : vector<16x32xf32> to vector<16x32xbf16>
    %97 = vector.extract_strided_slice %52 {offsets = [0, 192], sizes = [16, 32], strides = [1, 1]} : vector<16x384xf32> to vector<16x32xf32>
    %98 = arith.truncf %97 : vector<16x32xf32> to vector<16x32xbf16>
    %99 = vector.extract_strided_slice %52 {offsets = [0, 320], sizes = [16, 32], strides = [1, 1]} : vector<16x384xf32> to vector<16x32xf32>
    %100 = arith.truncf %99 : vector<16x32xf32> to vector<16x32xbf16>
    "tpu.trace_start"() <{level = 10 : i32, message = "qe,ke->qk"}> : () -> ()
    %cst_42 = arith.constant dense<0.000000e+00> : vector<16x16xf32>
    %101 = tpu.matmul %96, %98, %cst_42 {dimension_numbers = #tpu.dot_dimension_numbers<[1], [1], [0], [0], [0, 0, 1, 0], [], []>} : vector<16x32xbf16>, vector<16x32xbf16>, vector<16x16xf32> -> vector<16x16xf32>
    "tpu.trace_stop"() : () -> ()
    %102 = arith.addf %101, %23 : vector<16x16xf32>
    %cst_43 = arith.constant dense<0xFF800000> : vector<16xf32>
    %103 = vector.multi_reduction <maximumf>, %102, %cst_43 [1] : vector<16x16xf32> to vector<16xf32>
    %104 = vector.shape_cast %103 : vector<16xf32> to vector<16x1xf32>
    %105 = vector.broadcast %104 : vector<16x1xf32> to vector<16x16xf32>
    %106 = arith.subf %102, %105 : vector<16x16xf32>
    %107 = math.exp %106 : vector<16x16xf32>
    %cst_44 = arith.constant dense<0.000000e+00> : vector<16xf32>
    %108 = vector.multi_reduction <add>, %107, %cst_44 [1] : vector<16x16xf32> to vector<16xf32>
    %109 = vector.shape_cast %108 : vector<16xf32> to vector<16x1xf32>
    %110 = arith.truncf %107 : vector<16x16xf32> to vector<16x16xbf16>
    %cst_45 = arith.constant dense<0.000000e+00> : vector<16x32xf32>
    %111 = tpu.matmul %110, %100, %cst_45 {dimension_numbers = #tpu.dot_dimension_numbers<[1], [0], [0], [1], [0, 0, 1, 1], [], []>} : vector<16x16xbf16>, vector<16x32xbf16>, vector<16x32xf32> -> vector<16x32xf32>
    %112 = tpu.reciprocal %109 {approx = true} : vector<16x1xf32> -> vector<16x1xf32>
    %113 = vector.broadcast %112 : vector<16x1xf32> to vector<16x32xf32>
    %114 = arith.mulf %111, %113 : vector<16x32xf32>
    %115 = arith.truncf %114 : vector<16x32xf32> to vector<16x32xbf16>
    %116 = vector.extract_strided_slice %52 {offsets = [0, 96], sizes = [16, 32], strides = [1, 1]} : vector<16x384xf32> to vector<16x32xf32>
    %117 = arith.truncf %116 : vector<16x32xf32> to vector<16x32xbf16>
    %118 = vector.extract_strided_slice %52 {offsets = [0, 224], sizes = [16, 32], strides = [1, 1]} : vector<16x384xf32> to vector<16x32xf32>
    %119 = arith.truncf %118 : vector<16x32xf32> to vector<16x32xbf16>
    %120 = vector.extract_strided_slice %52 {offsets = [0, 352], sizes = [16, 32], strides = [1, 1]} : vector<16x384xf32> to vector<16x32xf32>
    %121 = arith.truncf %120 : vector<16x32xf32> to vector<16x32xbf16>
    "tpu.trace_start"() <{level = 10 : i32, message = "qe,ke->qk"}> : () -> ()
    %cst_46 = arith.constant dense<0.000000e+00> : vector<16x16xf32>
    %122 = tpu.matmul %117, %119, %cst_46 {dimension_numbers = #tpu.dot_dimension_numbers<[1], [1], [0], [0], [0, 0, 1, 0], [], []>} : vector<16x32xbf16>, vector<16x32xbf16>, vector<16x16xf32> -> vector<16x16xf32>
    "tpu.trace_stop"() : () -> ()
    %123 = arith.addf %122, %23 : vector<16x16xf32>
    %cst_47 = arith.constant dense<0xFF800000> : vector<16xf32>
    %124 = vector.multi_reduction <maximumf>, %123, %cst_47 [1] : vector<16x16xf32> to vector<16xf32>
    %125 = vector.shape_cast %124 : vector<16xf32> to vector<16x1xf32>
    %126 = vector.broadcast %125 : vector<16x1xf32> to vector<16x16xf32>
    %127 = arith.subf %123, %126 : vector<16x16xf32>
    %128 = math.exp %127 : vector<16x16xf32>
    %cst_48 = arith.constant dense<0.000000e+00> : vector<16xf32>
    %129 = vector.multi_reduction <add>, %128, %cst_48 [1] : vector<16x16xf32> to vector<16xf32>
    %130 = vector.shape_cast %129 : vector<16xf32> to vector<16x1xf32>
    %131 = arith.truncf %128 : vector<16x16xf32> to vector<16x16xbf16>
    %cst_49 = arith.constant dense<0.000000e+00> : vector<16x32xf32>
    %132 = tpu.matmul %131, %121, %cst_49 {dimension_numbers = #tpu.dot_dimension_numbers<[1], [0], [0], [1], [0, 0, 1, 1], [], []>} : vector<16x16xbf16>, vector<16x32xbf16>, vector<16x32xf32> -> vector<16x32xf32>
    %133 = tpu.reciprocal %130 {approx = true} : vector<16x1xf32> -> vector<16x1xf32>
    %134 = vector.broadcast %133 : vector<16x1xf32> to vector<16x32xf32>
    %135 = arith.mulf %132, %134 : vector<16x32xf32>
    %136 = arith.truncf %135 : vector<16x32xf32> to vector<16x32xbf16>
    %137 = tpu.concatenate %73, %94, %115, %136 in 1 : vector<16x32xbf16>, vector<16x32xbf16>, vector<16x32xbf16>, vector<16x32xbf16> -> vector<16x128xbf16>
    %cst_50 = arith.constant dense<0.000000e+00> : vector<16x128xf32>
    %138 = tpu.matmul %137, %3, %cst_50 {dimension_numbers = #tpu.dot_dimension_numbers<[1], [0], [0], [1], [0, 0, 1, 1], [], []>} : vector<16x128xbf16>, vector<128x128xbf16>, vector<16x128xf32> -> vector<16x128xf32>
    %139 = vector.shape_cast %5 : vector<128xf32> to vector<1x128xf32>
    %140 = vector.broadcast %139 : vector<1x128xf32> to vector<16x128xf32>
    %141 = arith.addf %138, %140 : vector<16x128xf32>
    %142 = arith.addf %21, %141 : vector<16x128xf32>
    %cst_51 = arith.constant dense<0.000000e+00> : vector<16xf32>
    %143 = vector.multi_reduction <add>, %142, %cst_51 [1] : vector<16x128xf32> to vector<16xf32>
    %144 = vector.shape_cast %143 : vector<16xf32> to vector<16x1xf32>
    %cst_52 = arith.constant 1.280000e+02 : f32
    %145 = vector.broadcast %cst_52 : f32 to vector<16x1xf32>
    %146 = arith.divf %144, %145 : vector<16x1xf32>
    %147 = vector.broadcast %146 : vector<16x1xf32> to vector<16x128xf32>
    %148 = arith.subf %142, %147 : vector<16x128xf32>
    %149 = arith.mulf %148, %148 : vector<16x128xf32>
    %cst_53 = arith.constant dense<0.000000e+00> : vector<16xf32>
    %150 = vector.multi_reduction <add>, %149, %cst_53 [1] : vector<16x128xf32> to vector<16xf32>
    %151 = vector.shape_cast %150 : vector<16xf32> to vector<16x1xf32>
    %cst_54 = arith.constant 1.280000e+02 : f32
    %152 = vector.broadcast %cst_54 : f32 to vector<16x1xf32>
    %153 = arith.divf %151, %152 : vector<16x1xf32>
    %154 = vector.broadcast %146 : vector<16x1xf32> to vector<16x128xf32>
    %155 = arith.subf %142, %154 : vector<16x128xf32>
    %cst_55 = arith.constant 9.99999974E-6 : f32
    %156 = vector.broadcast %cst_55 : f32 to vector<16x1xf32>
    %157 = arith.addf %153, %156 : vector<16x1xf32>
    %158 = math.rsqrt %157 : vector<16x1xf32>
    %159 = vector.broadcast %158 : vector<16x1xf32> to vector<16x128xf32>
    %160 = arith.mulf %155, %159 : vector<16x128xf32>
    %161 = vector.shape_cast %17 : vector<128xf32> to vector<1x128xf32>
    %162 = vector.broadcast %161 : vector<1x128xf32> to vector<16x128xf32>
    %163 = arith.mulf %160, %162 : vector<16x128xf32>
    %164 = vector.shape_cast %19 : vector<128xf32> to vector<1x128xf32>
    %165 = vector.broadcast %164 : vector<1x128xf32> to vector<16x128xf32>
    %166 = arith.addf %163, %165 : vector<16x128xf32>
    %167 = arith.truncf %166 : vector<16x128xf32> to vector<16x128xbf16>
    %cst_56 = arith.constant dense<0.000000e+00> : vector<16x512xf32>
    %168 = tpu.matmul %167, %6, %cst_56 {dimension_numbers = #tpu.dot_dimension_numbers<[1], [0], [0], [1], [0, 0, 1, 1], [], []>} : vector<16x128xbf16>, vector<128x512xbf16>, vector<16x512xf32> -> vector<16x512xf32>
    %169 = vector.shape_cast %8 : vector<512xf32> to vector<1x512xf32>
    %170 = vector.broadcast %169 : vector<1x512xf32> to vector<16x512xf32>
    %171 = arith.addf %168, %170 : vector<16x512xf32>
    %cst_57 = arith.constant 1.702000e+00 : f32
    %172 = vector.broadcast %cst_57 : f32 to vector<16x512xf32>
    %173 = arith.mulf %172, %171 : vector<16x512xf32>
    %174 = arith.negf %173 : vector<16x512xf32>
    %175 = math.exp %174 : vector<16x512xf32>
    %cst_58 = arith.constant 1.000000e+00 : f32
    %176 = vector.broadcast %cst_58 : f32 to vector<16x512xf32>
    %177 = arith.addf %176, %175 : vector<16x512xf32>
    %178 = arith.divf %176, %177 : vector<16x512xf32>
    %179 = arith.mulf %171, %178 : vector<16x512xf32>
    %180 = arith.truncf %179 : vector<16x512xf32> to vector<16x512xbf16>
    %cst_59 = arith.constant dense<0.000000e+00> : vector<16x128xf32>
    %181 = tpu.matmul %180, %9, %cst_59 {dimension_numbers = #tpu.dot_dimension_numbers<[1], [0], [0], [1], [0, 0, 1, 1], [], []>} : vector<16x512xbf16>, vector<512x128xbf16>, vector<16x128xf32> -> vector<16x128xf32>
    %182 = vector.shape_cast %11 : vector<128xf32> to vector<1x128xf32>
    %183 = vector.broadcast %182 : vector<1x128xf32> to vector<16x128xf32>
    %184 = arith.addf %181, %183 : vector<16x128xf32>
    %185 = arith.addf %142, %184 : vector<16x128xf32>
    %c0_60 = arith.constant 0 : index
    %c0_61 = arith.constant 0 : index
    %c0_62 = arith.constant 0 : index
    %186 = vector.load %arg15[%c0_60, %c0_61, %c0_62] : memref<2x16x128xf32, #tpu.memory_space<vmem>>, vector<1x16x128xf32>
    %187 = vector.shape_cast %186 : vector<1x16x128xf32> to vector<16x128xf32>
    %188 = vector.shape_cast %185 : vector<16x128xf32> to vector<1x16x128xf32>
    tpu.vector_store %arg15[%c0_60, %c0_61, %c0_62], %188 {strides = array<i32>} : memref<2x16x128xf32, #tpu.memory_space<vmem>>, vector<1x16x128xf32>,
    %c1 = arith.constant 1 : index
    %c0_63 = arith.constant 0 : index
    %c0_64 = arith.constant 0 : index
    %189 = vector.load %arg1[%c1, %c0_63, %c0_64] : memref<2x16x128xf32, #tpu.memory_space<vmem>>, vector<1x16x128xf32>
    %190 = vector.shape_cast %189 : vector<1x16x128xf32> to vector<16x128xf32>
    %c1_65 = arith.constant 1 : index
    %c0_66 = arith.constant 0 : index
    %c0_67 = arith.constant 0 : index
    %191 = vector.load %arg2[%c1_65, %c0_66, %c0_67] : memref<2x16x16xf32, #tpu.memory_space<vmem>>, vector<1x16x16xf32>
    %192 = vector.shape_cast %191 : vector<1x16x16xf32> to vector<16x16xf32>
    %cst_68 = arith.constant dense<0.000000e+00> : vector<16xf32>
    %193 = vector.multi_reduction <add>, %190, %cst_68 [1] : vector<16x128xf32> to vector<16xf32>
    %194 = vector.shape_cast %193 : vector<16xf32> to vector<16x1xf32>
    %cst_69 = arith.constant 1.280000e+02 : f32
    %195 = vector.broadcast %cst_69 : f32 to vector<16x1xf32>
    %196 = arith.divf %194, %195 : vector<16x1xf32>
    %197 = vector.broadcast %196 : vector<16x1xf32> to vector<16x128xf32>
    %198 = arith.subf %190, %197 : vector<16x128xf32>
    %199 = arith.mulf %198, %198 : vector<16x128xf32>
    %cst_70 = arith.constant dense<0.000000e+00> : vector<16xf32>
    %200 = vector.multi_reduction <add>, %199, %cst_70 [1] : vector<16x128xf32> to vector<16xf32>
    %201 = vector.shape_cast %200 : vector<16xf32> to vector<16x1xf32>
    %cst_71 = arith.constant 1.280000e+02 : f32
    %202 = vector.broadcast %cst_71 : f32 to vector<16x1xf32>
    %203 = arith.divf %201, %202 : vector<16x1xf32>
    %204 = vector.broadcast %196 : vector<16x1xf32> to vector<16x128xf32>
    %205 = arith.subf %190, %204 : vector<16x128xf32>
    %cst_72 = arith.constant 9.99999974E-6 : f32
    %206 = vector.broadcast %cst_72 : f32 to vector<16x1xf32>
    %207 = arith.addf %203, %206 : vector<16x1xf32>
    %208 = math.rsqrt %207 : vector<16x1xf32>
    %209 = vector.broadcast %208 : vector<16x1xf32> to vector<16x128xf32>
    %210 = arith.mulf %205, %209 : vector<16x128xf32>
    %211 = vector.shape_cast %13 : vector<128xf32> to vector<1x128xf32>
    %212 = vector.broadcast %211 : vector<1x128xf32> to vector<16x128xf32>
    %213 = arith.mulf %210, %212 : vector<16x128xf32>
    %214 = vector.shape_cast %15 : vector<128xf32> to vector<1x128xf32>
    %215 = vector.broadcast %214 : vector<1x128xf32> to vector<16x128xf32>
    %216 = arith.addf %213, %215 : vector<16x128xf32>
    %217 = arith.truncf %216 : vector<16x128xf32> to vector<16x128xbf16>
    %cst_73 = arith.constant dense<0.000000e+00> : vector<16x384xf32>
    %218 = tpu.matmul %217, %0, %cst_73 {dimension_numbers = #tpu.dot_dimension_numbers<[1], [0], [0], [1], [0, 0, 1, 1], [], []>} : vector<16x128xbf16>, vector<128x384xbf16>, vector<16x384xf32> -> vector<16x384xf32>
    %219 = vector.shape_cast %2 : vector<384xf32> to vector<1x384xf32>
    %220 = vector.broadcast %219 : vector<1x384xf32> to vector<16x384xf32>
    %221 = arith.addf %218, %220 : vector<16x384xf32>
    %222 = vector.extract_strided_slice %221 {offsets = [0, 0], sizes = [16, 32], strides = [1, 1]} : vector<16x384xf32> to vector<16x32xf32>
    %223 = arith.truncf %222 : vector<16x32xf32> to vector<16x32xbf16>
    %224 = vector.extract_strided_slice %221 {offsets = [0, 128], sizes = [16, 32], strides = [1, 1]} : vector<16x384xf32> to vector<16x32xf32>
    %225 = arith.truncf %224 : vector<16x32xf32> to vector<16x32xbf16>
    %226 = vector.extract_strided_slice %221 {offsets = [0, 256], sizes = [16, 32], strides = [1, 1]} : vector<16x384xf32> to vector<16x32xf32>
    %227 = arith.truncf %226 : vector<16x32xf32> to vector<16x32xbf16>
    "tpu.trace_start"() <{level = 10 : i32, message = "qe,ke->qk"}> : () -> ()
    %cst_74 = arith.constant dense<0.000000e+00> : vector<16x16xf32>
    %228 = tpu.matmul %223, %225, %cst_74 {dimension_numbers = #tpu.dot_dimension_numbers<[1], [1], [0], [0], [0, 0, 1, 0], [], []>} : vector<16x32xbf16>, vector<16x32xbf16>, vector<16x16xf32> -> vector<16x16xf32>
    "tpu.trace_stop"() : () -> ()
    %229 = arith.addf %228, %192 : vector<16x16xf32>
    %cst_75 = arith.constant dense<0xFF800000> : vector<16xf32>
    %230 = vector.multi_reduction <maximumf>, %229, %cst_75 [1] : vector<16x16xf32> to vector<16xf32>
    %231 = vector.shape_cast %230 : vector<16xf32> to vector<16x1xf32>
    %232 = vector.broadcast %231 : vector<16x1xf32> to vector<16x16xf32>
    %233 = arith.subf %229, %232 : vector<16x16xf32>
    %234 = math.exp %233 : vector<16x16xf32>
    %cst_76 = arith.constant dense<0.000000e+00> : vector<16xf32>
    %235 = vector.multi_reduction <add>, %234, %cst_76 [1] : vector<16x16xf32> to vector<16xf32>
    %236 = vector.shape_cast %235 : vector<16xf32> to vector<16x1xf32>
    %237 = arith.truncf %234 : vector<16x16xf32> to vector<16x16xbf16>
    %cst_77 = arith.constant dense<0.000000e+00> : vector<16x32xf32>
    %238 = tpu.matmul %237, %227, %cst_77 {dimension_numbers = #tpu.dot_dimension_numbers<[1], [0], [0], [1], [0, 0, 1, 1], [], []>} : vector<16x16xbf16>, vector<16x32xbf16>, vector<16x32xf32> -> vector<16x32xf32>
    %239 = tpu.reciprocal %236 {approx = true} : vector<16x1xf32> -> vector<16x1xf32>
    %240 = vector.broadcast %239 : vector<16x1xf32> to vector<16x32xf32>
    %241 = arith.mulf %238, %240 : vector<16x32xf32>
    %242 = arith.truncf %241 : vector<16x32xf32> to vector<16x32xbf16>
    %243 = vector.extract_strided_slice %221 {offsets = [0, 32], sizes = [16, 32], strides = [1, 1]} : vector<16x384xf32> to vector<16x32xf32>
    %244 = arith.truncf %243 : vector<16x32xf32> to vector<16x32xbf16>
    %245 = vector.extract_strided_slice %221 {offsets = [0, 160], sizes = [16, 32], strides = [1, 1]} : vector<16x384xf32> to vector<16x32xf32>
    %246 = arith.truncf %245 : vector<16x32xf32> to vector<16x32xbf16>
    %247 = vector.extract_strided_slice %221 {offsets = [0, 288], sizes = [16, 32], strides = [1, 1]} : vector<16x384xf32> to vector<16x32xf32>
    %248 = arith.truncf %247 : vector<16x32xf32> to vector<16x32xbf16>
    "tpu.trace_start"() <{level = 10 : i32, message = "qe,ke->qk"}> : () -> ()
    %cst_78 = arith.constant dense<0.000000e+00> : vector<16x16xf32>
    %249 = tpu.matmul %244, %246, %cst_78 {dimension_numbers = #tpu.dot_dimension_numbers<[1], [1], [0], [0], [0, 0, 1, 0], [], []>} : vector<16x32xbf16>, vector<16x32xbf16>, vector<16x16xf32> -> vector<16x16xf32>
    "tpu.trace_stop"() : () -> ()
    %250 = arith.addf %249, %192 : vector<16x16xf32>
    %cst_79 = arith.constant dense<0xFF800000> : vector<16xf32>
    %251 = vector.multi_reduction <maximumf>, %250, %cst_79 [1] : vector<16x16xf32> to vector<16xf32>
    %252 = vector.shape_cast %251 : vector<16xf32> to vector<16x1xf32>
    %253 = vector.broadcast %252 : vector<16x1xf32> to vector<16x16xf32>
    %254 = arith.subf %250, %253 : vector<16x16xf32>
    %255 = math.exp %254 : vector<16x16xf32>
    %cst_80 = arith.constant dense<0.000000e+00> : vector<16xf32>
    %256 = vector.multi_reduction <add>, %255, %cst_80 [1] : vector<16x16xf32> to vector<16xf32>
    %257 = vector.shape_cast %256 : vector<16xf32> to vector<16x1xf32>
    %258 = arith.truncf %255 : vector<16x16xf32> to vector<16x16xbf16>
    %cst_81 = arith.constant dense<0.000000e+00> : vector<16x32xf32>
    %259 = tpu.matmul %258, %248, %cst_81 {dimension_numbers = #tpu.dot_dimension_numbers<[1], [0], [0], [1], [0, 0, 1, 1], [], []>} : vector<16x16xbf16>, vector<16x32xbf16>, vector<16x32xf32> -> vector<16x32xf32>
    %260 = tpu.reciprocal %257 {approx = true} : vector<16x1xf32> -> vector<16x1xf32>
    %261 = vector.broadcast %260 : vector<16x1xf32> to vector<16x32xf32>
    %262 = arith.mulf %259, %261 : vector<16x32xf32>
    %263 = arith.truncf %262 : vector<16x32xf32> to vector<16x32xbf16>
    %264 = vector.extract_strided_slice %221 {offsets = [0, 64], sizes = [16, 32], strides = [1, 1]} : vector<16x384xf32> to vector<16x32xf32>
    %265 = arith.truncf %264 : vector<16x32xf32> to vector<16x32xbf16>
    %266 = vector.extract_strided_slice %221 {offsets = [0, 192], sizes = [16, 32], strides = [1, 1]} : vector<16x384xf32> to vector<16x32xf32>
    %267 = arith.truncf %266 : vector<16x32xf32> to vector<16x32xbf16>
    %268 = vector.extract_strided_slice %221 {offsets = [0, 320], sizes = [16, 32], strides = [1, 1]} : vector<16x384xf32> to vector<16x32xf32>
    %269 = arith.truncf %268 : vector<16x32xf32> to vector<16x32xbf16>
    "tpu.trace_start"() <{level = 10 : i32, message = "qe,ke->qk"}> : () -> ()
    %cst_82 = arith.constant dense<0.000000e+00> : vector<16x16xf32>
    %270 = tpu.matmul %265, %267, %cst_82 {dimension_numbers = #tpu.dot_dimension_numbers<[1], [1], [0], [0], [0, 0, 1, 0], [], []>} : vector<16x32xbf16>, vector<16x32xbf16>, vector<16x16xf32> -> vector<16x16xf32>
    "tpu.trace_stop"() : () -> ()
    %271 = arith.addf %270, %192 : vector<16x16xf32>
    %cst_83 = arith.constant dense<0xFF800000> : vector<16xf32>
    %272 = vector.multi_reduction <maximumf>, %271, %cst_83 [1] : vector<16x16xf32> to vector<16xf32>
    %273 = vector.shape_cast %272 : vector<16xf32> to vector<16x1xf32>
    %274 = vector.broadcast %273 : vector<16x1xf32> to vector<16x16xf32>
    %275 = arith.subf %271, %274 : vector<16x16xf32>
    %276 = math.exp %275 : vector<16x16xf32>
    %cst_84 = arith.constant dense<0.000000e+00> : vector<16xf32>
    %277 = vector.multi_reduction <add>, %276, %cst_84 [1] : vector<16x16xf32> to vector<16xf32>
    %278 = vector.shape_cast %277 : vector<16xf32> to vector<16x1xf32>
    %279 = arith.truncf %276 : vector<16x16xf32> to vector<16x16xbf16>
    %cst_85 = arith.constant dense<0.000000e+00> : vector<16x32xf32>
    %280 = tpu.matmul %279, %269, %cst_85 {dimension_numbers = #tpu.dot_dimension_numbers<[1], [0], [0], [1], [0, 0, 1, 1], [], []>} : vector<16x16xbf16>, vector<16x32xbf16>, vector<16x32xf32> -> vector<16x32xf32>
    %281 = tpu.reciprocal %278 {approx = true} : vector<16x1xf32> -> vector<16x1xf32>
    %282 = vector.broadcast %281 : vector<16x1xf32> to vector<16x32xf32>
    %283 = arith.mulf %280, %282 : vector<16x32xf32>
    %284 = arith.truncf %283 : vector<16x32xf32> to vector<16x32xbf16>
    %285 = vector.extract_strided_slice %221 {offsets = [0, 96], sizes = [16, 32], strides = [1, 1]} : vector<16x384xf32> to vector<16x32xf32>
    %286 = arith.truncf %285 : vector<16x32xf32> to vector<16x32xbf16>
    %287 = vector.extract_strided_slice %221 {offsets = [0, 224], sizes = [16, 32], strides = [1, 1]} : vector<16x384xf32> to vector<16x32xf32>
    %288 = arith.truncf %287 : vector<16x32xf32> to vector<16x32xbf16>
    %289 = vector.extract_strided_slice %221 {offsets = [0, 352], sizes = [16, 32], strides = [1, 1]} : vector<16x384xf32> to vector<16x32xf32>
    %290 = arith.truncf %289 : vector<16x32xf32> to vector<16x32xbf16>
    "tpu.trace_start"() <{level = 10 : i32, message = "qe,ke->qk"}> : () -> ()
    %cst_86 = arith.constant dense<0.000000e+00> : vector<16x16xf32>
    %291 = tpu.matmul %286, %288, %cst_86 {dimension_numbers = #tpu.dot_dimension_numbers<[1], [1], [0], [0], [0, 0, 1, 0], [], []>} : vector<16x32xbf16>, vector<16x32xbf16>, vector<16x16xf32> -> vector<16x16xf32>
    "tpu.trace_stop"() : () -> ()
    %292 = arith.addf %291, %192 : vector<16x16xf32>
    %cst_87 = arith.constant dense<0xFF800000> : vector<16xf32>
    %293 = vector.multi_reduction <maximumf>, %292, %cst_87 [1] : vector<16x16xf32> to vector<16xf32>
    %294 = vector.shape_cast %293 : vector<16xf32> to vector<16x1xf32>
    %295 = vector.broadcast %294 : vector<16x1xf32> to vector<16x16xf32>
    %296 = arith.subf %292, %295 : vector<16x16xf32>
    %297 = math.exp %296 : vector<16x16xf32>
    %cst_88 = arith.constant dense<0.000000e+00> : vector<16xf32>
    %298 = vector.multi_reduction <add>, %297, %cst_88 [1] : vector<16x16xf32> to vector<16xf32>
    %299 = vector.shape_cast %298 : vector<16xf32> to vector<16x1xf32>
    %300 = arith.truncf %297 : vector<16x16xf32> to vector<16x16xbf16>
    %cst_89 = arith.constant dense<0.000000e+00> : vector<16x32xf32>
    %301 = tpu.matmul %300, %290, %cst_89 {dimension_numbers = #tpu.dot_dimension_numbers<[1], [0], [0], [1], [0, 0, 1, 1], [], []>} : vector<16x16xbf16>, vector<16x32xbf16>, vector<16x32xf32> -> vector<16x32xf32>
    %302 = tpu.reciprocal %299 {approx = true} : vector<16x1xf32> -> vector<16x1xf32>
    %303 = vector.broadcast %302 : vector<16x1xf32> to vector<16x32xf32>
    %304 = arith.mulf %301, %303 : vector<16x32xf32>
    %305 = arith.truncf %304 : vector<16x32xf32> to vector<16x32xbf16>
    %306 = tpu.concatenate %242, %263, %284, %305 in 1 : vector<16x32xbf16>, vector<16x32xbf16>, vector<16x32xbf16>, vector<16x32xbf16> -> vector<16x128xbf16>
    %cst_90 = arith.constant dense<0.000000e+00> : vector<16x128xf32>
    %307 = tpu.matmul %306, %3, %cst_90 {dimension_numbers = #tpu.dot_dimension_numbers<[1], [0], [0], [1], [0, 0, 1, 1], [], []>} : vector<16x128xbf16>, vector<128x128xbf16>, vector<16x128xf32> -> vector<16x128xf32>
    %308 = vector.shape_cast %5 : vector<128xf32> to vector<1x128xf32>
    %309 = vector.broadcast %308 : vector<1x128xf32> to vector<16x128xf32>
    %310 = arith.addf %307, %309 : vector<16x128xf32>
    %311 = arith.addf %190, %310 : vector<16x128xf32>
    %cst_91 = arith.constant dense<0.000000e+00> : vector<16xf32>
    %312 = vector.multi_reduction <add>, %311, %cst_91 [1] : vector<16x128xf32> to vector<16xf32>
    %313 = vector.shape_cast %312 : vector<16xf32> to vector<16x1xf32>
    %cst_92 = arith.constant 1.280000e+02 : f32
    %314 = vector.broadcast %cst_92 : f32 to vector<16x1xf32>
    %315 = arith.divf %313, %314 : vector<16x1xf32>
    %316 = vector.broadcast %315 : vector<16x1xf32> to vector<16x128xf32>
    %317 = arith.subf %311, %316 : vector<16x128xf32>
    %318 = arith.mulf %317, %317 : vector<16x128xf32>
    %cst_93 = arith.constant dense<0.000000e+00> : vector<16xf32>
    %319 = vector.multi_reduction <add>, %318, %cst_93 [1] : vector<16x128xf32> to vector<16xf32>
    %320 = vector.shape_cast %319 : vector<16xf32> to vector<16x1xf32>
    %cst_94 = arith.constant 1.280000e+02 : f32
    %321 = vector.broadcast %cst_94 : f32 to vector<16x1xf32>
    %322 = arith.divf %320, %321 : vector<16x1xf32>
    %323 = vector.broadcast %315 : vector<16x1xf32> to vector<16x128xf32>
    %324 = arith.subf %311, %323 : vector<16x128xf32>
    %cst_95 = arith.constant 9.99999974E-6 : f32
    %325 = vector.broadcast %cst_95 : f32 to vector<16x1xf32>
    %326 = arith.addf %322, %325 : vector<16x1xf32>
    %327 = math.rsqrt %326 : vector<16x1xf32>
    %328 = vector.broadcast %327 : vector<16x1xf32> to vector<16x128xf32>
    %329 = arith.mulf %324, %328 : vector<16x128xf32>
    %330 = vector.shape_cast %17 : vector<128xf32> to vector<1x128xf32>
    %331 = vector.broadcast %330 : vector<1x128xf32> to vector<16x128xf32>
    %332 = arith.mulf %329, %331 : vector<16x128xf32>
    %333 = vector.shape_cast %19 : vector<128xf32> to vector<1x128xf32>
    %334 = vector.broadcast %333 : vector<1x128xf32> to vector<16x128xf32>
    %335 = arith.addf %332, %334 : vector<16x128xf32>
    %336 = arith.truncf %335 : vector<16x128xf32> to vector<16x128xbf16>
    %cst_96 = arith.constant dense<0.000000e+00> : vector<16x512xf32>
    %337 = tpu.matmul %336, %6, %cst_96 {dimension_numbers = #tpu.dot_dimension_numbers<[1], [0], [0], [1], [0, 0, 1, 1], [], []>} : vector<16x128xbf16>, vector<128x512xbf16>, vector<16x512xf32> -> vector<16x512xf32>
    %338 = vector.shape_cast %8 : vector<512xf32> to vector<1x512xf32>
    %339 = vector.broadcast %338 : vector<1x512xf32> to vector<16x512xf32>
    %340 = arith.addf %337, %339 : vector<16x512xf32>
    %cst_97 = arith.constant 1.702000e+00 : f32
    %341 = vector.broadcast %cst_97 : f32 to vector<16x512xf32>
    %342 = arith.mulf %341, %340 : vector<16x512xf32>
    %343 = arith.negf %342 : vector<16x512xf32>
    %344 = math.exp %343 : vector<16x512xf32>
    %cst_98 = arith.constant 1.000000e+00 : f32
    %345 = vector.broadcast %cst_98 : f32 to vector<16x512xf32>
    %346 = arith.addf %345, %344 : vector<16x512xf32>
    %347 = arith.divf %345, %346 : vector<16x512xf32>
    %348 = arith.mulf %340, %347 : vector<16x512xf32>
    %349 = arith.truncf %348 : vector<16x512xf32> to vector<16x512xbf16>
    %cst_99 = arith.constant dense<0.000000e+00> : vector<16x128xf32>
    %350 = tpu.matmul %349, %9, %cst_99 {dimension_numbers = #tpu.dot_dimension_numbers<[1], [0], [0], [1], [0, 0, 1, 1], [], []>} : vector<16x512xbf16>, vector<512x128xbf16>, vector<16x128xf32> -> vector<16x128xf32>
    %351 = vector.shape_cast %11 : vector<128xf32> to vector<1x128xf32>
    %352 = vector.broadcast %351 : vector<1x128xf32> to vector<16x128xf32>
    %353 = arith.addf %350, %352 : vector<16x128xf32>
    %354 = arith.addf %311, %353 : vector<16x128xf32>
    %c1_100 = arith.constant 1 : index
    %c0_101 = arith.constant 0 : index
    %c0_102 = arith.constant 0 : index
    %355 = vector.load %arg15[%c1_100, %c0_101, %c0_102] : memref<2x16x128xf32, #tpu.memory_space<vmem>>, vector<1x16x128xf32>
    %356 = vector.shape_cast %355 : vector<1x16x128xf32> to vector<16x128xf32>
    %357 = vector.shape_cast %354 : vector<16x128xf32> to vector<1x16x128xf32>
    tpu.vector_store %arg15[%c1_100, %c0_101, %c0_102], %357 {strides = array<i32>} : memref<2x16x128xf32, #tpu.memory_space<vmem>>, vector<1x16x128xf32>,
    return
  }
  func.func @transform_0(%arg0: i32) -> (i32, i32, i32) {
    %c0_i32 = arith.constant 0 : i32
    %c0_i32_0 = arith.constant 0 : i32
    %c0_i32_1 = arith.constant 0 : i32
    return %arg0, %c0_i32, %c0_i32_0 : i32, i32, i32
  }
  func.func @transform_1(%arg0: i32) -> (i32, i32, i32) {
    %c0_i32 = arith.constant 0 : i32
    %c0_i32_0 = arith.constant 0 : i32
    %c0_i32_1 = arith.constant 0 : i32
    return %arg0, %c0_i32, %c0_i32_0 : i32, i32, i32
  }
  func.func @transform_2(%arg0: i32) -> (i32, i32) {
    %c0_i32 = arith.constant 0 : i32
    %c0_i32_0 = arith.constant 0 : i32
    %c0_i32_1 = arith.constant 0 : i32
    return %c0_i32, %c0_i32_0 : i32, i32
  }
  func.func @transform_3(%arg0: i32) -> (i32, i32) {
    %c0_i32 = arith.constant 0 : i32
    %c0_i32_0 = arith.constant 0 : i32
    %c0_i32_1 = arith.constant 0 : i32
    return %c0_i32, %c0_i32_0 : i32, i32
  }
  func.func @transform_4(%arg0: i32) -> (i32, i32) {
    %c0_i32 = arith.constant 0 : i32
    %c0_i32_0 = arith.constant 0 : i32
    %c0_i32_1 = arith.constant 0 : i32
    return %c0_i32, %c0_i32_0 : i32, i32
  }
  func.func @transform_5(%arg0: i32) -> (i32, i32) {
    %c0_i32 = arith.constant 0 : i32
    %c0_i32_0 = arith.constant 0 : i32
    %c0_i32_1 = arith.constant 0 : i32
    return %c0_i32, %c0_i32_0 : i32, i32
  }
  func.func @transform_6(%arg0: i32) -> (i32, i32) {
    %c0_i32 = arith.constant 0 : i32
    %c0_i32_0 = arith.constant 0 : i32
    %c0_i32_1 = arith.constant 0 : i32
    return %c0_i32, %c0_i32_0 : i32, i32
  }
  func.func @transform_7(%arg0: i32) -> (i32, i32) {
    %c0_i32 = arith.constant 0 : i32
    %c0_i32_0 = arith.constant 0 : i32
    %c0_i32_1 = arith.constant 0 : i32
    return %c0_i32, %c0_i32_0 : i32, i32
  }
  func.func @transform_8(%arg0: i32) -> (i32, i32) {
    %c0_i32 = arith.constant 0 : i32
    %c0_i32_0 = arith.constant 0 : i32
    %c0_i32_1 = arith.constant 0 : i32
    return %c0_i32, %c0_i32_0 : i32, i32
  }
  func.func @transform_9(%arg0: i32) -> (i32, i32) {
    %c0_i32 = arith.constant 0 : i32
    %c0_i32_0 = arith.constant 0 : i32
    %c0_i32_1 = arith.constant 0 : i32
    return %c0_i32, %c0_i32_0 : i32, i32
  }
  func.func @transform_10(%arg0: i32) -> (i32, i32) {
    %c0_i32 = arith.constant 0 : i32
    %c0_i32_0 = arith.constant 0 : i32
    %c0_i32_1 = arith.constant 0 : i32
    return %c0_i32, %c0_i32_0 : i32, i32
  }
  func.func @transform_11(%arg0: i32) -> (i32, i32) {
    %c0_i32 = arith.constant 0 : i32
    %c0_i32_0 = arith.constant 0 : i32
    %c0_i32_1 = arith.constant 0 : i32
    return %c0_i32, %c0_i32_0 : i32, i32
  }
  func.func @transform_12(%arg0: i32) -> (i32, i32) {
    %c0_i32 = arith.constant 0 : i32
    %c0_i32_0 = arith.constant 0 : i32
    %c0_i32_1 = arith.constant 0 : i32
    return %c0_i32, %c0_i32_0 : i32, i32
  }
  func.func @transform_13(%arg0: i32) -> (i32, i32) {
    %c0_i32 = arith.constant 0 : i32
    %c0_i32_0 = arith.constant 0 : i32
    %c0_i32_1 = arith.constant 0 : i32
    return %c0_i32, %c0_i32_0 : i32, i32
  }
  func.func @transform_14(%arg0: i32) -> (i32, i32, i32) {
    %c0_i32 = arith.constant 0 : i32
    %c0_i32_0 = arith.constant 0 : i32
    %c0_i32_1 = arith.constant 0 : i32
    return %arg0, %c0_i32, %c0_i32_0 : i32, i32, i32
  }
}

</mosaic_0001>

<llo_original>
// kernel: tpu_custom_call.1
$region0: #{tpu_custom_call.1}
  #allocation0 [shape = 'u32[]', space=smem, size = 0x4, offset = 0x4, fixed_abs, tag = 'smem constant byte address 0x4 - core index']
  #allocation1 [shape = 'u32[144,128]{1,0:T(1,128)}', space=vmem, size = 0x12000, scoped, tag = 'internal scratch']
  %s0 = inlined_call_operand.hbm [shape: f32[2,16,128], index: 0, kind: input, shape index: {}]
  %s1 = inlined_call_operand.hbm [shape: f32[2,16,16], index: 1, kind: input, shape index: {}]
  %s2 = inlined_call_operand.hbm [shape: f32[1,128], index: 2, kind: input, shape index: {}]
  %s3 = inlined_call_operand.vmem [shape: f32[1,128], index: 3, kind: input, shape index: {}]
  %s4 = inlined_call_operand.hbm [shape: bf16[128,384], index: 4, kind: input, shape index: {}]
  %s5 = inlined_call_operand.vmem [shape: f32[1,384], index: 5, kind: input, shape index: {}]
  %s6 = inlined_call_operand.hbm [shape: bf16[128,128], index: 6, kind: input, shape index: {}]
  %s7 = inlined_call_operand.vmem [shape: f32[1,128], index: 7, kind: input, shape index: {}]
  %s8 = inlined_call_operand.vmem [shape: f32[1,128], index: 8, kind: input, shape index: {}]
  %s9 = inlined_call_operand.vmem [shape: f32[1,128], index: 9, kind: input, shape index: {}]
  %s10 = inlined_call_operand.hbm [shape: bf16[128,512], index: 10, kind: input, shape index: {}]
  %s11 = inlined_call_operand.vmem [shape: f32[1,512], index: 11, kind: input, shape index: {}]
  %s12 = inlined_call_operand.hbm [shape: bf16[512,128], index: 12, kind: input, shape index: {}]
  %s13 = inlined_call_operand.vmem [shape: f32[1,128], index: 13, kind: input, shape index: {}]
  %s14 = inlined_call_operand.hbm [shape: f32[2,16,128], index: 14, kind: output, shape index: {}]
  %s15 = sld [smem:[#allocation0]]
  $region94: #{tpu_custom_call.1} parent=0
    _
  %s17 = ssub.s32 1, %s15
  %s18 = scalar_select 0, %s17, %s15
  $region1: #{tpu_custom_call.1} parent=0
    #allocation2 [shape = 'u8[16384]{0}', space=vmem, size = 0x4000, scoped, tag = 'input window, operand 0, single buffered']
    #allocation3 [shape = 's32[1]{0}', space=sflag, size = 0x4, scoped, tag = 'scoped memory for tpu_custom_call.1']
    #allocation4 [shape = 's32[1]{0}', space=sflag, size = 0x4, scoped, tag = 'scoped memory for tpu_custom_call.1']
    #allocation5 [shape = 'u8[16384]{0}', space=vmem, size = 0x4000, scoped, tag = 'input window, operand 1, single buffered']
    #allocation6 [shape = 's32[1]{0}', space=sflag, size = 0x4, scoped, tag = 'scoped memory for tpu_custom_call.1']
    #allocation7 [shape = 'u8[512]{0}', space=vmem, size = 0x400, scoped, tag = 'input window, operand 2, single buffered']
    #allocation8 [shape = 'u8[98304]{0}', space=vmem, size = 0x18000, scoped, tag = 'input window, operand 4, single buffered']
    #allocation9 [shape = 's32[1]{0}', space=sflag, size = 0x4, scoped, tag = 'scoped memory for tpu_custom_call.1']
    #allocation10 [shape = 'u8[32768]{0}', space=vmem, size = 0x8000, scoped, tag = 'input window, operand 6, single buffered']
    #allocation11 [shape = 'u8[131072]{0}', space=vmem, size = 0x20000, scoped, tag = 'input window, operand 10, single buffered']
    #allocation12 [shape = 's32[1]{0}', space=sflag, size = 0x4, scoped, tag = 'scoped memory for tpu_custom_call.1']
    #allocation13 [shape = 'u8[131072]{0}', space=vmem, size = 0x20000, scoped, tag = 'input window, operand 12, single buffered']
    #allocation14 [shape = 'u8[16384]{0}', space=vmem, size = 0x4000, scoped, tag = 'output window, operand 0, single buffered']
    %19 = vsyncpa [#allocation3], 0
    %20 = vsyncpa [#allocation6], 0
    %21 = vsyncpa [#allocation9], 0
    %22 = vsyncpa [#allocation12], 0
    %23 = vsyncpa [#allocation4], 0
    // Predicated region
    $region2: #{tpu_custom_call.1} parent=1 // pred_check
      _
    $region3: #{tpu_custom_call.1} parent=1 // pred_check_branch
      %25 = sbr.rel (0) target = $region5
    $region4: #{tpu_custom_call.1} parent=1 // pred_region
      %s27 = ssub.s32 512, 512
      %28 = vsyncadd [#allocation3], %s27
      %s29 = sshll.u32 [#allocation2], 4
      %s30 = int_to_ptr.vmem [resolvable:$true] %s29
      %35 = dma.hbm_to_vmem [thread:$0]  %s0, 512, %s30, [#allocation3], 128, 128, 8
    $region5: #{tpu_custom_call.1} parent=1 // pred_fallthru
      _
    // Predicated region
    $region6: #{tpu_custom_call.1} parent=1 // pred_check
      _
    $region7: #{tpu_custom_call.1} parent=1 // pred_check_branch
      %37 = sbr.rel (0) target = $region9
    $region8: #{tpu_custom_call.1} parent=1 // pred_region
      %s39 = ssub.s32 512, 512
      %40 = vsyncadd [#allocation6], %s39
      %s41 = sshll.u32 [#allocation5], 4
      %s42 = int_to_ptr.vmem [resolvable:$true] %s41
      %47 = dma.hbm_to_vmem [thread:$0]  %s1, 512, %s42, [#allocation6], 128, 128, 8
    $region9: #{tpu_custom_call.1} parent=1 // pred_fallthru
      _
    // Predicated region
    $region10: #{tpu_custom_call.1} parent=1 // pred_check
      _
    $region11: #{tpu_custom_call.1} parent=1 // pred_check_branch
      %49 = sbr.rel (0) target = $region13
    $region12: #{tpu_custom_call.1} parent=1 // pred_region
      %s51 = ssub.s32 16, 16
      %52 = vsyncadd [#allocation6], %s51
      %s54 = sshll.u32 [#allocation7], 4
      %s55 = int_to_ptr.vmem [resolvable:$true] %s54
      %57 = dma.hbm_to_vmem [thread:$0]  %s2, 16, %s55, [#allocation6]
    $region13: #{tpu_custom_call.1} parent=1 // pred_fallthru
      _
    // Predicated region
    $region14: #{tpu_custom_call.1} parent=1 // pred_check
      _
    $region15: #{tpu_custom_call.1} parent=1 // pred_check_branch
      %59 = sbr.rel (0) target = $region17
    $region16: #{tpu_custom_call.1} parent=1 // pred_region
      _
    $region17: #{tpu_custom_call.1} parent=1 // pred_fallthru
      _
    // Predicated region
    $region18: #{tpu_custom_call.1} parent=1 // pred_check
      _
    $region19: #{tpu_custom_call.1} parent=1 // pred_check_branch
      %61 = sbr.rel (0) target = $region21
    $region20: #{tpu_custom_call.1} parent=1 // pred_region
      %s63 = ssub.s32 3072, 3072
      %64 = vsyncadd [#allocation9], %s63
      %s65 = sshll.u32 [#allocation8], 4
      %s66 = int_to_ptr.vmem [resolvable:$true] %s65
      %71 = dma.hbm_to_vmem [thread:$0]  %s4, 3072, %s66, [#allocation9], 192, 192, 12
    $region21: #{tpu_custom_call.1} parent=1 // pred_fallthru
      _
    // Predicated region
    $region22: #{tpu_custom_call.1} parent=1 // pred_check
      _
    $region23: #{tpu_custom_call.1} parent=1 // pred_check_branch
      %73 = sbr.rel (0) target = $region25
    $region24: #{tpu_custom_call.1} parent=1 // pred_region
      _
    $region25: #{tpu_custom_call.1} parent=1 // pred_fallthru
      _
    // Predicated region
    $region26: #{tpu_custom_call.1} parent=1 // pred_check
      _
    $region27: #{tpu_custom_call.1} parent=1 // pred_check_branch
      %75 = sbr.rel (0) target = $region29
    $region28: #{tpu_custom_call.1} parent=1 // pred_region
      %s77 = ssub.s32 1024, 1024
      %78 = vsyncadd [#allocation9], %s77
      %s79 = sshll.u32 [#allocation10], 4
      %s80 = int_to_ptr.vmem [resolvable:$true] %s79
      %85 = dma.hbm_to_vmem [thread:$0]  %s6, 1024, %s80, [#allocation9], 64, 64, 4
    $region29: #{tpu_custom_call.1} parent=1 // pred_fallthru
      _
    // Predicated region
    $region30: #{tpu_custom_call.1} parent=1 // pred_check
      _
    $region31: #{tpu_custom_call.1} parent=1 // pred_check_branch
      %87 = sbr.rel (0) target = $region33
    $region32: #{tpu_custom_call.1} parent=1 // pred_region
      _
    $region33: #{tpu_custom_call.1} parent=1 // pred_fallthru
      _
    // Predicated region
    $region34: #{tpu_custom_call.1} parent=1 // pred_check
      _
    $region35: #{tpu_custom_call.1} parent=1 // pred_check_branch
      %89 = sbr.rel (0) target = $region37
    $region36: #{tpu_custom_call.1} parent=1 // pred_region
      _
    $region37: #{tpu_custom_call.1} parent=1 // pred_fallthru
      _
    // Predicated region
    $region38: #{tpu_custom_call.1} parent=1 // pred_check
      _
    $region39: #{tpu_custom_call.1} parent=1 // pred_check_branch
      %91 = sbr.rel (0) target = $region41
    $region40: #{tpu_custom_call.1} parent=1 // pred_region
      _
    $region41: #{tpu_custom_call.1} parent=1 // pred_fallthru
      _
    // Predicated region
    $region42: #{tpu_custom_call.1} parent=1 // pred_check
      _
    $region43: #{tpu_custom_call.1} parent=1 // pred_check_branch
      %93 = sbr.rel (0) target = $region45
    $region44: #{tpu_custom_call.1} parent=1 // pred_region
      %s95 = ssub.s32 4096, 4096
      %96 = vsyncadd [#allocation12], %s95
      %s97 = sshll.u32 [#allocation11], 4
      %s98 = int_to_ptr.vmem [resolvable:$true] %s97
      %103 = dma.hbm_to_vmem [thread:$0]  %s10, 4096, %s98, [#allocation12], 256, 256, 16
    $region45: #{tpu_custom_call.1} parent=1 // pred_fallthru
      _
    // Predicated region
    $region46: #{tpu_custom_call.1} parent=1 // pred_check
      _
    $region47: #{tpu_custom_call.1} parent=1 // pred_check_branch
      %105 = sbr.rel (0) target = $region49
    $region48: #{tpu_custom_call.1} parent=1 // pred_region
      _
    $region49: #{tpu_custom_call.1} parent=1 // pred_fallthru
      _
    // Predicated region
    $region50: #{tpu_custom_call.1} parent=1 // pred_check
      _
    $region51: #{tpu_custom_call.1} parent=1 // pred_check_branch
      %107 = sbr.rel (0) target = $region53
    $region52: #{tpu_custom_call.1} parent=1 // pred_region
      %s109 = ssub.s32 4096, 4096
      %110 = vsyncadd [#allocation12], %s109
      %s111 = sshll.u32 [#allocation13], 4
      %s112 = int_to_ptr.vmem [resolvable:$true] %s111
      %117 = dma.hbm_to_vmem [thread:$0]  %s12, 4096, %s112, [#allocation12], 64, 64, 4
    $region53: #{tpu_custom_call.1} parent=1 // pred_fallthru
      _
    // Predicated region
    $region54: #{tpu_custom_call.1} parent=1 // pred_check
      _
    $region55: #{tpu_custom_call.1} parent=1 // pred_check_branch
      %119 = sbr.rel (0) target = $region57
    $region56: #{tpu_custom_call.1} parent=1 // pred_region
      _
    $region57: #{tpu_custom_call.1} parent=1 // pred_fallthru
      _
    // Predicated region
    $region58: #{tpu_custom_call.1} parent=1 // pred_check
      _
    $region59: #{tpu_custom_call.1} parent=1 // pred_check_branch
      %121 = sbr.rel (0) target = $region61
    $region60: #{tpu_custom_call.1} parent=1 // pred_region
      %122 = dma.done [#allocation3], 512
    $region61: #{tpu_custom_call.1} parent=1 // pred_fallthru
      _
    // Predicated region
    $region62: #{tpu_custom_call.1} parent=1 // pred_check
      _
    $region63: #{tpu_custom_call.1} parent=1 // pred_check_branch
      %124 = sbr.rel (0) target = $region65
    $region64: #{tpu_custom_call.1} parent=1 // pred_region
      %125 = dma.done [#allocation6], 512
    $region65: #{tpu_custom_call.1} parent=1 // pred_fallthru
      _
    // Predicated region
    $region66: #{tpu_custom_call.1} parent=1 // pred_check
      _
    $region67: #{tpu_custom_call.1} parent=1 // pred_check_branch
      %127 = sbr.rel (0) target = $region69
    $region68: #{tpu_custom_call.1} parent=1 // pred_region
      %128 = dma.done [#allocation6], 16
    $region69: #{tpu_custom_call.1} parent=1 // pred_fallthru
      _
    // Predicated region
    $region70: #{tpu_custom_call.1} parent=1 // pred_check
      _
    $region71: #{tpu_custom_call.1} parent=1 // pred_check_branch
      %130 = sbr.rel (0) target = $region73
    $region72: #{tpu_custom_call.1} parent=1 // pred_region
      %131 = dma.done [#allocation9], 3072
    $region73: #{tpu_custom_call.1} parent=1 // pred_fallthru
      _
    // Predicated region
    $region74: #{tpu_custom_call.1} parent=1 // pred_check
      _
    $region75: #{tpu_custom_call.1} parent=1 // pred_check_branch
      %133 = sbr.rel (0) target = $region77
    $region76: #{tpu_custom_call.1} parent=1 // pred_region
      %134 = dma.done [#allocation9], 1024
    $region77: #{tpu_custom_call.1} parent=1 // pred_fallthru
      _
    // Predicated region
    $region78: #{tpu_custom_call.1} parent=1 // pred_check
      _
    $region79: #{tpu_custom_call.1} parent=1 // pred_check_branch
      %136 = sbr.rel (0) target = $region81
    $region80: #{tpu_custom_call.1} parent=1 // pred_region
      %137 = dma.done [#allocation12], 4096
    $region81: #{tpu_custom_call.1} parent=1 // pred_fallthru
      _
    // Predicated region
    $region82: #{tpu_custom_call.1} parent=1 // pred_check
      _
    $region83: #{tpu_custom_call.1} parent=1 // pred_check_branch
      %139 = sbr.rel (0) target = $region85
    $region84: #{tpu_custom_call.1} parent=1 // pred_region
      %140 = dma.done [#allocation12], 4096
    $region85: #{tpu_custom_call.1} parent=1 // pred_fallthru
      _
    %v142 = vld [vmem:[#allocation8] sm:$0xff]
    %v143 = vld [vmem:[#allocation8 + $0x8] sm:$0xf]
    %v144 = vld [vmem:[#allocation8 + $0xc] sm:$0xff]
    %v145 = vld [vmem:[#allocation8 + $0x14] sm:$0xf]
    %v146 = vld [vmem:[#allocation8 + $0x18] sm:$0xff]
    %v147 = vld [vmem:[#allocation8 + $0x20] sm:$0xf]
    %v148 = vld [vmem:[#allocation8 + $0x24] sm:$0xff]
    %v149 = vld [vmem:[#allocation8 + $0x2c] sm:$0xf]
    %v150 = vld [vmem:[#allocation8 + $0x30] sm:$0xff]
    %v151 = vld [vmem:[#allocation8 + $0x38] sm:$0xf]
    %v152 = vld [vmem:[#allocation8 + $0x3c] sm:$0xff]
    %v153 = vld [vmem:[#allocation8 + $0x44] sm:$0xf]
    %v154 = vld [vmem:[#allocation8 + $0x48] sm:$0xff]
    %v155 = vld [vmem:[#allocation8 + $0x50] sm:$0xf]
    %v156 = vld [vmem:[#allocation8 + $0x54] sm:$0xff]
    %v157 = vld [vmem:[#allocation8 + $0x5c] sm:$0xf]
    %v158 = vld [vmem:[#allocation8 + $0x60] sm:$0xff]
    %v159 = vld [vmem:[#allocation8 + $0x68] sm:$0xf]
    %v160 = vld [vmem:[#allocation8 + $0x6c] sm:$0xff]
    %v161 = vld [vmem:[#allocation8 + $0x74] sm:$0xf]
    %v162 = vld [vmem:[#allocation8 + $0x78] sm:$0xff]
    %v163 = vld [vmem:[#allocation8 + $0x80] sm:$0xf]
    %v164 = vld [vmem:[#allocation8 + $0x84] sm:$0xff]
    %v165 = vld [vmem:[#allocation8 + $0x8c] sm:$0xf]
    %v166 = vld [vmem:[#allocation8 + $0x90] sm:$0xff]
    %v167 = vld [vmem:[#allocation8 + $0x98] sm:$0xf]
    %v168 = vld [vmem:[#allocation8 + $0x9c] sm:$0xff]
    %v169 = vld [vmem:[#allocation8 + $0xa4] sm:$0xf]
    %v170 = vld [vmem:[#allocation8 + $0xa8] sm:$0xff]
    %v171 = vld [vmem:[#allocation8 + $0xb0] sm:$0xf]
    %v172 = vld [vmem:[#allocation8 + $0xb4] sm:$0xff]
    %v173 = vld [vmem:[#allocation8 + $0xbc] sm:$0xf]
    %v174 = vld [vmem:[%s5] sm:$0x7]
    %v175 = vld [vmem:[#allocation10] sm:$0xf]
    %v176 = vld [vmem:[#allocation10 + $0x4] sm:$0xf]
    %v177 = vld [vmem:[#allocation10 + $0x8] sm:$0xf]
    %v178 = vld [vmem:[#allocation10 + $0xc] sm:$0xf]
    %v179 = vld [vmem:[#allocation10 + $0x10] sm:$0xf]
    %v180 = vld [vmem:[#allocation10 + $0x14] sm:$0xf]
    %v181 = vld [vmem:[#allocation10 + $0x18] sm:$0xf]
    %v182 = vld [vmem:[#allocation10 + $0x1c] sm:$0xf]
    %v183 = vld [vmem:[#allocation10 + $0x20] sm:$0xf]
    %v184 = vld [vmem:[#allocation10 + $0x24] sm:$0xf]
    %v185 = vld [vmem:[#allocation10 + $0x28] sm:$0xf]
    %v186 = vld [vmem:[#allocation10 + $0x2c] sm:$0xf]
    %v187 = vld [vmem:[#allocation10 + $0x30] sm:$0xf]
    %v188 = vld [vmem:[#allocation10 + $0x34] sm:$0xf]
    %v189 = vld [vmem:[#allocation10 + $0x38] sm:$0xf]
    %v190 = vld [vmem:[#allocation10 + $0x3c] sm:$0xf]
    %v191 = vld [vmem:[%s7] sm:$0x1]
    %v192 = vld [vmem:[#allocation11] sm:$0xff]
    %v193 = vld [vmem:[#allocation11 + $0x8] sm:$0xff]
    %v194 = vld [vmem:[#allocation11 + $0x10] sm:$0xff]
    %v195 = vld [vmem:[#allocation11 + $0x18] sm:$0xff]
    %v196 = vld [vmem:[#allocation11 + $0x20] sm:$0xff]
    %v197 = vld [vmem:[#allocation11 + $0x28] sm:$0xff]
    %v198 = vld [vmem:[#allocation11 + $0x30] sm:$0xff]
    %v199 = vld [vmem:[#allocation11 + $0x38] sm:$0xff]
    %v200 = vld [vmem:[#allocation11 + $0x40] sm:$0xff]
    %v201 = vld [vmem:[#allocation11 + $0x48] sm:$0xff]
    %v202 = vld [vmem:[#allocation11 + $0x50] sm:$0xff]
    %v203 = vld [vmem:[#allocation11 + $0x58] sm:$0xff]
    %v204 = vld [vmem:[#allocation11 + $0x60] sm:$0xff]
    %v205 = vld [vmem:[#allocation11 + $0x68] sm:$0xff]
    %v206 = vld [vmem:[#allocation11 + $0x70] sm:$0xff]
    %v207 = vld [vmem:[#allocation11 + $0x78] sm:$0xff]
    %v208 = vld [vmem:[#allocation11 + $0x80] sm:$0xff]
    %v209 = vld [vmem:[#allocation11 + $0x88] sm:$0xff]
    %v210 = vld [vmem:[#allocation11 + $0x90] sm:$0xff]
    %v211 = vld [vmem:[#allocation11 + $0x98] sm:$0xff]
    %v212 = vld [vmem:[#allocation11 + $0xa0] sm:$0xff]
    %v213 = vld [vmem:[#allocation11 + $0xa8] sm:$0xff]
    %v214 = vld [vmem:[#allocation11 + $0xb0] sm:$0xff]
    %v215 = vld [vmem:[#allocation11 + $0xb8] sm:$0xff]
    %v216 = vld [vmem:[#allocation11 + $0xc0] sm:$0xff]
    %v217 = vld [vmem:[#allocation11 + $0xc8] sm:$0xff]
    %v218 = vld [vmem:[#allocation11 + $0xd0] sm:$0xff]
    %v219 = vld [vmem:[#allocation11 + $0xd8] sm:$0xff]
    %v220 = vld [vmem:[#allocation11 + $0xe0] sm:$0xff]
    %v221 = vld [vmem:[#allocation11 + $0xe8] sm:$0xff]
    %v222 = vld [vmem:[#allocation11 + $0xf0] sm:$0xff]
    %v223 = vld [vmem:[#allocation11 + $0xf8] sm:$0xff]
    %v224 = vld [vmem:[%s11] sm:$0xf]
    %v225 = vld [vmem:[#allocation13] sm:$0xf]
    %v226 = vld [vmem:[#allocation13 + $0x4] sm:$0xf]
    %v227 = vld [vmem:[#allocation13 + $0x8] sm:$0xf]
    %v228 = vld [vmem:[#allocation13 + $0xc] sm:$0xf]
    %v229 = vld [vmem:[#allocation13 + $0x10] sm:$0xf]
    %v230 = vld [vmem:[#allocation13 + $0x14] sm:$0xf]
    %v231 = vld [vmem:[#allocation13 + $0x18] sm:$0xf]
    %v232 = vld [vmem:[#allocation13 + $0x1c] sm:$0xf]
    %v233 = vld [vmem:[#allocation13 + $0x20] sm:$0xf]
    %v234 = vld [vmem:[#allocation13 + $0x24] sm:$0xf]
    %v235 = vld [vmem:[#allocation13 + $0x28] sm:$0xf]
    %v236 = vld [vmem:[#allocation13 + $0x2c] sm:$0xf]
    %v237 = vld [vmem:[#allocation13 + $0x30] sm:$0xf]
    %v238 = vld [vmem:[#allocation13 + $0x34] sm:$0xf]
    %v239 = vld [vmem:[#allocation13 + $0x38] sm:$0xf]
    %v240 = vld [vmem:[#allocation13 + $0x3c] sm:$0xf]
    %v241 = vld [vmem:[#allocation13 + $0x40] sm:$0xf]
    %v242 = vld [vmem:[#allocation13 + $0x44] sm:$0xf]
    %v243 = vld [vmem:[#allocation13 + $0x48] sm:$0xf]
    %v244 = vld [vmem:[#allocation13 + $0x4c] sm:$0xf]
    %v245 = vld [vmem:[#allocation13 + $0x50] sm:$0xf]
    %v246 = vld [vmem:[#allocation13 + $0x54] sm:$0xf]
    %v247 = vld [vmem:[#allocation13 + $0x58] sm:$0xf]
    %v248 = vld [vmem:[#allocation13 + $0x5c] sm:$0xf]
    %v249 = vld [vmem:[#allocation13 + $0x60] sm:$0xf]
    %v250 = vld [vmem:[#allocation13 + $0x64] sm:$0xf]
    %v251 = vld [vmem:[#allocation13 + $0x68] sm:$0xf]
    %v252 = vld [vmem:[#allocation13 + $0x6c] sm:$0xf]
    %v253 = vld [vmem:[#allocation13 + $0x70] sm:$0xf]
    %v254 = vld [vmem:[#allocation13 + $0x74] sm:$0xf]
    %v255 = vld [vmem:[#allocation13 + $0x78] sm:$0xf]
    %v256 = vld [vmem:[#allocation13 + $0x7c] sm:$0xf]
    %v257 = vld [vmem:[#allocation13 + $0x80] sm:$0xf]
    %v258 = vld [vmem:[#allocation13 + $0x84] sm:$0xf]
    %v259 = vld [vmem:[#allocation13 + $0x88] sm:$0xf]
    %v260 = vld [vmem:[#allocation13 + $0x8c] sm:$0xf]
    %v261 = vld [vmem:[#allocation13 + $0x90] sm:$0xf]
    %v262 = vld [vmem:[#allocation13 + $0x94] sm:$0xf]
    %v263 = vld [vmem:[#allocation13 + $0x98] sm:$0xf]
    %v264 = vld [vmem:[#allocation13 + $0x9c] sm:$0xf]
    %v265 = vld [vmem:[#allocation13 + $0xa0] sm:$0xf]
    %v266 = vld [vmem:[#allocation13 + $0xa4] sm:$0xf]
    %v267 = vld [vmem:[#allocation13 + $0xa8] sm:$0xf]
    %v268 = vld [vmem:[#allocation13 + $0xac] sm:$0xf]
    %v269 = vld [vmem:[#allocation13 + $0xb0] sm:$0xf]
    %v270 = vld [vmem:[#allocation13 + $0xb4] sm:$0xf]
    %v271 = vld [vmem:[#allocation13 + $0xb8] sm:$0xf]
    %v272 = vld [vmem:[#allocation13 + $0xbc] sm:$0xf]
    %v273 = vld [vmem:[#allocation13 + $0xc0] sm:$0xf]
    %v274 = vld [vmem:[#allocation13 + $0xc4] sm:$0xf]
    %v275 = vld [vmem:[#allocation13 + $0xc8] sm:$0xf]
    %v276 = vld [vmem:[#allocation13 + $0xcc] sm:$0xf]
    %v277 = vld [vmem:[#allocation13 + $0xd0] sm:$0xf]
    %v278 = vld [vmem:[#allocation13 + $0xd4] sm:$0xf]
    %v279 = vld [vmem:[#allocation13 + $0xd8] sm:$0xf]
    %v280 = vld [vmem:[#allocation13 + $0xdc] sm:$0xf]
    %v281 = vld [vmem:[#allocation13 + $0xe0] sm:$0xf]
    %v282 = vld [vmem:[#allocation13 + $0xe4] sm:$0xf]
    %v283 = vld [vmem:[#allocation13 + $0xe8] sm:$0xf]
    %v284 = vld [vmem:[#allocation13 + $0xec] sm:$0xf]
    %v285 = vld [vmem:[#allocation13 + $0xf0] sm:$0xf]
    %v286 = vld [vmem:[#allocation13 + $0xf4] sm:$0xf]
    %v287 = vld [vmem:[#allocation13 + $0xf8] sm:$0xf]
    %v288 = vld [vmem:[#allocation13 + $0xfc] sm:$0xf]
    %v289 = vld [vmem:[%s13] sm:$0x1]
    %v290 = vld [vmem:[#allocation7] sm:$0x1]
    %v291 = vld [vmem:[%s3] sm:$0x1]
    %v292 = vld [vmem:[%s8] sm:$0x1]
    %v293 = vld [vmem:[%s9] sm:$0x1]
    %v294 = vld [vmem:[#allocation2] sm:$0xff]
    %v295 = vld [vmem:[#allocation2 + $0x8] sm:$0xff]
    %v296 = vld [vmem:[#allocation5] sm:$0xff]
    %v297 = vld [vmem:[#allocation5 + $0x8] sm:$0xff]
    %298 = vadd.xlane.f32.xlu0 %v294
    %v299 = vpop.xlane.xlu0 %298
    %300 = vadd.xlane.f32.xlu0 %v295
    %v301 = vpop.xlane.xlu0 %300
    %v302 = vrcp.pop 128.0
    %v303 = vmul.f32 %v299, %v302
    %v304 = vmul.f32 %v301, %v302
    %v305 = vsub.f32 %v294, %v303
    %v306 = vsub.f32 %v295, %v304
    %v307 = vmul.f32 %v305, %v305
    %v308 = vmul.f32 %v306, %v306
    %309 = vadd.xlane.f32.xlu0 %v307
    %v310 = vpop.xlane.xlu0 %309
    %311 = vadd.xlane.f32.xlu0 %v308
    %v312 = vpop.xlane.xlu0 %311
    %v313 = vmul.f32 %v310, %v302
    %v314 = vmul.f32 %v312, %v302
    %v315 = vadd.f32 %v313, 1e-05
    %v316 = vadd.f32 %v314, 1e-05
    %v317 = vrsqrt.pop %v315
    %v318 = vrsqrt.pop %v316
    %v319 = vmul.f32 %v305, %v317
    %v320 = vmul.f32 %v306, %v318
    %v322 = vlaneseq
    %v323 = vshrl.u32 %v322, 7
    %v324 = vsub.s32 0, %v323
    %v325 = vrot.slane %v290, %v324
    %v327 = vmul.f32 %v319, %v325
    %v328 = vmul.f32 %v320, %v325
    %v330 = vlaneseq
    %v331 = vshrl.u32 %v330, 7
    %v332 = vsub.s32 0, %v331
    %v333 = vrot.slane %v291, %v332
    %v335 = vadd.f32 %v327, %v333
    %v336 = vadd.f32 %v328, %v333
    %v337 = vpack.c.bf16 %v336, %v335
    %v339 = vlaneseq
    %v340 = vshrl.u32 %v339, 7
    %v341 = vsub.s32 0, %v340
    %v342 = vrot.slane %v174, %v341
    %v343 = vlaneseq
    %v344 = vshrl.u32 %v343, 7
    %v345 = vsub.s32 1, %v344
    %v346 = vrot.slane %v174, %v345
    %v347 = vlaneseq
    %v348 = vshrl.u32 %v347, 7
    %v349 = vsub.s32 2, %v348
    %v350 = vrot.slane %v174, %v349
    %v386 = vunpack.c.l.b16 %v142
    %v387 = vunpack.c.h.b16 %v142
    %v388 = vunpack.c.l.b16 %v143
    %v389 = vunpack.c.l.b16 %v144
    %v390 = vunpack.c.h.b16 %v144
    %v391 = vunpack.c.l.b16 %v145
    %v392 = vunpack.c.l.b16 %v146
    %v393 = vunpack.c.h.b16 %v146
    %v394 = vunpack.c.l.b16 %v147
    %v395 = vunpack.c.l.b16 %v148
    %v396 = vunpack.c.h.b16 %v148
    %v397 = vunpack.c.l.b16 %v149
    %v398 = vunpack.c.l.b16 %v150
    %v399 = vunpack.c.h.b16 %v150
    %v400 = vunpack.c.l.b16 %v151
    %v401 = vunpack.c.l.b16 %v152
    %v402 = vunpack.c.h.b16 %v152
    %v403 = vunpack.c.l.b16 %v153
    %v404 = vunpack.c.l.b16 %v154
    %v405 = vunpack.c.h.b16 %v154
    %v406 = vunpack.c.l.b16 %v155
    %v407 = vunpack.c.l.b16 %v156
    %v408 = vunpack.c.h.b16 %v156
    %v409 = vunpack.c.l.b16 %v157
    %v410 = vunpack.c.l.b16 %v158
    %v411 = vunpack.c.h.b16 %v158
    %v412 = vunpack.c.l.b16 %v159
    %v413 = vunpack.c.l.b16 %v160
    %v414 = vunpack.c.h.b16 %v160
    %v415 = vunpack.c.l.b16 %v161
    %v416 = vunpack.c.l.b16 %v162
    %v417 = vunpack.c.h.b16 %v162
    %v418 = vunpack.c.l.b16 %v163
    %v419 = vunpack.c.l.b16 %v164
    %v420 = vunpack.c.h.b16 %v164
    %v421 = vunpack.c.l.b16 %v165
    %v422 = vunpack.c.l.b16 %v166
    %v423 = vunpack.c.h.b16 %v166
    %v424 = vunpack.c.l.b16 %v167
    %v425 = vunpack.c.l.b16 %v168
    %v426 = vunpack.c.h.b16 %v168
    %v427 = vunpack.c.l.b16 %v169
    %v428 = vunpack.c.l.b16 %v170
    %v429 = vunpack.c.h.b16 %v170
    %v430 = vunpack.c.l.b16 %v171
    %v431 = vunpack.c.l.b16 %v172
    %v432 = vunpack.c.h.b16 %v172
    %v433 = vunpack.c.l.b16 %v173
    %v434 = vpack.c.b16 %v389, %v386
    %v435 = vpack.c.b16 %v390, %v387
    %v436 = vpack.c.b16 %v391, %v388
    %v437 = vpack.c.b16 %v395, %v392
    %v438 = vpack.c.b16 %v396, %v393
    %v439 = vpack.c.b16 %v397, %v394
    %v440 = vpack.c.b16 %v401, %v398
    %v441 = vpack.c.b16 %v402, %v399
    %v442 = vpack.c.b16 %v403, %v400
    %v443 = vpack.c.b16 %v407, %v404
    %v444 = vpack.c.b16 %v408, %v405
    %v445 = vpack.c.b16 %v409, %v406
    %v446 = vpack.c.b16 %v413, %v410
    %v447 = vpack.c.b16 %v414, %v411
    %v448 = vpack.c.b16 %v415, %v412
    %v449 = vpack.c.b16 %v419, %v416
    %v450 = vpack.c.b16 %v420, %v417
    %v451 = vpack.c.b16 %v421, %v418
    %v452 = vpack.c.b16 %v425, %v422
    %v453 = vpack.c.b16 %v426, %v423
    %v454 = vpack.c.b16 %v427, %v424
    %v455 = vpack.c.b16 %v431, %v428
    %v456 = vpack.c.b16 %v432, %v429
    %v457 = vpack.c.b16 %v433, %v430
    %482 = vmatprep.subr.bf16.mxu0 %v435
    %483 = vmatpush1.bf16.msra.mxu0 %v434
    %484 = vmatprep.subr.bf16.mxu0 %v438
    %485 = vmatpush1.bf16.msra.mxu0 %v437
    %486 = vmatprep.subr.bf16.mxu0 %v441
    %487 = vmatpush1.bf16.msra.mxu0 %v440
    %488 = vmatprep.subr.bf16.mxu0 %v444
    %489 = vmatpush1.bf16.msra.mxu0 %v443
    %490 = vmatprep.subr.bf16.mxu0 %v447
    %491 = vmatpush1.bf16.msra.mxu0 %v446
    %492 = vmatprep.subr.bf16.mxu0 %v450
    %493 = vmatpush1.bf16.msra.mxu0 %v449
    %494 = vmatprep.subr.bf16.mxu0 %v453
    %495 = vmatpush1.bf16.msra.mxu0 %v452
    %496 = vmatprep.subr.bf16.mxu0 %v456
    %497 = vmatpush1.bf16.msra.mxu0 %v455
    %498 = vmatprep.subr.bf16.mxu0 0
    %499 = vmatpush1.bf16.msra.mxu0 0
    %500 = vmatprep.subr.bf16.mxu0 0
    %501 = vmatpush1.bf16.msra.mxu0 0
    %502 = vmatprep.subr.bf16.mxu0 0
    %503 = vmatpush1.bf16.msra.mxu0 0
    %504 = vmatprep.subr.bf16.mxu0 0
    %505 = vmatpush1.bf16.msra.mxu0 0
    %506 = vmatprep.subr.bf16.mxu0 0
    %507 = vmatpush1.bf16.msra.mxu0 0
    %508 = vmatprep.subr.bf16.mxu0 0
    %509 = vmatpush1.bf16.msra.mxu0 0
    %510 = vmatprep.subr.bf16.mxu0 0
    %511 = vmatpush1.bf16.msra.mxu0 0
    %512 = vmatprep.subr.bf16.mxu0 0
    %513 = vmatpush1.bf16.msra.mxu0 0
    %514 = vmatprep.mubr.bf16.mxu0 0
    %515 = vmatmul.mubr.bf16.gmra.mrb[0].mxu0 %v337
    %v516 = vpop.f32.mrb[0].mxu0
    %v517 = vadd.f32 %v342, %v516
    %v518 = vpop.f32.mrb[0].mxu0
    %v519 = vadd.f32 %v346, %v518
    %v520 = vpop.f32.mrb[0].mxu0
    %v521 = vadd.f32 %v342, %v520
    %v522 = vpop.f32.mrb[0].mxu0
    %v523 = vadd.f32 %v346, %v522
    %524 = vdwg.mxu0
    %525 = vmatprep.subr.bf16.mxu0 0
    %526 = vmatpush1.bf16.msra.mxu0 %v436
    %527 = vmatprep.subr.bf16.mxu0 0
    %528 = vmatpush1.bf16.msra.mxu0 %v439
    %529 = vmatprep.subr.bf16.mxu0 0
    %530 = vmatpush1.bf16.msra.mxu0 %v442
    %531 = vmatprep.subr.bf16.mxu0 0
    %532 = vmatpush1.bf16.msra.mxu0 %v445
    %533 = vmatprep.subr.bf16.mxu0 0
    %534 = vmatpush1.bf16.msra.mxu0 %v448
    %535 = vmatprep.subr.bf16.mxu0 0
    %536 = vmatpush1.bf16.msra.mxu0 %v451
    %537 = vmatprep.subr.bf16.mxu0 0
    %538 = vmatpush1.bf16.msra.mxu0 %v454
    %539 = vmatprep.subr.bf16.mxu0 0
    %540 = vmatpush1.bf16.msra.mxu0 %v457
    %541 = vmatprep.subr.bf16.mxu0 0
    %542 = vmatpush1.bf16.msra.mxu0 0
    %543 = vmatprep.subr.bf16.mxu0 0
    %544 = vmatpush1.bf16.msra.mxu0 0
    %545 = vmatprep.subr.bf16.mxu0 0
    %546 = vmatpush1.bf16.msra.mxu0 0
    %547 = vmatprep.subr.bf16.mxu0 0
    %548 = vmatpush1.bf16.msra.mxu0 0
    %549 = vmatprep.subr.bf16.mxu0 0
    %550 = vmatpush1.bf16.msra.mxu0 0
    %551 = vmatprep.subr.bf16.mxu0 0
    %552 = vmatpush1.bf16.msra.mxu0 0
    %553 = vmatprep.subr.bf16.mxu0 0
    %554 = vmatpush1.bf16.msra.mxu0 0
    %555 = vmatprep.subr.bf16.mxu0 0
    %556 = vmatpush1.bf16.msra.mxu0 0
    %557 = vmatprep.mubr.bf16.mxu0 0
    %558 = vmatmul.mubr.bf16.gmra.mrb[0].mxu0 %v337
    %v559 = vpop.f32.mrb[0].mxu0
    %v560 = vadd.f32 %v350, %v559
    %v561 = vpop.f32.mrb[0].mxu0
    %v562 = vpop.f32.mrb[0].mxu0
    %v563 = vadd.f32 %v350, %v562
    %v564 = vpop.f32.mrb[0].mxu0
    %565 = vdwg.mxu0
    %v566 = vpack.c.bf16 %v521, %v517
    %v567 = vpack.c.bf16 %v523, %v519
    %v568 = vpack.c.bf16 %v563, %v560
    %vm569 = vcmask 261120
    %v571 = vsel %vm569, %v566, 0
    %v574 = vsel %vm569, %v567, 0
    %576 = vmatprep.subr.bf16.mxu0 0
    %577 = vmatpush1.bf16.xpose.msra.mxu0 %v574
    %578 = vmatprep.subr.bf16.mxu0 0
    %579 = vmatpush1.bf16.xpose.msra.mxu0 0
    %580 = vmatprep.subr.bf16.mxu0 0
    %581 = vmatpush1.bf16.xpose.msra.mxu0 0
    %582 = vmatprep.subr.bf16.mxu0 0
    %583 = vmatpush1.bf16.xpose.msra.mxu0 0
    %584 = vmatprep.subr.bf16.mxu0 0
    %585 = vmatpush1.bf16.xpose.msra.mxu0 0
    %586 = vmatprep.subr.bf16.mxu0 0
    %587 = vmatpush1.bf16.xpose.msra.mxu0 0
    %588 = vmatprep.subr.bf16.mxu0 0
    %589 = vmatpush1.bf16.xpose.msra.mxu0 0
    %590 = vmatprep.subr.bf16.mxu0 0
    %591 = vmatpush1.bf16.xpose.msra.mxu0 0
    %592 = vmatprep.subr.bf16.mxu0 0
    %593 = vmatpush1.bf16.xpose.msra.mxu0 0
    %594 = vmatprep.subr.bf16.mxu0 0
    %595 = vmatpush1.bf16.xpose.msra.mxu0 0
    %596 = vmatprep.subr.bf16.mxu0 0
    %597 = vmatpush1.bf16.xpose.msra.mxu0 0
    %598 = vmatprep.subr.bf16.mxu0 0
    %599 = vmatpush1.bf16.xpose.msra.mxu0 0
    %600 = vmatprep.subr.bf16.mxu0 0
    %601 = vmatpush1.bf16.xpose.msra.mxu0 0
    %602 = vmatprep.subr.bf16.mxu0 0
    %603 = vmatpush1.bf16.xpose.msra.mxu0 0
    %604 = vmatprep.subr.bf16.mxu0 0
    %605 = vmatpush1.bf16.xpose.msra.mxu0 0
    %606 = vmatprep.subr.bf16.mxu0 0
    %607 = vmatpush1.bf16.xpose.msra.mxu0 0
    %608 = vmatprep.mubr.bf16.mxu0 0
    %609 = vmatmul.mubr.bf16.gmra.mrb[0].mxu0 %v571
    %v610 = vpop.f32.mrb[0].mxu0
    %v611 = vadd.f32 %v296, %v610
    %v612 = vpop.f32.mrb[0].mxu0
    %v613 = vpop.f32.mrb[0].mxu0
    %v614 = vadd.f32 %v297, %v613
    %v615 = vpop.f32.mrb[0].mxu0
    %616 = vdwg.mxu0
    %vm617 = vcmask 130048
    %v618 = vsel %vm617, %v611, -inf
    %619 = vmax.xlane.f32.xlu0 %v618
    %v620 = vpop.xlane.xlu0 %619
    %v621 = vsel %vm617, %v614, -inf
    %622 = vmax.xlane.f32.xlu0 %v621
    %v623 = vpop.xlane.xlu0 %622
    %v624 = vsub.f32 %v611, %v620
    %v625 = vsub.f32 %v614, %v623
    %v626 = vmul.f32 %v624, 1.442695
    %v627 = vpow.pop %v626
    %v628 = vmul.f32 %v625, 1.442695
    %v629 = vpow.pop %v628
    %v630 = vsel %vm617, %v627, 0.0
    %631 = vadd.xlane.f32.xlu0 %v630
    %v632 = vpop.xlane.xlu0 %631
    %v633 = vsel %vm617, %v629, 0.0
    %634 = vadd.xlane.f32.xlu0 %v633
    %v635 = vpop.xlane.xlu0 %634
    %v636 = vpack.c.bf16 %v629, %v627
    %v638 = vsel %vm617, %v636, 0
    %640 = vmatprep.subr.bf16.mxu0 0
    %641 = vmatpush1.bf16.msra.mxu0 %v568
    %642 = vmatprep.subr.bf16.mxu0 0
    %643 = vmatpush1.bf16.msra.mxu0 0
    %644 = vmatprep.subr.bf16.mxu0 0
    %645 = vmatpush1.bf16.msra.mxu0 0
    %646 = vmatprep.subr.bf16.mxu0 0
    %647 = vmatpush1.bf16.msra.mxu0 0
    %648 = vmatprep.subr.bf16.mxu0 0
    %649 = vmatpush1.bf16.msra.mxu0 0
    %650 = vmatprep.subr.bf16.mxu0 0
    %651 = vmatpush1.bf16.msra.mxu0 0
    %652 = vmatprep.subr.bf16.mxu0 0
    %653 = vmatpush1.bf16.msra.mxu0 0
    %654 = vmatprep.subr.bf16.mxu0 0
    %655 = vmatpush1.bf16.msra.mxu0 0
    %656 = vmatprep.subr.bf16.mxu0 0
    %657 = vmatpush1.bf16.msra.mxu0 0
    %658 = vmatprep.subr.bf16.mxu0 0
    %659 = vmatpush1.bf16.msra.mxu0 0
    %660 = vmatprep.subr.bf16.mxu0 0
    %661 = vmatpush1.bf16.msra.mxu0 0
    %662 = vmatprep.subr.bf16.mxu0 0
    %663 = vmatpush1.bf16.msra.mxu0 0
    %664 = vmatprep.subr.bf16.mxu0 0
    %665 = vmatpush1.bf16.msra.mxu0 0
    %666 = vmatprep.subr.bf16.mxu0 0
    %667 = vmatpush1.bf16.msra.mxu0 0
    %668 = vmatprep.subr.bf16.mxu0 0
    %669 = vmatpush1.bf16.msra.mxu0 0
    %670 = vmatprep.subr.bf16.mxu0 0
    %671 = vmatpush1.bf16.msra.mxu0 0
    %672 = vmatprep.mubr.bf16.mxu0 0
    %673 = vmatmul.mubr.bf16.gmra.mrb[0].mxu0 %v638
    %v674 = vpop.f32.mrb[0].mxu0
    %v675 = vadd.f32 0.0, %v674
    %v676 = vpop.f32.mrb[0].mxu0
    %v677 = vpop.f32.mrb[0].mxu0
    %v678 = vadd.f32 0.0, %v677
    %v679 = vpop.f32.mrb[0].mxu0
    %680 = vdwg.mxu0
    %v681 = vrcp.pop %v632
    %v682 = vrcp.pop %v635
    %v683 = vmul.f32 %v675, %v681
    %v684 = vmul.f32 %v678, %v682
    %v685 = vpack.c.bf16 %v684, %v683
    %687 = vrot.lane.b32.xlu0 %v566, 96
    %v688 = vpop.permute.xlu0 %687
    %690 = vrot.lane.b32.xlu0 %v567, 96
    %v691 = vpop.permute.xlu0 %690
    %v693 = vsel %vm569, %v688, 0
    %v696 = vsel %vm569, %v691, 0
    %698 = vmatprep.subr.bf16.mxu0 0
    %699 = vmatpush1.bf16.xpose.msra.mxu0 %v696
    %700 = vmatprep.subr.bf16.mxu0 0
    %701 = vmatpush1.bf16.xpose.msra.mxu0 0
    %702 = vmatprep.subr.bf16.mxu0 0
    %703 = vmatpush1.bf16.xpose.msra.mxu0 0
    %704 = vmatprep.subr.bf16.mxu0 0
    %705 = vmatpush1.bf16.xpose.msra.mxu0 0
    %706 = vmatprep.subr.bf16.mxu0 0
    %707 = vmatpush1.bf16.xpose.msra.mxu0 0
    %708 = vmatprep.subr.bf16.mxu0 0
    %709 = vmatpush1.bf16.xpose.msra.mxu0 0
    %710 = vmatprep.subr.bf16.mxu0 0
    %711 = vmatpush1.bf16.xpose.msra.mxu0 0
    %712 = vmatprep.subr.bf16.mxu0 0
    %713 = vmatpush1.bf16.xpose.msra.mxu0 0
    %714 = vmatprep.subr.bf16.mxu0 0
    %715 = vmatpush1.bf16.xpose.msra.mxu0 0
    %716 = vmatprep.subr.bf16.mxu0 0
    %717 = vmatpush1.bf16.xpose.msra.mxu0 0
    %718 = vmatprep.subr.bf16.mxu0 0
    %719 = vmatpush1.bf16.xpose.msra.mxu0 0
    %720 = vmatprep.subr.bf16.mxu0 0
    %721 = vmatpush1.bf16.xpose.msra.mxu0 0
    %722 = vmatprep.subr.bf16.mxu0 0
    %723 = vmatpush1.bf16.xpose.msra.mxu0 0
    %724 = vmatprep.subr.bf16.mxu0 0
    %725 = vmatpush1.bf16.xpose.msra.mxu0 0
    %726 = vmatprep.subr.bf16.mxu0 0
    %727 = vmatpush1.bf16.xpose.msra.mxu0 0
    %728 = vmatprep.subr.bf16.mxu0 0
    %729 = vmatpush1.bf16.xpose.msra.mxu0 0
    %730 = vmatprep.mubr.bf16.mxu0 0
    %731 = vmatmul.mubr.bf16.gmra.mrb[0].mxu0 %v693
    %v732 = vpop.f32.mrb[0].mxu0
    %v733 = vadd.f32 %v296, %v732
    %v734 = vpop.f32.mrb[0].mxu0
    %v735 = vpop.f32.mrb[0].mxu0
    %v736 = vadd.f32 %v297, %v735
    %v737 = vpop.f32.mrb[0].mxu0
    %738 = vdwg.mxu0
    %v739 = vsel %vm617, %v733, -inf
    %740 = vmax.xlane.f32.xlu0 %v739
    %v741 = vpop.xlane.xlu0 %740
    %v742 = vsel %vm617, %v736, -inf
    %743 = vmax.xlane.f32.xlu0 %v742
    %v744 = vpop.xlane.xlu0 %743
    %v745 = vsub.f32 %v733, %v741
    %v746 = vsub.f32 %v736, %v744
    %v747 = vmul.f32 %v745, 1.442695
    %v748 = vpow.pop %v747
    %v749 = vmul.f32 %v746, 1.442695
    %v750 = vpow.pop %v749
    %v751 = vsel %vm617, %v748, 0.0
    %752 = vadd.xlane.f32.xlu0 %v751
    %v753 = vpop.xlane.xlu0 %752
    %v754 = vsel %vm617, %v750, 0.0
    %755 = vadd.xlane.f32.xlu0 %v754
    %v756 = vpop.xlane.xlu0 %755
    %v757 = vpack.c.bf16 %v750, %v748
    %759 = vrot.lane.b32.xlu0 %v568, 96
    %v760 = vpop.permute.xlu0 %759
    %v763 = vsel %vm617, %v757, 0
    %765 = vmatprep.subr.bf16.mxu0 0
    %766 = vmatpush1.bf16.msra.mxu0 %v760
    %767 = vmatprep.subr.bf16.mxu0 0
    %768 = vmatpush1.bf16.msra.mxu0 0
    %769 = vmatprep.subr.bf16.mxu0 0
    %770 = vmatpush1.bf16.msra.mxu0 0
    %771 = vmatprep.subr.bf16.mxu0 0
    %772 = vmatpush1.bf16.msra.mxu0 0
    %773 = vmatprep.subr.bf16.mxu0 0
    %774 = vmatpush1.bf16.msra.mxu0 0
    %775 = vmatprep.subr.bf16.mxu0 0
    %776 = vmatpush1.bf16.msra.mxu0 0
    %777 = vmatprep.subr.bf16.mxu0 0
    %778 = vmatpush1.bf16.msra.mxu0 0
    %779 = vmatprep.subr.bf16.mxu0 0
    %780 = vmatpush1.bf16.msra.mxu0 0
    %781 = vmatprep.subr.bf16.mxu0 0
    %782 = vmatpush1.bf16.msra.mxu0 0
    %783 = vmatprep.subr.bf16.mxu0 0
    %784 = vmatpush1.bf16.msra.mxu0 0
    %785 = vmatprep.subr.bf16.mxu0 0
    %786 = vmatpush1.bf16.msra.mxu0 0
    %787 = vmatprep.subr.bf16.mxu0 0
    %788 = vmatpush1.bf16.msra.mxu0 0
    %789 = vmatprep.subr.bf16.mxu0 0
    %790 = vmatpush1.bf16.msra.mxu0 0
    %791 = vmatprep.subr.bf16.mxu0 0
    %792 = vmatpush1.bf16.msra.mxu0 0
    %793 = vmatprep.subr.bf16.mxu0 0
    %794 = vmatpush1.bf16.msra.mxu0 0
    %795 = vmatprep.subr.bf16.mxu0 0
    %796 = vmatpush1.bf16.msra.mxu0 0
    %797 = vmatprep.mubr.bf16.mxu0 0
    %798 = vmatmul.mubr.bf16.gmra.mrb[0].mxu0 %v763
    %v799 = vpop.f32.mrb[0].mxu0
    %v800 = vadd.f32 0.0, %v799
    %v801 = vpop.f32.mrb[0].mxu0
    %v802 = vpop.f32.mrb[0].mxu0
    %v803 = vadd.f32 0.0, %v802
    %v804 = vpop.f32.mrb[0].mxu0
    %805 = vdwg.mxu0
    %v806 = vrcp.pop %v753
    %v807 = vrcp.pop %v756
    %v808 = vmul.f32 %v800, %v806
    %v809 = vmul.f32 %v803, %v807
    %v810 = vpack.c.bf16 %v809, %v808
    %811 = vrot.lane.b32.xlu0 %v566, 64
    %v812 = vpop.permute.xlu0 %811
    %813 = vrot.lane.b32.xlu0 %v567, 64
    %v814 = vpop.permute.xlu0 %813
    %v816 = vsel %vm569, %v812, 0
    %v819 = vsel %vm569, %v814, 0
    %821 = vmatprep.subr.bf16.mxu0 0
    %822 = vmatpush1.bf16.xpose.msra.mxu0 %v819
    %823 = vmatprep.subr.bf16.mxu0 0
    %824 = vmatpush1.bf16.xpose.msra.mxu0 0
    %825 = vmatprep.subr.bf16.mxu0 0
    %826 = vmatpush1.bf16.xpose.msra.mxu0 0
    %827 = vmatprep.subr.bf16.mxu0 0
    %828 = vmatpush1.bf16.xpose.msra.mxu0 0
    %829 = vmatprep.subr.bf16.mxu0 0
    %830 = vmatpush1.bf16.xpose.msra.mxu0 0
    %831 = vmatprep.subr.bf16.mxu0 0
    %832 = vmatpush1.bf16.xpose.msra.mxu0 0
    %833 = vmatprep.subr.bf16.mxu0 0
    %834 = vmatpush1.bf16.xpose.msra.mxu0 0
    %835 = vmatprep.subr.bf16.mxu0 0
    %836 = vmatpush1.bf16.xpose.msra.mxu0 0
    %837 = vmatprep.subr.bf16.mxu0 0
    %838 = vmatpush1.bf16.xpose.msra.mxu0 0
    %839 = vmatprep.subr.bf16.mxu0 0
    %840 = vmatpush1.bf16.xpose.msra.mxu0 0
    %841 = vmatprep.subr.bf16.mxu0 0
    %842 = vmatpush1.bf16.xpose.msra.mxu0 0
    %843 = vmatprep.subr.bf16.mxu0 0
    %844 = vmatpush1.bf16.xpose.msra.mxu0 0
    %845 = vmatprep.subr.bf16.mxu0 0
    %846 = vmatpush1.bf16.xpose.msra.mxu0 0
    %847 = vmatprep.subr.bf16.mxu0 0
    %848 = vmatpush1.bf16.xpose.msra.mxu0 0
    %849 = vmatprep.subr.bf16.mxu0 0
    %850 = vmatpush1.bf16.xpose.msra.mxu0 0
    %851 = vmatprep.subr.bf16.mxu0 0
    %852 = vmatpush1.bf16.xpose.msra.mxu0 0
    %853 = vmatprep.mubr.bf16.mxu0 0
    %854 = vmatmul.mubr.bf16.gmra.mrb[0].mxu0 %v816
    %v855 = vpop.f32.mrb[0].mxu0
    %v856 = vadd.f32 %v296, %v855
    %v857 = vpop.f32.mrb[0].mxu0
    %v858 = vpop.f32.mrb[0].mxu0
    %v859 = vadd.f32 %v297, %v858
    %v860 = vpop.f32.mrb[0].mxu0
    %861 = vdwg.mxu0
    %v862 = vsel %vm617, %v856, -inf
    %863 = vmax.xlane.f32.xlu0 %v862
    %v864 = vpop.xlane.xlu0 %863
    %v865 = vsel %vm617, %v859, -inf
    %866 = vmax.xlane.f32.xlu0 %v865
    %v867 = vpop.xlane.xlu0 %866
    %v868 = vsub.f32 %v856, %v864
    %v869 = vsub.f32 %v859, %v867
    %v870 = vmul.f32 %v868, 1.442695
    %v871 = vpow.pop %v870
    %v872 = vmul.f32 %v869, 1.442695
    %v873 = vpow.pop %v872
    %v874 = vsel %vm617, %v871, 0.0
    %875 = vadd.xlane.f32.xlu0 %v874
    %v876 = vpop.xlane.xlu0 %875
    %v877 = vsel %vm617, %v873, 0.0
    %878 = vadd.xlane.f32.xlu0 %v877
    %v879 = vpop.xlane.xlu0 %878
    %v880 = vpack.c.bf16 %v873, %v871
    %881 = vrot.lane.b32.xlu0 %v568, 64
    %v882 = vpop.permute.xlu0 %881
    %v885 = vsel %vm617, %v880, 0
    %887 = vmatprep.subr.bf16.mxu0 0
    %888 = vmatpush1.bf16.msra.mxu0 %v882
    %889 = vmatprep.subr.bf16.mxu0 0
    %890 = vmatpush1.bf16.msra.mxu0 0
    %891 = vmatprep.subr.bf16.mxu0 0
    %892 = vmatpush1.bf16.msra.mxu0 0
    %893 = vmatprep.subr.bf16.mxu0 0
    %894 = vmatpush1.bf16.msra.mxu0 0
    %895 = vmatprep.subr.bf16.mxu0 0
    %896 = vmatpush1.bf16.msra.mxu0 0
    %897 = vmatprep.subr.bf16.mxu0 0
    %898 = vmatpush1.bf16.msra.mxu0 0
    %899 = vmatprep.subr.bf16.mxu0 0
    %900 = vmatpush1.bf16.msra.mxu0 0
    %901 = vmatprep.subr.bf16.mxu0 0
    %902 = vmatpush1.bf16.msra.mxu0 0
    %903 = vmatprep.subr.bf16.mxu0 0
    %904 = vmatpush1.bf16.msra.mxu0 0
    %905 = vmatprep.subr.bf16.mxu0 0
    %906 = vmatpush1.bf16.msra.mxu0 0
    %907 = vmatprep.subr.bf16.mxu0 0
    %908 = vmatpush1.bf16.msra.mxu0 0
    %909 = vmatprep.subr.bf16.mxu0 0
    %910 = vmatpush1.bf16.msra.mxu0 0
    %911 = vmatprep.subr.bf16.mxu0 0
    %912 = vmatpush1.bf16.msra.mxu0 0
    %913 = vmatprep.subr.bf16.mxu0 0
    %914 = vmatpush1.bf16.msra.mxu0 0
    %915 = vmatprep.subr.bf16.mxu0 0
    %916 = vmatpush1.bf16.msra.mxu0 0
    %917 = vmatprep.subr.bf16.mxu0 0
    %918 = vmatpush1.bf16.msra.mxu0 0
    %919 = vmatprep.mubr.bf16.mxu0 0
    %920 = vmatmul.mubr.bf16.gmra.mrb[0].mxu0 %v885
    %v921 = vpop.f32.mrb[0].mxu0
    %v922 = vadd.f32 0.0, %v921
    %v923 = vpop.f32.mrb[0].mxu0
    %v924 = vpop.f32.mrb[0].mxu0
    %v925 = vadd.f32 0.0, %v924
    %v926 = vpop.f32.mrb[0].mxu0
    %927 = vdwg.mxu0
    %v928 = vrcp.pop %v876
    %v929 = vrcp.pop %v879
    %v930 = vmul.f32 %v922, %v928
    %v931 = vmul.f32 %v925, %v929
    %v932 = vpack.c.bf16 %v931, %v930
    %933 = vrot.lane.b32.xlu0 %v566, 32
    %v934 = vpop.permute.xlu0 %933
    %935 = vrot.lane.b32.xlu0 %v567, 32
    %v936 = vpop.permute.xlu0 %935
    %v938 = vsel %vm569, %v934, 0
    %v941 = vsel %vm569, %v936, 0
    %943 = vmatprep.subr.bf16.mxu0 0
    %944 = vmatpush1.bf16.xpose.msra.mxu0 %v941
    %945 = vmatprep.subr.bf16.mxu0 0
    %946 = vmatpush1.bf16.xpose.msra.mxu0 0
    %947 = vmatprep.subr.bf16.mxu0 0
    %948 = vmatpush1.bf16.xpose.msra.mxu0 0
    %949 = vmatprep.subr.bf16.mxu0 0
    %950 = vmatpush1.bf16.xpose.msra.mxu0 0
    %951 = vmatprep.subr.bf16.mxu0 0
    %952 = vmatpush1.bf16.xpose.msra.mxu0 0
    %953 = vmatprep.subr.bf16.mxu0 0
    %954 = vmatpush1.bf16.xpose.msra.mxu0 0
    %955 = vmatprep.subr.bf16.mxu0 0
    %956 = vmatpush1.bf16.xpose.msra.mxu0 0
    %957 = vmatprep.subr.bf16.mxu0 0
    %958 = vmatpush1.bf16.xpose.msra.mxu0 0
    %959 = vmatprep.subr.bf16.mxu0 0
    %960 = vmatpush1.bf16.xpose.msra.mxu0 0
    %961 = vmatprep.subr.bf16.mxu0 0
    %962 = vmatpush1.bf16.xpose.msra.mxu0 0
    %963 = vmatprep.subr.bf16.mxu0 0
    %964 = vmatpush1.bf16.xpose.msra.mxu0 0
    %965 = vmatprep.subr.bf16.mxu0 0
    %966 = vmatpush1.bf16.xpose.msra.mxu0 0
    %967 = vmatprep.subr.bf16.mxu0 0
    %968 = vmatpush1.bf16.xpose.msra.mxu0 0
    %969 = vmatprep.subr.bf16.mxu0 0
    %970 = vmatpush1.bf16.xpose.msra.mxu0 0
    %971 = vmatprep.subr.bf16.mxu0 0
    %972 = vmatpush1.bf16.xpose.msra.mxu0 0
    %973 = vmatprep.subr.bf16.mxu0 0
    %974 = vmatpush1.bf16.xpose.msra.mxu0 0
    %975 = vmatprep.mubr.bf16.mxu0 0
    %976 = vmatmul.mubr.bf16.gmra.mrb[0].mxu0 %v938
    %v977 = vpop.f32.mrb[0].mxu0
    %v978 = vadd.f32 %v296, %v977
    %v979 = vpop.f32.mrb[0].mxu0
    %v980 = vpop.f32.mrb[0].mxu0
    %v981 = vadd.f32 %v297, %v980
    %v982 = vpop.f32.mrb[0].mxu0
    %983 = vdwg.mxu0
    %v984 = vsel %vm617, %v978, -inf
    %985 = vmax.xlane.f32.xlu0 %v984
    %v986 = vpop.xlane.xlu0 %985
    %v987 = vsel %vm617, %v981, -inf
    %988 = vmax.xlane.f32.xlu0 %v987
    %v989 = vpop.xlane.xlu0 %988
    %v990 = vsub.f32 %v978, %v986
    %v991 = vsub.f32 %v981, %v989
    %v992 = vmul.f32 %v990, 1.442695
    %v993 = vpow.pop %v992
    %v994 = vmul.f32 %v991, 1.442695
    %v995 = vpow.pop %v994
    %v996 = vsel %vm617, %v993, 0.0
    %997 = vadd.xlane.f32.xlu0 %v996
    %v998 = vpop.xlane.xlu0 %997
    %v999 = vsel %vm617, %v995, 0.0
    %1000 = vadd.xlane.f32.xlu0 %v999
    %v1001 = vpop.xlane.xlu0 %1000
    %v1002 = vpack.c.bf16 %v995, %v993
    %1003 = vrot.lane.b32.xlu0 %v568, 32
    %v1004 = vpop.permute.xlu0 %1003
    %v1007 = vsel %vm617, %v1002, 0
    %1009 = vmatprep.subr.bf16.mxu0 0
    %1010 = vmatpush1.bf16.msra.mxu0 %v1004
    %1011 = vmatprep.subr.bf16.mxu0 0
    %1012 = vmatpush1.bf16.msra.mxu0 0
    %1013 = vmatprep.subr.bf16.mxu0 0
    %1014 = vmatpush1.bf16.msra.mxu0 0
    %1015 = vmatprep.subr.bf16.mxu0 0
    %1016 = vmatpush1.bf16.msra.mxu0 0
    %1017 = vmatprep.subr.bf16.mxu0 0
    %1018 = vmatpush1.bf16.msra.mxu0 0
    %1019 = vmatprep.subr.bf16.mxu0 0
    %1020 = vmatpush1.bf16.msra.mxu0 0
    %1021 = vmatprep.subr.bf16.mxu0 0
    %1022 = vmatpush1.bf16.msra.mxu0 0
    %1023 = vmatprep.subr.bf16.mxu0 0
    %1024 = vmatpush1.bf16.msra.mxu0 0
    %1025 = vmatprep.subr.bf16.mxu0 0
    %1026 = vmatpush1.bf16.msra.mxu0 0
    %1027 = vmatprep.subr.bf16.mxu0 0
    %1028 = vmatpush1.bf16.msra.mxu0 0
    %1029 = vmatprep.subr.bf16.mxu0 0
    %1030 = vmatpush1.bf16.msra.mxu0 0
    %1031 = vmatprep.subr.bf16.mxu0 0
    %1032 = vmatpush1.bf16.msra.mxu0 0
    %1033 = vmatprep.subr.bf16.mxu0 0
    %1034 = vmatpush1.bf16.msra.mxu0 0
    %1035 = vmatprep.subr.bf16.mxu0 0
    %1036 = vmatpush1.bf16.msra.mxu0 0
    %1037 = vmatprep.subr.bf16.mxu0 0
    %1038 = vmatpush1.bf16.msra.mxu0 0
    %1039 = vmatprep.subr.bf16.mxu0 0
    %1040 = vmatpush1.bf16.msra.mxu0 0
    %1041 = vmatprep.mubr.bf16.mxu0 0
    %1042 = vmatmul.mubr.bf16.gmra.mrb[0].mxu0 %v1007
    %v1043 = vpop.f32.mrb[0].mxu0
    %v1044 = vadd.f32 0.0, %v1043
    %v1045 = vpop.f32.mrb[0].mxu0
    %v1046 = vpop.f32.mrb[0].mxu0
    %v1047 = vadd.f32 0.0, %v1046
    %v1048 = vpop.f32.mrb[0].mxu0
    %1049 = vdwg.mxu0
    %v1050 = vrcp.pop %v998
    %v1051 = vrcp.pop %v1001
    %v1052 = vmul.f32 %v1044, %v1050
    %v1053 = vmul.f32 %v1047, %v1051
    %v1054 = vpack.c.bf16 %v1053, %v1052
    %1056 = vrot.lane.b32.xlu0 %v810, 32
    %v1057 = vpop.permute.xlu0 %1056
    %1059 = vrot.lane.b32.xlu0 %v932, 64
    %v1060 = vpop.permute.xlu0 %1059
    %1062 = vrot.lane.b32.xlu0 %v1054, 96
    %v1063 = vpop.permute.xlu0 %1062
    %v1066 = vsel %vm569, %v685, %v1057
    %vm1067 = vcmask 523264
    %v1069 = vsel %vm1067, %v1066, %v1060
    %vm1070 = vcmask 785408
    %v1072 = vsel %vm1070, %v1069, %v1063
    %v1075 = vlaneseq
    %v1076 = vshrl.u32 %v1075, 7
    %v1077 = vsub.s32 0, %v1076
    %v1078 = vrot.slane %v191, %v1077
    %v1096 = vunpack.c.l.b16 %v175
    %v1097 = vunpack.c.l.b16 %v176
    %v1098 = vunpack.c.l.b16 %v177
    %v1099 = vunpack.c.l.b16 %v178
    %v1100 = vunpack.c.l.b16 %v179
    %v1101 = vunpack.c.l.b16 %v180
    %v1102 = vunpack.c.l.b16 %v181
    %v1103 = vunpack.c.l.b16 %v182
    %v1104 = vunpack.c.l.b16 %v183
    %v1105 = vunpack.c.l.b16 %v184
    %v1106 = vunpack.c.l.b16 %v185
    %v1107 = vunpack.c.l.b16 %v186
    %v1108 = vunpack.c.l.b16 %v187
    %v1109 = vunpack.c.l.b16 %v188
    %v1110 = vunpack.c.l.b16 %v189
    %v1111 = vunpack.c.l.b16 %v190
    %v1112 = vpack.c.b16 %v1097, %v1096
    %v1113 = vpack.c.b16 %v1099, %v1098
    %v1114 = vpack.c.b16 %v1101, %v1100
    %v1115 = vpack.c.b16 %v1103, %v1102
    %v1116 = vpack.c.b16 %v1105, %v1104
    %v1117 = vpack.c.b16 %v1107, %v1106
    %v1118 = vpack.c.b16 %v1109, %v1108
    %v1119 = vpack.c.b16 %v1111, %v1110
    %1128 = vmatprep.subr.bf16.mxu0 0
    %1129 = vmatpush1.bf16.msra.mxu0 %v1112
    %1130 = vmatprep.subr.bf16.mxu0 0
    %1131 = vmatpush1.bf16.msra.mxu0 %v1113
    %1132 = vmatprep.subr.bf16.mxu0 0
    %1133 = vmatpush1.bf16.msra.mxu0 %v1114
    %1134 = vmatprep.subr.bf16.mxu0 0
    %1135 = vmatpush1.bf16.msra.mxu0 %v1115
    %1136 = vmatprep.subr.bf16.mxu0 0
    %1137 = vmatpush1.bf16.msra.mxu0 %v1116
    %1138 = vmatprep.subr.bf16.mxu0 0
    %1139 = vmatpush1.bf16.msra.mxu0 %v1117
    %1140 = vmatprep.subr.bf16.mxu0 0
    %1141 = vmatpush1.bf16.msra.mxu0 %v1118
    %1142 = vmatprep.subr.bf16.mxu0 0
    %1143 = vmatpush1.bf16.msra.mxu0 %v1119
    %1144 = vmatprep.subr.bf16.mxu0 0
    %1145 = vmatpush1.bf16.msra.mxu0 0
    %1146 = vmatprep.subr.bf16.mxu0 0
    %1147 = vmatpush1.bf16.msra.mxu0 0
    %1148 = vmatprep.subr.bf16.mxu0 0
    %1149 = vmatpush1.bf16.msra.mxu0 0
    %1150 = vmatprep.subr.bf16.mxu0 0
    %1151 = vmatpush1.bf16.msra.mxu0 0
    %1152 = vmatprep.subr.bf16.mxu0 0
    %1153 = vmatpush1.bf16.msra.mxu0 0
    %1154 = vmatprep.subr.bf16.mxu0 0
    %1155 = vmatpush1.bf16.msra.mxu0 0
    %1156 = vmatprep.subr.bf16.mxu0 0
    %1157 = vmatpush1.bf16.msra.mxu0 0
    %1158 = vmatprep.subr.bf16.mxu0 0
    %1159 = vmatpush1.bf16.msra.mxu0 0
    %1160 = vmatprep.mubr.bf16.mxu0 0
    %1161 = vmatmul.mubr.bf16.gmra.mrb[0].mxu0 %v1072
    %v1162 = vpop.f32.mrb[0].mxu0
    %v1163 = vadd.f32 %v1078, %v1162
    %v1164 = vpop.f32.mrb[0].mxu0
    %v1165 = vpop.f32.mrb[0].mxu0
    %v1166 = vadd.f32 %v1078, %v1165
    %v1167 = vpop.f32.mrb[0].mxu0
    %1168 = vdwg.mxu0
    %v1169 = vadd.f32 %v294, %v1163
    %v1170 = vadd.f32 %v295, %v1166
    %1171 = vadd.xlane.f32.xlu0 %v1169
    %v1172 = vpop.xlane.xlu0 %1171
    %1173 = vadd.xlane.f32.xlu0 %v1170
    %v1174 = vpop.xlane.xlu0 %1173
    %v1175 = vmul.f32 %v1172, %v302
    %v1176 = vmul.f32 %v1174, %v302
    %v1177 = vsub.f32 %v1169, %v1175
    %v1178 = vsub.f32 %v1170, %v1176
    %v1179 = vmul.f32 %v1177, %v1177
    %v1180 = vmul.f32 %v1178, %v1178
    %1181 = vadd.xlane.f32.xlu0 %v1179
    %v1182 = vpop.xlane.xlu0 %1181
    %1183 = vadd.xlane.f32.xlu0 %v1180
    %v1184 = vpop.xlane.xlu0 %1183
    %v1185 = vmul.f32 %v1182, %v302
    %v1186 = vmul.f32 %v1184, %v302
    %v1187 = vadd.f32 %v1185, 1e-05
    %v1188 = vadd.f32 %v1186, 1e-05
    %v1189 = vrsqrt.pop %v1187
    %v1190 = vrsqrt.pop %v1188
    %v1191 = vmul.f32 %v1177, %v1189
    %v1192 = vmul.f32 %v1178, %v1190
    %v1194 = vlaneseq
    %v1195 = vshrl.u32 %v1194, 7
    %v1196 = vsub.s32 0, %v1195
    %v1197 = vrot.slane %v292, %v1196
    %v1199 = vmul.f32 %v1191, %v1197
    %v1200 = vmul.f32 %v1192, %v1197
    %v1202 = vlaneseq
    %v1203 = vshrl.u32 %v1202, 7
    %v1204 = vsub.s32 0, %v1203
    %v1205 = vrot.slane %v293, %v1204
    %v1207 = vadd.f32 %v1199, %v1205
    %v1208 = vadd.f32 %v1200, %v1205
    %v1209 = vpack.c.bf16 %v1208, %v1207
    %v1211 = vlaneseq
    %v1212 = vshrl.u32 %v1211, 7
    %v1213 = vsub.s32 0, %v1212
    %v1214 = vrot.slane %v224, %v1213
    %v1215 = vlaneseq
    %v1216 = vshrl.u32 %v1215, 7
    %v1217 = vsub.s32 1, %v1216
    %v1218 = vrot.slane %v224, %v1217
    %v1219 = vlaneseq
    %v1220 = vshrl.u32 %v1219, 7
    %v1221 = vsub.s32 2, %v1220
    %v1222 = vrot.slane %v224, %v1221
    %v1223 = vlaneseq
    %v1224 = vshrl.u32 %v1223, 7
    %v1225 = vsub.s32 3, %v1224
    %v1226 = vrot.slane %v224, %v1225
    %v1263 = vunpack.c.l.b16 %v192
    %v1264 = vunpack.c.h.b16 %v192
    %v1265 = vunpack.c.l.b16 %v193
    %v1266 = vunpack.c.h.b16 %v193
    %v1267 = vunpack.c.l.b16 %v194
    %v1268 = vunpack.c.h.b16 %v194
    %v1269 = vunpack.c.l.b16 %v195
    %v1270 = vunpack.c.h.b16 %v195
    %v1271 = vunpack.c.l.b16 %v196
    %v1272 = vunpack.c.h.b16 %v196
    %v1273 = vunpack.c.l.b16 %v197
    %v1274 = vunpack.c.h.b16 %v197
    %v1275 = vunpack.c.l.b16 %v198
    %v1276 = vunpack.c.h.b16 %v198
    %v1277 = vunpack.c.l.b16 %v199
    %v1278 = vunpack.c.h.b16 %v199
    %v1279 = vunpack.c.l.b16 %v200
    %v1280 = vunpack.c.h.b16 %v200
    %v1281 = vunpack.c.l.b16 %v201
    %v1282 = vunpack.c.h.b16 %v201
    %v1283 = vunpack.c.l.b16 %v202
    %v1284 = vunpack.c.h.b16 %v202
    %v1285 = vunpack.c.l.b16 %v203
    %v1286 = vunpack.c.h.b16 %v203
    %v1287 = vunpack.c.l.b16 %v204
    %v1288 = vunpack.c.h.b16 %v204
    %v1289 = vunpack.c.l.b16 %v205
    %v1290 = vunpack.c.h.b16 %v205
    %v1291 = vunpack.c.l.b16 %v206
    %v1292 = vunpack.c.h.b16 %v206
    %v1293 = vunpack.c.l.b16 %v207
    %v1294 = vunpack.c.h.b16 %v207
    %v1295 = vunpack.c.l.b16 %v208
    %v1296 = vunpack.c.h.b16 %v208
    %v1297 = vunpack.c.l.b16 %v209
    %v1298 = vunpack.c.h.b16 %v209
    %v1299 = vunpack.c.l.b16 %v210
    %v1300 = vunpack.c.h.b16 %v210
    %v1301 = vunpack.c.l.b16 %v211
    %v1302 = vunpack.c.h.b16 %v211
    %v1303 = vunpack.c.l.b16 %v212
    %v1304 = vunpack.c.h.b16 %v212
    %v1305 = vunpack.c.l.b16 %v213
    %v1306 = vunpack.c.h.b16 %v213
    %v1307 = vunpack.c.l.b16 %v214
    %v1308 = vunpack.c.h.b16 %v214
    %v1309 = vunpack.c.l.b16 %v215
    %v1310 = vunpack.c.h.b16 %v215
    %v1311 = vunpack.c.l.b16 %v216
    %v1312 = vunpack.c.h.b16 %v216
    %v1313 = vunpack.c.l.b16 %v217
    %v1314 = vunpack.c.h.b16 %v217
    %v1315 = vunpack.c.l.b16 %v218
    %v1316 = vunpack.c.h.b16 %v218
    %v1317 = vunpack.c.l.b16 %v219
    %v1318 = vunpack.c.h.b16 %v219
    %v1319 = vunpack.c.l.b16 %v220
    %v1320 = vunpack.c.h.b16 %v220
    %v1321 = vunpack.c.l.b16 %v221
    %v1322 = vunpack.c.h.b16 %v221
    %v1323 = vunpack.c.l.b16 %v222
    %v1324 = vunpack.c.h.b16 %v222
    %v1325 = vunpack.c.l.b16 %v223
    %v1326 = vunpack.c.h.b16 %v223
    %v1327 = vpack.c.b16 %v1267, %v1263
    %v1328 = vpack.c.b16 %v1268, %v1264
    %v1329 = vpack.c.b16 %v1269, %v1265
    %v1330 = vpack.c.b16 %v1270, %v1266
    %v1331 = vpack.c.b16 %v1275, %v1271
    %v1332 = vpack.c.b16 %v1276, %v1272
    %v1333 = vpack.c.b16 %v1277, %v1273
    %v1334 = vpack.c.b16 %v1278, %v1274
    %v1335 = vpack.c.b16 %v1283, %v1279
    %v1336 = vpack.c.b16 %v1284, %v1280
    %v1337 = vpack.c.b16 %v1285, %v1281
    %v1338 = vpack.c.b16 %v1286, %v1282
    %v1339 = vpack.c.b16 %v1291, %v1287
    %v1340 = vpack.c.b16 %v1292, %v1288
    %v1341 = vpack.c.b16 %v1293, %v1289
    %v1342 = vpack.c.b16 %v1294, %v1290
    %v1343 = vpack.c.b16 %v1299, %v1295
    %v1344 = vpack.c.b16 %v1300, %v1296
    %v1345 = vpack.c.b16 %v1301, %v1297
    %v1346 = vpack.c.b16 %v1302, %v1298
    %v1347 = vpack.c.b16 %v1307, %v1303
    %v1348 = vpack.c.b16 %v1308, %v1304
    %v1349 = vpack.c.b16 %v1309, %v1305
    %v1350 = vpack.c.b16 %v1310, %v1306
    %v1351 = vpack.c.b16 %v1315, %v1311
    %v1352 = vpack.c.b16 %v1316, %v1312
    %v1353 = vpack.c.b16 %v1317, %v1313
    %v1354 = vpack.c.b16 %v1318, %v1314
    %v1355 = vpack.c.b16 %v1323, %v1319
    %v1356 = vpack.c.b16 %v1324, %v1320
    %v1357 = vpack.c.b16 %v1325, %v1321
    %v1358 = vpack.c.b16 %v1326, %v1322
    %1391 = vmatprep.subr.bf16.mxu0 %v1328
    %1392 = vmatpush1.bf16.msra.mxu0 %v1327
    %1393 = vmatprep.subr.bf16.mxu0 %v1332
    %1394 = vmatpush1.bf16.msra.mxu0 %v1331
    %1395 = vmatprep.subr.bf16.mxu0 %v1336
    %1396 = vmatpush1.bf16.msra.mxu0 %v1335
    %1397 = vmatprep.subr.bf16.mxu0 %v1340
    %1398 = vmatpush1.bf16.msra.mxu0 %v1339
    %1399 = vmatprep.subr.bf16.mxu0 %v1344
    %1400 = vmatpush1.bf16.msra.mxu0 %v1343
    %1401 = vmatprep.subr.bf16.mxu0 %v1348
    %1402 = vmatpush1.bf16.msra.mxu0 %v1347
    %1403 = vmatprep.subr.bf16.mxu0 %v1352
    %1404 = vmatpush1.bf16.msra.mxu0 %v1351
    %1405 = vmatprep.subr.bf16.mxu0 %v1356
    %1406 = vmatpush1.bf16.msra.mxu0 %v1355
    %1407 = vmatprep.subr.bf16.mxu0 0
    %1408 = vmatpush1.bf16.msra.mxu0 0
    %1409 = vmatprep.subr.bf16.mxu0 0
    %1410 = vmatpush1.bf16.msra.mxu0 0
    %1411 = vmatprep.subr.bf16.mxu0 0
    %1412 = vmatpush1.bf16.msra.mxu0 0
    %1413 = vmatprep.subr.bf16.mxu0 0
    %1414 = vmatpush1.bf16.msra.mxu0 0
    %1415 = vmatprep.subr.bf16.mxu0 0
    %1416 = vmatpush1.bf16.msra.mxu0 0
    %1417 = vmatprep.subr.bf16.mxu0 0
    %1418 = vmatpush1.bf16.msra.mxu0 0
    %1419 = vmatprep.subr.bf16.mxu0 0
    %1420 = vmatpush1.bf16.msra.mxu0 0
    %1421 = vmatprep.subr.bf16.mxu0 0
    %1422 = vmatpush1.bf16.msra.mxu0 0
    %1423 = vmatprep.mubr.bf16.mxu0 0
    %1424 = vmatmul.mubr.bf16.gmra.mrb[0].mxu0 %v1209
    %v1425 = vpop.f32.mrb[0].mxu0
    %v1426 = vadd.f32 %v1214, %v1425
    %v1427 = vpop.f32.mrb[0].mxu0
    %v1428 = vadd.f32 %v1218, %v1427
    %v1429 = vpop.f32.mrb[0].mxu0
    %v1430 = vadd.f32 %v1214, %v1429
    %v1431 = vpop.f32.mrb[0].mxu0
    %v1432 = vadd.f32 %v1218, %v1431
    %1433 = vdwg.mxu0
    %1434 = vmatprep.subr.bf16.mxu0 %v1330
    %1435 = vmatpush1.bf16.msra.mxu0 %v1329
    %1436 = vmatprep.subr.bf16.mxu0 %v1334
    %1437 = vmatpush1.bf16.msra.mxu0 %v1333
    %1438 = vmatprep.subr.bf16.mxu0 %v1338
    %1439 = vmatpush1.bf16.msra.mxu0 %v1337
    %1440 = vmatprep.subr.bf16.mxu0 %v1342
    %1441 = vmatpush1.bf16.msra.mxu0 %v1341
    %1442 = vmatprep.subr.bf16.mxu0 %v1346
    %1443 = vmatpush1.bf16.msra.mxu0 %v1345
    %1444 = vmatprep.subr.bf16.mxu0 %v1350
    %1445 = vmatpush1.bf16.msra.mxu0 %v1349
    %1446 = vmatprep.subr.bf16.mxu0 %v1354
    %1447 = vmatpush1.bf16.msra.mxu0 %v1353
    %1448 = vmatprep.subr.bf16.mxu0 %v1358
    %1449 = vmatpush1.bf16.msra.mxu0 %v1357
    %1450 = vmatprep.subr.bf16.mxu0 0
    %1451 = vmatpush1.bf16.msra.mxu0 0
    %1452 = vmatprep.subr.bf16.mxu0 0
    %1453 = vmatpush1.bf16.msra.mxu0 0
    %1454 = vmatprep.subr.bf16.mxu0 0
    %1455 = vmatpush1.bf16.msra.mxu0 0
    %1456 = vmatprep.subr.bf16.mxu0 0
    %1457 = vmatpush1.bf16.msra.mxu0 0
    %1458 = vmatprep.subr.bf16.mxu0 0
    %1459 = vmatpush1.bf16.msra.mxu0 0
    %1460 = vmatprep.subr.bf16.mxu0 0
    %1461 = vmatpush1.bf16.msra.mxu0 0
    %1462 = vmatprep.subr.bf16.mxu0 0
    %1463 = vmatpush1.bf16.msra.mxu0 0
    %1464 = vmatprep.subr.bf16.mxu0 0
    %1465 = vmatpush1.bf16.msra.mxu0 0
    %1466 = vmatprep.mubr.bf16.mxu0 0
    %1467 = vmatmul.mubr.bf16.gmra.mrb[0].mxu0 %v1209
    %v1468 = vpop.f32.mrb[0].mxu0
    %v1469 = vadd.f32 %v1222, %v1468
    %v1470 = vpop.f32.mrb[0].mxu0
    %v1471 = vadd.f32 %v1226, %v1470
    %v1472 = vpop.f32.mrb[0].mxu0
    %v1473 = vadd.f32 %v1222, %v1472
    %v1474 = vpop.f32.mrb[0].mxu0
    %v1475 = vadd.f32 %v1226, %v1474
    %1476 = vdwg.mxu0
    %v1477 = vmul.f32 %v1426, 1.702
    %v1478 = vmul.f32 %v1428, 1.702
    %v1479 = vmul.f32 %v1469, 1.702
    %v1480 = vmul.f32 %v1471, 1.702
    %v1481 = vmul.f32 %v1430, 1.702
    %v1482 = vmul.f32 %v1432, 1.702
    %v1483 = vmul.f32 %v1473, 1.702
    %v1484 = vmul.f32 %v1475, 1.702
    %v1485 = vxor.u32 %v1477, 2147483648
    %v1486 = vxor.u32 %v1478, 2147483648
    %v1487 = vxor.u32 %v1479, 2147483648
    %v1488 = vxor.u32 %v1480, 2147483648
    %v1489 = vxor.u32 %v1481, 2147483648
    %v1490 = vxor.u32 %v1482, 2147483648
    %v1491 = vxor.u32 %v1483, 2147483648
    %v1492 = vxor.u32 %v1484, 2147483648
    %v1493 = vmul.f32 %v1485, 1.442695
    %v1494 = vpow.pop %v1493
    %v1495 = vmul.f32 %v1486, 1.442695
    %v1496 = vpow.pop %v1495
    %v1497 = vmul.f32 %v1487, 1.442695
    %v1498 = vpow.pop %v1497
    %v1499 = vmul.f32 %v1488, 1.442695
    %v1500 = vpow.pop %v1499
    %v1501 = vmul.f32 %v1489, 1.442695
    %v1502 = vpow.pop %v1501
    %v1503 = vmul.f32 %v1490, 1.442695
    %v1504 = vpow.pop %v1503
    %v1505 = vmul.f32 %v1491, 1.442695
    %v1506 = vpow.pop %v1505
    %v1507 = vmul.f32 %v1492, 1.442695
    %v1508 = vpow.pop %v1507
    %v1509 = vadd.f32 %v1494, 1.0
    %v1510 = vadd.f32 %v1496, 1.0
    %v1511 = vadd.f32 %v1498, 1.0
    %v1512 = vadd.f32 %v1500, 1.0
    %v1513 = vadd.f32 %v1502, 1.0
    %v1514 = vadd.f32 %v1504, 1.0
    %v1515 = vadd.f32 %v1506, 1.0
    %v1516 = vadd.f32 %v1508, 1.0
    %v1517 = vrcp.pop %v1509
    %v1518 = vmul.f32 1.0, %v1517
    %v1519 = vrcp.pop %v1510
    %v1520 = vmul.f32 1.0, %v1519
    %v1521 = vrcp.pop %v1511
    %v1522 = vmul.f32 1.0, %v1521
    %v1523 = vrcp.pop %v1512
    %v1524 = vmul.f32 1.0, %v1523
    %v1525 = vrcp.pop %v1513
    %v1526 = vmul.f32 1.0, %v1525
    %v1527 = vrcp.pop %v1514
    %v1528 = vmul.f32 1.0, %v1527
    %v1529 = vrcp.pop %v1515
    %v1530 = vmul.f32 1.0, %v1529
    %v1531 = vrcp.pop %v1516
    %v1532 = vmul.f32 1.0, %v1531
    %v1533 = vmul.f32 %v1426, %v1518
    %v1534 = vmul.f32 %v1428, %v1520
    %v1535 = vmul.f32 %v1469, %v1522
    %v1536 = vmul.f32 %v1471, %v1524
    %v1537 = vmul.f32 %v1430, %v1526
    %v1538 = vmul.f32 %v1432, %v1528
    %v1539 = vmul.f32 %v1473, %v1530
    %v1540 = vmul.f32 %v1475, %v1532
    %v1541 = vpack.c.bf16 %v1537, %v1533
    %v1542 = vpack.c.bf16 %v1538, %v1534
    %v1543 = vpack.c.bf16 %v1539, %v1535
    %v1544 = vpack.c.bf16 %v1540, %v1536
    %v1546 = vlaneseq
    %v1547 = vshrl.u32 %v1546, 7
    %v1548 = vsub.s32 0, %v1547
    %v1549 = vrot.slane %v289, %v1548
    %v1615 = vunpack.c.l.b16 %v225
    %v1616 = vunpack.c.l.b16 %v226
    %v1617 = vunpack.c.l.b16 %v227
    %v1618 = vunpack.c.l.b16 %v228
    %v1619 = vunpack.c.l.b16 %v229
    %v1620 = vunpack.c.l.b16 %v230
    %v1621 = vunpack.c.l.b16 %v231
    %v1622 = vunpack.c.l.b16 %v232
    %v1623 = vunpack.c.l.b16 %v233
    %v1624 = vunpack.c.l.b16 %v234
    %v1625 = vunpack.c.l.b16 %v235
    %v1626 = vunpack.c.l.b16 %v236
    %v1627 = vunpack.c.l.b16 %v237
    %v1628 = vunpack.c.l.b16 %v238
    %v1629 = vunpack.c.l.b16 %v239
    %v1630 = vunpack.c.l.b16 %v240
    %v1631 = vunpack.c.l.b16 %v241
    %v1632 = vunpack.c.l.b16 %v242
    %v1633 = vunpack.c.l.b16 %v243
    %v1634 = vunpack.c.l.b16 %v244
    %v1635 = vunpack.c.l.b16 %v245
    %v1636 = vunpack.c.l.b16 %v246
    %v1637 = vunpack.c.l.b16 %v247
    %v1638 = vunpack.c.l.b16 %v248
    %v1639 = vunpack.c.l.b16 %v249
    %v1640 = vunpack.c.l.b16 %v250
    %v1641 = vunpack.c.l.b16 %v251
    %v1642 = vunpack.c.l.b16 %v252
    %v1643 = vunpack.c.l.b16 %v253
    %v1644 = vunpack.c.l.b16 %v254
    %v1645 = vunpack.c.l.b16 %v255
    %v1646 = vunpack.c.l.b16 %v256
    %v1647 = vunpack.c.l.b16 %v257
    %v1648 = vunpack.c.l.b16 %v258
    %v1649 = vunpack.c.l.b16 %v259
    %v1650 = vunpack.c.l.b16 %v260
    %v1651 = vunpack.c.l.b16 %v261
    %v1652 = vunpack.c.l.b16 %v262
    %v1653 = vunpack.c.l.b16 %v263
    %v1654 = vunpack.c.l.b16 %v264
    %v1655 = vunpack.c.l.b16 %v265
    %v1656 = vunpack.c.l.b16 %v266
    %v1657 = vunpack.c.l.b16 %v267
    %v1658 = vunpack.c.l.b16 %v268
    %v1659 = vunpack.c.l.b16 %v269
    %v1660 = vunpack.c.l.b16 %v270
    %v1661 = vunpack.c.l.b16 %v271
    %v1662 = vunpack.c.l.b16 %v272
    %v1663 = vunpack.c.l.b16 %v273
    %v1664 = vunpack.c.l.b16 %v274
    %v1665 = vunpack.c.l.b16 %v275
    %v1666 = vunpack.c.l.b16 %v276
    %v1667 = vunpack.c.l.b16 %v277
    %v1668 = vunpack.c.l.b16 %v278
    %v1669 = vunpack.c.l.b16 %v279
    %v1670 = vunpack.c.l.b16 %v280
    %v1671 = vunpack.c.l.b16 %v281
    %v1672 = vunpack.c.l.b16 %v282
    %v1673 = vunpack.c.l.b16 %v283
    %v1674 = vunpack.c.l.b16 %v284
    %v1675 = vunpack.c.l.b16 %v285
    %v1676 = vunpack.c.l.b16 %v286
    %v1677 = vunpack.c.l.b16 %v287
    %v1678 = vunpack.c.l.b16 %v288
    %v1679 = vpack.c.b16 %v1616, %v1615
    %v1680 = vpack.c.b16 %v1618, %v1617
    %v1681 = vpack.c.b16 %v1620, %v1619
    %v1682 = vpack.c.b16 %v1622, %v1621
    %v1683 = vpack.c.b16 %v1624, %v1623
    %v1684 = vpack.c.b16 %v1626, %v1625
    %v1685 = vpack.c.b16 %v1628, %v1627
    %v1686 = vpack.c.b16 %v1630, %v1629
    %v1687 = vpack.c.b16 %v1632, %v1631
    %v1688 = vpack.c.b16 %v1634, %v1633
    %v1689 = vpack.c.b16 %v1636, %v1635
    %v1690 = vpack.c.b16 %v1638, %v1637
    %v1691 = vpack.c.b16 %v1640, %v1639
    %v1692 = vpack.c.b16 %v1642, %v1641
    %v1693 = vpack.c.b16 %v1644, %v1643
    %v1694 = vpack.c.b16 %v1646, %v1645
    %v1695 = vpack.c.b16 %v1648, %v1647
    %v1696 = vpack.c.b16 %v1650, %v1649
    %v1697 = vpack.c.b16 %v1652, %v1651
    %v1698 = vpack.c.b16 %v1654, %v1653
    %v1699 = vpack.c.b16 %v1656, %v1655
    %v1700 = vpack.c.b16 %v1658, %v1657
    %v1701 = vpack.c.b16 %v1660, %v1659
    %v1702 = vpack.c.b16 %v1662, %v1661
    %v1703 = vpack.c.b16 %v1664, %v1663
    %v1704 = vpack.c.b16 %v1666, %v1665
    %v1705 = vpack.c.b16 %v1668, %v1667
    %v1706 = vpack.c.b16 %v1670, %v1669
    %v1707 = vpack.c.b16 %v1672, %v1671
    %v1708 = vpack.c.b16 %v1674, %v1673
    %v1709 = vpack.c.b16 %v1676, %v1675
    %v1710 = vpack.c.b16 %v1678, %v1677
    %1743 = vmatprep.subr.bf16.mxu0 0
    %1744 = vmatpush1.bf16.msra.mxu0 %v1679
    %1745 = vmatprep.subr.bf16.mxu0 0
    %1746 = vmatpush1.bf16.msra.mxu0 %v1680
    %1747 = vmatprep.subr.bf16.mxu0 0
    %1748 = vmatpush1.bf16.msra.mxu0 %v1681
    %1749 = vmatprep.subr.bf16.mxu0 0
    %1750 = vmatpush1.bf16.msra.mxu0 %v1682
    %1751 = vmatprep.subr.bf16.mxu0 0
    %1752 = vmatpush1.bf16.msra.mxu0 %v1683
    %1753 = vmatprep.subr.bf16.mxu0 0
    %1754 = vmatpush1.bf16.msra.mxu0 %v1684
    %1755 = vmatprep.subr.bf16.mxu0 0
    %1756 = vmatpush1.bf16.msra.mxu0 %v1685
    %1757 = vmatprep.subr.bf16.mxu0 0
    %1758 = vmatpush1.bf16.msra.mxu0 %v1686
    %1759 = vmatprep.subr.bf16.mxu0 0
    %1760 = vmatpush1.bf16.msra.mxu0 %v1687
    %1761 = vmatprep.subr.bf16.mxu0 0
    %1762 = vmatpush1.bf16.msra.mxu0 %v1688
    %1763 = vmatprep.subr.bf16.mxu0 0
    %1764 = vmatpush1.bf16.msra.mxu0 %v1689
    %1765 = vmatprep.subr.bf16.mxu0 0
    %1766 = vmatpush1.bf16.msra.mxu0 %v1690
    %1767 = vmatprep.subr.bf16.mxu0 0
    %1768 = vmatpush1.bf16.msra.mxu0 %v1691
    %1769 = vmatprep.subr.bf16.mxu0 0
    %1770 = vmatpush1.bf16.msra.mxu0 %v1692
    %1771 = vmatprep.subr.bf16.mxu0 0
    %1772 = vmatpush1.bf16.msra.mxu0 %v1693
    %1773 = vmatprep.subr.bf16.mxu0 0
    %1774 = vmatpush1.bf16.msra.mxu0 %v1694
    %1775 = vmatprep.mubr.bf16.mxu0 %v1542
    %1776 = vmatmul.mubr.bf16.gmra.mrb[0].mxu0 %v1541
    %v1777 = vpop.f32.mrb[0].mxu0
    %v1778 = vadd.f32 %v1549, %v1777
    %v1779 = vpop.f32.mrb[0].mxu0
    %v1780 = vpop.f32.mrb[0].mxu0
    %v1781 = vadd.f32 %v1549, %v1780
    %v1782 = vpop.f32.mrb[0].mxu0
    %1783 = vdwg.mxu0
    %1784 = vmatprep.subr.bf16.mxu0 0
    %1785 = vmatpush1.bf16.msra.mxu0 %v1695
    %1786 = vmatprep.subr.bf16.mxu0 0
    %1787 = vmatpush1.bf16.msra.mxu0 %v1696
    %1788 = vmatprep.subr.bf16.mxu0 0
    %1789 = vmatpush1.bf16.msra.mxu0 %v1697
    %1790 = vmatprep.subr.bf16.mxu0 0
    %1791 = vmatpush1.bf16.msra.mxu0 %v1698
    %1792 = vmatprep.subr.bf16.mxu0 0
    %1793 = vmatpush1.bf16.msra.mxu0 %v1699
    %1794 = vmatprep.subr.bf16.mxu0 0
    %1795 = vmatpush1.bf16.msra.mxu0 %v1700
    %1796 = vmatprep.subr.bf16.mxu0 0
    %1797 = vmatpush1.bf16.msra.mxu0 %v1701
    %1798 = vmatprep.subr.bf16.mxu0 0
    %1799 = vmatpush1.bf16.msra.mxu0 %v1702
    %1800 = vmatprep.subr.bf16.mxu0 0
    %1801 = vmatpush1.bf16.msra.mxu0 %v1703
    %1802 = vmatprep.subr.bf16.mxu0 0
    %1803 = vmatpush1.bf16.msra.mxu0 %v1704
    %1804 = vmatprep.subr.bf16.mxu0 0
    %1805 = vmatpush1.bf16.msra.mxu0 %v1705
    %1806 = vmatprep.subr.bf16.mxu0 0
    %1807 = vmatpush1.bf16.msra.mxu0 %v1706
    %1808 = vmatprep.subr.bf16.mxu0 0
    %1809 = vmatpush1.bf16.msra.mxu0 %v1707
    %1810 = vmatprep.subr.bf16.mxu0 0
    %1811 = vmatpush1.bf16.msra.mxu0 %v1708
    %1812 = vmatprep.subr.bf16.mxu0 0
    %1813 = vmatpush1.bf16.msra.mxu0 %v1709
    %1814 = vmatprep.subr.bf16.mxu0 0
    %1815 = vmatpush1.bf16.msra.mxu0 %v1710
    %1816 = vmatprep.mubr.bf16.mxu0 %v1544
    %1817 = vmatmul.mubr.bf16.gmra.mrb[0].mxu0 %v1543
    %v1818 = vpop.f32.mrb[0].mxu0
    %v1819 = vadd.f32 %v1778, %v1818
    %v1820 = vpop.f32.mrb[0].mxu0
    %v1821 = vpop.f32.mrb[0].mxu0
    %v1822 = vadd.f32 %v1781, %v1821
    %v1823 = vpop.f32.mrb[0].mxu0
    %1824 = vdwg.mxu0
    %v1825 = vadd.f32 %v1169, %v1819
    %v1826 = vadd.f32 %v1170, %v1822
    %1827 = vst [vmem:[#allocation14] sm:$0xff] %v1825
    %1828 = vst [vmem:[#allocation14 + $0x8] sm:$0xff] %v1826
    %s1829 = scalar_lea.vmem [#allocation2], 16
    %v1830 = vld [vmem:[%s1829] sm:$0xff]
    %v1831 = vld [vmem:[%s1829 + $0x8] sm:$0xff]
    %s1832 = scalar_lea.vmem [#allocation5], 16
    %v1833 = vld [vmem:[%s1832] sm:$0xff]
    %v1834 = vld [vmem:[%s1832 + $0x8] sm:$0xff]
    %1835 = vadd.xlane.f32.xlu0 %v1830
    %v1836 = vpop.xlane.xlu0 %1835
    %1837 = vadd.xlane.f32.xlu0 %v1831
    %v1838 = vpop.xlane.xlu0 %1837
    %v1839 = vmul.f32 %v1836, %v302
    %v1840 = vmul.f32 %v1838, %v302
    %v1841 = vsub.f32 %v1830, %v1839
    %v1842 = vsub.f32 %v1831, %v1840
    %v1843 = vmul.f32 %v1841, %v1841
    %v1844 = vmul.f32 %v1842, %v1842
    %1845 = vadd.xlane.f32.xlu0 %v1843
    %v1846 = vpop.xlane.xlu0 %1845
    %1847 = vadd.xlane.f32.xlu0 %v1844
    %v1848 = vpop.xlane.xlu0 %1847
    %v1849 = vmul.f32 %v1846, %v302
    %v1850 = vmul.f32 %v1848, %v302
    %v1851 = vadd.f32 %v1849, 1e-05
    %v1852 = vadd.f32 %v1850, 1e-05
    %v1853 = vrsqrt.pop %v1851
    %v1854 = vrsqrt.pop %v1852
    %v1855 = vmul.f32 %v1841, %v1853
    %v1856 = vmul.f32 %v1842, %v1854
    %v1857 = vmul.f32 %v1855, %v325
    %v1858 = vmul.f32 %v1856, %v325
    %v1859 = vadd.f32 %v1857, %v333
    %v1860 = vadd.f32 %v1858, %v333
    %v1861 = vpack.c.bf16 %v1860, %v1859
    %1862 = vmatprep.subr.bf16.mxu0 %v435
    %1863 = vmatpush1.bf16.msra.mxu0 %v434
    %1864 = vmatprep.subr.bf16.mxu0 %v438
    %1865 = vmatpush1.bf16.msra.mxu0 %v437
    %1866 = vmatprep.subr.bf16.mxu0 %v441
    %1867 = vmatpush1.bf16.msra.mxu0 %v440
    %1868 = vmatprep.subr.bf16.mxu0 %v444
    %1869 = vmatpush1.bf16.msra.mxu0 %v443
    %1870 = vmatprep.subr.bf16.mxu0 %v447
    %1871 = vmatpush1.bf16.msra.mxu0 %v446
    %1872 = vmatprep.subr.bf16.mxu0 %v450
    %1873 = vmatpush1.bf16.msra.mxu0 %v449
    %1874 = vmatprep.subr.bf16.mxu0 %v453
    %1875 = vmatpush1.bf16.msra.mxu0 %v452
    %1876 = vmatprep.subr.bf16.mxu0 %v456
    %1877 = vmatpush1.bf16.msra.mxu0 %v455
    %1878 = vmatprep.subr.bf16.mxu0 0
    %1879 = vmatpush1.bf16.msra.mxu0 0
    %1880 = vmatprep.subr.bf16.mxu0 0
    %1881 = vmatpush1.bf16.msra.mxu0 0
    %1882 = vmatprep.subr.bf16.mxu0 0
    %1883 = vmatpush1.bf16.msra.mxu0 0
    %1884 = vmatprep.subr.bf16.mxu0 0
    %1885 = vmatpush1.bf16.msra.mxu0 0
    %1886 = vmatprep.subr.bf16.mxu0 0
    %1887 = vmatpush1.bf16.msra.mxu0 0
    %1888 = vmatprep.subr.bf16.mxu0 0
    %1889 = vmatpush1.bf16.msra.mxu0 0
    %1890 = vmatprep.subr.bf16.mxu0 0
    %1891 = vmatpush1.bf16.msra.mxu0 0
    %1892 = vmatprep.subr.bf16.mxu0 0
    %1893 = vmatpush1.bf16.msra.mxu0 0
    %1894 = vmatprep.mubr.bf16.mxu0 0
    %1895 = vmatmul.mubr.bf16.gmra.mrb[0].mxu0 %v1861
    %v1896 = vpop.f32.mrb[0].mxu0
    %v1897 = vadd.f32 %v342, %v1896
    %v1898 = vpop.f32.mrb[0].mxu0
    %v1899 = vadd.f32 %v346, %v1898
    %v1900 = vpop.f32.mrb[0].mxu0
    %v1901 = vadd.f32 %v342, %v1900
    %v1902 = vpop.f32.mrb[0].mxu0
    %v1903 = vadd.f32 %v346, %v1902
    %1904 = vdwg.mxu0
    %1905 = vmatprep.subr.bf16.mxu0 0
    %1906 = vmatpush1.bf16.msra.mxu0 %v436
    %1907 = vmatprep.subr.bf16.mxu0 0
    %1908 = vmatpush1.bf16.msra.mxu0 %v439
    %1909 = vmatprep.subr.bf16.mxu0 0
    %1910 = vmatpush1.bf16.msra.mxu0 %v442
    %1911 = vmatprep.subr.bf16.mxu0 0
    %1912 = vmatpush1.bf16.msra.mxu0 %v445
    %1913 = vmatprep.subr.bf16.mxu0 0
    %1914 = vmatpush1.bf16.msra.mxu0 %v448
    %1915 = vmatprep.subr.bf16.mxu0 0
    %1916 = vmatpush1.bf16.msra.mxu0 %v451
    %1917 = vmatprep.subr.bf16.mxu0 0
    %1918 = vmatpush1.bf16.msra.mxu0 %v454
    %1919 = vmatprep.subr.bf16.mxu0 0
    %1920 = vmatpush1.bf16.msra.mxu0 %v457
    %1921 = vmatprep.subr.bf16.mxu0 0
    %1922 = vmatpush1.bf16.msra.mxu0 0
    %1923 = vmatprep.subr.bf16.mxu0 0
    %1924 = vmatpush1.bf16.msra.mxu0 0
    %1925 = vmatprep.subr.bf16.mxu0 0
    %1926 = vmatpush1.bf16.msra.mxu0 0
    %1927 = vmatprep.subr.bf16.mxu0 0
    %1928 = vmatpush1.bf16.msra.mxu0 0
    %1929 = vmatprep.subr.bf16.mxu0 0
    %1930 = vmatpush1.bf16.msra.mxu0 0
    %1931 = vmatprep.subr.bf16.mxu0 0
    %1932 = vmatpush1.bf16.msra.mxu0 0
    %1933 = vmatprep.subr.bf16.mxu0 0
    %1934 = vmatpush1.bf16.msra.mxu0 0
    %1935 = vmatprep.subr.bf16.mxu0 0
    %1936 = vmatpush1.bf16.msra.mxu0 0
    %1937 = vmatprep.mubr.bf16.mxu0 0
    %1938 = vmatmul.mubr.bf16.gmra.mrb[0].mxu0 %v1861
    %v1939 = vpop.f32.mrb[0].mxu0
    %v1940 = vadd.f32 %v350, %v1939
    %v1941 = vpop.f32.mrb[0].mxu0
    %v1942 = vpop.f32.mrb[0].mxu0
    %v1943 = vadd.f32 %v350, %v1942
    %v1944 = vpop.f32.mrb[0].mxu0
    %1945 = vdwg.mxu0
    %v1946 = vpack.c.bf16 %v1901, %v1897
    %v1947 = vpack.c.bf16 %v1903, %v1899
    %v1948 = vpack.c.bf16 %v1943, %v1940
    %v1950 = vsel %vm569, %v1946, 0
    %v1953 = vsel %vm569, %v1947, 0
    %1955 = vmatprep.subr.bf16.mxu0 0
    %1956 = vmatpush1.bf16.xpose.msra.mxu0 %v1953
    %1957 = vmatprep.subr.bf16.mxu0 0
    %1958 = vmatpush1.bf16.xpose.msra.mxu0 0
    %1959 = vmatprep.subr.bf16.mxu0 0
    %1960 = vmatpush1.bf16.xpose.msra.mxu0 0
    %1961 = vmatprep.subr.bf16.mxu0 0
    %1962 = vmatpush1.bf16.xpose.msra.mxu0 0
    %1963 = vmatprep.subr.bf16.mxu0 0
    %1964 = vmatpush1.bf16.xpose.msra.mxu0 0
    %1965 = vmatprep.subr.bf16.mxu0 0
    %1966 = vmatpush1.bf16.xpose.msra.mxu0 0
    %1967 = vmatprep.subr.bf16.mxu0 0
    %1968 = vmatpush1.bf16.xpose.msra.mxu0 0
    %1969 = vmatprep.subr.bf16.mxu0 0
    %1970 = vmatpush1.bf16.xpose.msra.mxu0 0
    %1971 = vmatprep.subr.bf16.mxu0 0
    %1972 = vmatpush1.bf16.xpose.msra.mxu0 0
    %1973 = vmatprep.subr.bf16.mxu0 0
    %1974 = vmatpush1.bf16.xpose.msra.mxu0 0
    %1975 = vmatprep.subr.bf16.mxu0 0
    %1976 = vmatpush1.bf16.xpose.msra.mxu0 0
    %1977 = vmatprep.subr.bf16.mxu0 0
    %1978 = vmatpush1.bf16.xpose.msra.mxu0 0
    %1979 = vmatprep.subr.bf16.mxu0 0
    %1980 = vmatpush1.bf16.xpose.msra.mxu0 0
    %1981 = vmatprep.subr.bf16.mxu0 0
    %1982 = vmatpush1.bf16.xpose.msra.mxu0 0
    %1983 = vmatprep.subr.bf16.mxu0 0
    %1984 = vmatpush1.bf16.xpose.msra.mxu0 0
    %1985 = vmatprep.subr.bf16.mxu0 0
    %1986 = vmatpush1.bf16.xpose.msra.mxu0 0
    %1987 = vmatprep.mubr.bf16.mxu0 0
    %1988 = vmatmul.mubr.bf16.gmra.mrb[0].mxu0 %v1950
    %v1989 = vpop.f32.mrb[0].mxu0
    %v1990 = vadd.f32 %v1833, %v1989
    %v1991 = vpop.f32.mrb[0].mxu0
    %v1992 = vpop.f32.mrb[0].mxu0
    %v1993 = vadd.f32 %v1834, %v1992
    %v1994 = vpop.f32.mrb[0].mxu0
    %1995 = vdwg.mxu0
    %v1996 = vsel %vm617, %v1990, -inf
    %1997 = vmax.xlane.f32.xlu0 %v1996
    %v1998 = vpop.xlane.xlu0 %1997
    %v1999 = vsel %vm617, %v1993, -inf
    %2000 = vmax.xlane.f32.xlu0 %v1999
    %v2001 = vpop.xlane.xlu0 %2000
    %v2002 = vsub.f32 %v1990, %v1998
    %v2003 = vsub.f32 %v1993, %v2001
    %v2004 = vmul.f32 %v2002, 1.442695
    %v2005 = vpow.pop %v2004
    %v2006 = vmul.f32 %v2003, 1.442695
    %v2007 = vpow.pop %v2006
    %v2008 = vsel %vm617, %v2005, 0.0
    %2009 = vadd.xlane.f32.xlu0 %v2008
    %v2010 = vpop.xlane.xlu0 %2009
    %v2011 = vsel %vm617, %v2007, 0.0
    %2012 = vadd.xlane.f32.xlu0 %v2011
    %v2013 = vpop.xlane.xlu0 %2012
    %v2014 = vpack.c.bf16 %v2007, %v2005
    %v2016 = vsel %vm617, %v2014, 0
    %2018 = vmatprep.subr.bf16.mxu0 0
    %2019 = vmatpush1.bf16.msra.mxu0 %v1948
    %2020 = vmatprep.subr.bf16.mxu0 0
    %2021 = vmatpush1.bf16.msra.mxu0 0
    %2022 = vmatprep.subr.bf16.mxu0 0
    %2023 = vmatpush1.bf16.msra.mxu0 0
    %2024 = vmatprep.subr.bf16.mxu0 0
    %2025 = vmatpush1.bf16.msra.mxu0 0
    %2026 = vmatprep.subr.bf16.mxu0 0
    %2027 = vmatpush1.bf16.msra.mxu0 0
    %2028 = vmatprep.subr.bf16.mxu0 0
    %2029 = vmatpush1.bf16.msra.mxu0 0
    %2030 = vmatprep.subr.bf16.mxu0 0
    %2031 = vmatpush1.bf16.msra.mxu0 0
    %2032 = vmatprep.subr.bf16.mxu0 0
    %2033 = vmatpush1.bf16.msra.mxu0 0
    %2034 = vmatprep.subr.bf16.mxu0 0
    %2035 = vmatpush1.bf16.msra.mxu0 0
    %2036 = vmatprep.subr.bf16.mxu0 0
    %2037 = vmatpush1.bf16.msra.mxu0 0
    %2038 = vmatprep.subr.bf16.mxu0 0
    %2039 = vmatpush1.bf16.msra.mxu0 0
    %2040 = vmatprep.subr.bf16.mxu0 0
    %2041 = vmatpush1.bf16.msra.mxu0 0
    %2042 = vmatprep.subr.bf16.mxu0 0
    %2043 = vmatpush1.bf16.msra.mxu0 0
    %2044 = vmatprep.subr.bf16.mxu0 0
    %2045 = vmatpush1.bf16.msra.mxu0 0
    %2046 = vmatprep.subr.bf16.mxu0 0
    %2047 = vmatpush1.bf16.msra.mxu0 0
    %2048 = vmatprep.subr.bf16.mxu0 0
    %2049 = vmatpush1.bf16.msra.mxu0 0
    %2050 = vmatprep.mubr.bf16.mxu0 0
    %2051 = vmatmul.mubr.bf16.gmra.mrb[0].mxu0 %v2016
    %v2052 = vpop.f32.mrb[0].mxu0
    %v2053 = vadd.f32 0.0, %v2052
    %v2054 = vpop.f32.mrb[0].mxu0
    %v2055 = vpop.f32.mrb[0].mxu0
    %v2056 = vadd.f32 0.0, %v2055
    %v2057 = vpop.f32.mrb[0].mxu0
    %2058 = vdwg.mxu0
    %v2059 = vrcp.pop %v2010
    %v2060 = vrcp.pop %v2013
    %v2061 = vmul.f32 %v2053, %v2059
    %v2062 = vmul.f32 %v2056, %v2060
    %v2063 = vpack.c.bf16 %v2062, %v2061
    %2065 = vrot.lane.b32.xlu0 %v1946, 96
    %v2066 = vpop.permute.xlu0 %2065
    %2068 = vrot.lane.b32.xlu0 %v1947, 96
    %v2069 = vpop.permute.xlu0 %2068
    %v2071 = vsel %vm569, %v2066, 0
    %v2074 = vsel %vm569, %v2069, 0
    %2076 = vmatprep.subr.bf16.mxu0 0
    %2077 = vmatpush1.bf16.xpose.msra.mxu0 %v2074
    %2078 = vmatprep.subr.bf16.mxu0 0
    %2079 = vmatpush1.bf16.xpose.msra.mxu0 0
    %2080 = vmatprep.subr.bf16.mxu0 0
    %2081 = vmatpush1.bf16.xpose.msra.mxu0 0
    %2082 = vmatprep.subr.bf16.mxu0 0
    %2083 = vmatpush1.bf16.xpose.msra.mxu0 0
    %2084 = vmatprep.subr.bf16.mxu0 0
    %2085 = vmatpush1.bf16.xpose.msra.mxu0 0
    %2086 = vmatprep.subr.bf16.mxu0 0
    %2087 = vmatpush1.bf16.xpose.msra.mxu0 0
    %2088 = vmatprep.subr.bf16.mxu0 0
    %2089 = vmatpush1.bf16.xpose.msra.mxu0 0
    %2090 = vmatprep.subr.bf16.mxu0 0
    %2091 = vmatpush1.bf16.xpose.msra.mxu0 0
    %2092 = vmatprep.subr.bf16.mxu0 0
    %2093 = vmatpush1.bf16.xpose.msra.mxu0 0
    %2094 = vmatprep.subr.bf16.mxu0 0
    %2095 = vmatpush1.bf16.xpose.msra.mxu0 0
    %2096 = vmatprep.subr.bf16.mxu0 0
    %2097 = vmatpush1.bf16.xpose.msra.mxu0 0
    %2098 = vmatprep.subr.bf16.mxu0 0
    %2099 = vmatpush1.bf16.xpose.msra.mxu0 0
    %2100 = vmatprep.subr.bf16.mxu0 0
    %2101 = vmatpush1.bf16.xpose.msra.mxu0 0
    %2102 = vmatprep.subr.bf16.mxu0 0
    %2103 = vmatpush1.bf16.xpose.msra.mxu0 0
    %2104 = vmatprep.subr.bf16.mxu0 0
    %2105 = vmatpush1.bf16.xpose.msra.mxu0 0
    %2106 = vmatprep.subr.bf16.mxu0 0
    %2107 = vmatpush1.bf16.xpose.msra.mxu0 0
    %2108 = vmatprep.mubr.bf16.mxu0 0
    %2109 = vmatmul.mubr.bf16.gmra.mrb[0].mxu0 %v2071
    %v2110 = vpop.f32.mrb[0].mxu0
    %v2111 = vadd.f32 %v1833, %v2110
    %v2112 = vpop.f32.mrb[0].mxu0
    %v2113 = vpop.f32.mrb[0].mxu0
    %v2114 = vadd.f32 %v1834, %v2113
    %v2115 = vpop.f32.mrb[0].mxu0
    %2116 = vdwg.mxu0
    %v2117 = vsel %vm617, %v2111, -inf
    %2118 = vmax.xlane.f32.xlu0 %v2117
    %v2119 = vpop.xlane.xlu0 %2118
    %v2120 = vsel %vm617, %v2114, -inf
    %2121 = vmax.xlane.f32.xlu0 %v2120
    %v2122 = vpop.xlane.xlu0 %2121
    %v2123 = vsub.f32 %v2111, %v2119
    %v2124 = vsub.f32 %v2114, %v2122
    %v2125 = vmul.f32 %v2123, 1.442695
    %v2126 = vpow.pop %v2125
    %v2127 = vmul.f32 %v2124, 1.442695
    %v2128 = vpow.pop %v2127
    %v2129 = vsel %vm617, %v2126, 0.0
    %2130 = vadd.xlane.f32.xlu0 %v2129
    %v2131 = vpop.xlane.xlu0 %2130
    %v2132 = vsel %vm617, %v2128, 0.0
    %2133 = vadd.xlane.f32.xlu0 %v2132
    %v2134 = vpop.xlane.xlu0 %2133
    %v2135 = vpack.c.bf16 %v2128, %v2126
    %2137 = vrot.lane.b32.xlu0 %v1948, 96
    %v2138 = vpop.permute.xlu0 %2137
    %v2141 = vsel %vm617, %v2135, 0
    %2143 = vmatprep.subr.bf16.mxu0 0
    %2144 = vmatpush1.bf16.msra.mxu0 %v2138
    %2145 = vmatprep.subr.bf16.mxu0 0
    %2146 = vmatpush1.bf16.msra.mxu0 0
    %2147 = vmatprep.subr.bf16.mxu0 0
    %2148 = vmatpush1.bf16.msra.mxu0 0
    %2149 = vmatprep.subr.bf16.mxu0 0
    %2150 = vmatpush1.bf16.msra.mxu0 0
    %2151 = vmatprep.subr.bf16.mxu0 0
    %2152 = vmatpush1.bf16.msra.mxu0 0
    %2153 = vmatprep.subr.bf16.mxu0 0
    %2154 = vmatpush1.bf16.msra.mxu0 0
    %2155 = vmatprep.subr.bf16.mxu0 0
    %2156 = vmatpush1.bf16.msra.mxu0 0
    %2157 = vmatprep.subr.bf16.mxu0 0
    %2158 = vmatpush1.bf16.msra.mxu0 0
    %2159 = vmatprep.subr.bf16.mxu0 0
    %2160 = vmatpush1.bf16.msra.mxu0 0
    %2161 = vmatprep.subr.bf16.mxu0 0
    %2162 = vmatpush1.bf16.msra.mxu0 0
    %2163 = vmatprep.subr.bf16.mxu0 0
    %2164 = vmatpush1.bf16.msra.mxu0 0
    %2165 = vmatprep.subr.bf16.mxu0 0
    %2166 = vmatpush1.bf16.msra.mxu0 0
    %2167 = vmatprep.subr.bf16.mxu0 0
    %2168 = vmatpush1.bf16.msra.mxu0 0
    %2169 = vmatprep.subr.bf16.mxu0 0
    %2170 = vmatpush1.bf16.msra.mxu0 0
    %2171 = vmatprep.subr.bf16.mxu0 0
    %2172 = vmatpush1.bf16.msra.mxu0 0
    %2173 = vmatprep.subr.bf16.mxu0 0
    %2174 = vmatpush1.bf16.msra.mxu0 0
    %2175 = vmatprep.mubr.bf16.mxu0 0
    %2176 = vmatmul.mubr.bf16.gmra.mrb[0].mxu0 %v2141
    %v2177 = vpop.f32.mrb[0].mxu0
    %v2178 = vadd.f32 0.0, %v2177
    %v2179 = vpop.f32.mrb[0].mxu0
    %v2180 = vpop.f32.mrb[0].mxu0
    %v2181 = vadd.f32 0.0, %v2180
    %v2182 = vpop.f32.mrb[0].mxu0
    %2183 = vdwg.mxu0
    %v2184 = vrcp.pop %v2131
    %v2185 = vrcp.pop %v2134
    %v2186 = vmul.f32 %v2178, %v2184
    %v2187 = vmul.f32 %v2181, %v2185
    %v2188 = vpack.c.bf16 %v2187, %v2186
    %2189 = vrot.lane.b32.xlu0 %v1946, 64
    %v2190 = vpop.permute.xlu0 %2189
    %2191 = vrot.lane.b32.xlu0 %v1947, 64
    %v2192 = vpop.permute.xlu0 %2191
    %v2194 = vsel %vm569, %v2190, 0
    %v2197 = vsel %vm569, %v2192, 0
    %2199 = vmatprep.subr.bf16.mxu0 0
    %2200 = vmatpush1.bf16.xpose.msra.mxu0 %v2197
    %2201 = vmatprep.subr.bf16.mxu0 0
    %2202 = vmatpush1.bf16.xpose.msra.mxu0 0
    %2203 = vmatprep.subr.bf16.mxu0 0
    %2204 = vmatpush1.bf16.xpose.msra.mxu0 0
    %2205 = vmatprep.subr.bf16.mxu0 0
    %2206 = vmatpush1.bf16.xpose.msra.mxu0 0
    %2207 = vmatprep.subr.bf16.mxu0 0
    %2208 = vmatpush1.bf16.xpose.msra.mxu0 0
    %2209 = vmatprep.subr.bf16.mxu0 0
    %2210 = vmatpush1.bf16.xpose.msra.mxu0 0
    %2211 = vmatprep.subr.bf16.mxu0 0
    %2212 = vmatpush1.bf16.xpose.msra.mxu0 0
    %2213 = vmatprep.subr.bf16.mxu0 0
    %2214 = vmatpush1.bf16.xpose.msra.mxu0 0
    %2215 = vmatprep.subr.bf16.mxu0 0
    %2216 = vmatpush1.bf16.xpose.msra.mxu0 0
    %2217 = vmatprep.subr.bf16.mxu0 0
    %2218 = vmatpush1.bf16.xpose.msra.mxu0 0
    %2219 = vmatprep.subr.bf16.mxu0 0
    %2220 = vmatpush1.bf16.xpose.msra.mxu0 0
    %2221 = vmatprep.subr.bf16.mxu0 0
    %2222 = vmatpush1.bf16.xpose.msra.mxu0 0
    %2223 = vmatprep.subr.bf16.mxu0 0
    %2224 = vmatpush1.bf16.xpose.msra.mxu0 0
    %2225 = vmatprep.subr.bf16.mxu0 0
    %2226 = vmatpush1.bf16.xpose.msra.mxu0 0
    %2227 = vmatprep.subr.bf16.mxu0 0
    %2228 = vmatpush1.bf16.xpose.msra.mxu0 0
    %2229 = vmatprep.subr.bf16.mxu0 0
    %2230 = vmatpush1.bf16.xpose.msra.mxu0 0
    %2231 = vmatprep.mubr.bf16.mxu0 0
    %2232 = vmatmul.mubr.bf16.gmra.mrb[0].mxu0 %v2194
    %v2233 = vpop.f32.mrb[0].mxu0
    %v2234 = vadd.f32 %v1833, %v2233
    %v2235 = vpop.f32.mrb[0].mxu0
    %v2236 = vpop.f32.mrb[0].mxu0
    %v2237 = vadd.f32 %v1834, %v2236
    %v2238 = vpop.f32.mrb[0].mxu0
    %2239 = vdwg.mxu0
    %v2240 = vsel %vm617, %v2234, -inf
    %2241 = vmax.xlane.f32.xlu0 %v2240
    %v2242 = vpop.xlane.xlu0 %2241
    %v2243 = vsel %vm617, %v2237, -inf
    %2244 = vmax.xlane.f32.xlu0 %v2243
    %v2245 = vpop.xlane.xlu0 %2244
    %v2246 = vsub.f32 %v2234, %v2242
    %v2247 = vsub.f32 %v2237, %v2245
    %v2248 = vmul.f32 %v2246, 1.442695
    %v2249 = vpow.pop %v2248
    %v2250 = vmul.f32 %v2247, 1.442695
    %v2251 = vpow.pop %v2250
    %v2252 = vsel %vm617, %v2249, 0.0
    %2253 = vadd.xlane.f32.xlu0 %v2252
    %v2254 = vpop.xlane.xlu0 %2253
    %v2255 = vsel %vm617, %v2251, 0.0
    %2256 = vadd.xlane.f32.xlu0 %v2255
    %v2257 = vpop.xlane.xlu0 %2256
    %v2258 = vpack.c.bf16 %v2251, %v2249
    %2259 = vrot.lane.b32.xlu0 %v1948, 64
    %v2260 = vpop.permute.xlu0 %2259
    %v2263 = vsel %vm617, %v2258, 0
    %2265 = vmatprep.subr.bf16.mxu0 0
    %2266 = vmatpush1.bf16.msra.mxu0 %v2260
    %2267 = vmatprep.subr.bf16.mxu0 0
    %2268 = vmatpush1.bf16.msra.mxu0 0
    %2269 = vmatprep.subr.bf16.mxu0 0
    %2270 = vmatpush1.bf16.msra.mxu0 0
    %2271 = vmatprep.subr.bf16.mxu0 0
    %2272 = vmatpush1.bf16.msra.mxu0 0
    %2273 = vmatprep.subr.bf16.mxu0 0
    %2274 = vmatpush1.bf16.msra.mxu0 0
    %2275 = vmatprep.subr.bf16.mxu0 0
    %2276 = vmatpush1.bf16.msra.mxu0 0
    %2277 = vmatprep.subr.bf16.mxu0 0
    %2278 = vmatpush1.bf16.msra.mxu0 0
    %2279 = vmatprep.subr.bf16.mxu0 0
    %2280 = vmatpush1.bf16.msra.mxu0 0
    %2281 = vmatprep.subr.bf16.mxu0 0
    %2282 = vmatpush1.bf16.msra.mxu0 0
    %2283 = vmatprep.subr.bf16.mxu0 0
    %2284 = vmatpush1.bf16.msra.mxu0 0
    %2285 = vmatprep.subr.bf16.mxu0 0
    %2286 = vmatpush1.bf16.msra.mxu0 0
    %2287 = vmatprep.subr.bf16.mxu0 0
    %2288 = vmatpush1.bf16.msra.mxu0 0
    %2289 = vmatprep.subr.bf16.mxu0 0
    %2290 = vmatpush1.bf16.msra.mxu0 0
    %2291 = vmatprep.subr.bf16.mxu0 0
    %2292 = vmatpush1.bf16.msra.mxu0 0
    %2293 = vmatprep.subr.bf16.mxu0 0
    %2294 = vmatpush1.bf16.msra.mxu0 0
    %2295 = vmatprep.subr.bf16.mxu0 0
    %2296 = vmatpush1.bf16.msra.mxu0 0
    %2297 = vmatprep.mubr.bf16.mxu0 0
    %2298 = vmatmul.mubr.bf16.gmra.mrb[0].mxu0 %v2263
    %v2299 = vpop.f32.mrb[0].mxu0
    %v2300 = vadd.f32 0.0, %v2299
    %v2301 = vpop.f32.mrb[0].mxu0
    %v2302 = vpop.f32.mrb[0].mxu0
    %v2303 = vadd.f32 0.0, %v2302
    %v2304 = vpop.f32.mrb[0].mxu0
    %2305 = vdwg.mxu0
    %v2306 = vrcp.pop %v2254
    %v2307 = vrcp.pop %v2257
    %v2308 = vmul.f32 %v2300, %v2306
    %v2309 = vmul.f32 %v2303, %v2307
    %v2310 = vpack.c.bf16 %v2309, %v2308
    %2311 = vrot.lane.b32.xlu0 %v1946, 32
    %v2312 = vpop.permute.xlu0 %2311
    %2313 = vrot.lane.b32.xlu0 %v1947, 32
    %v2314 = vpop.permute.xlu0 %2313
    %v2316 = vsel %vm569, %v2312, 0
    %v2319 = vsel %vm569, %v2314, 0
    %2321 = vmatprep.subr.bf16.mxu0 0
    %2322 = vmatpush1.bf16.xpose.msra.mxu0 %v2319
    %2323 = vmatprep.subr.bf16.mxu0 0
    %2324 = vmatpush1.bf16.xpose.msra.mxu0 0
    %2325 = vmatprep.subr.bf16.mxu0 0
    %2326 = vmatpush1.bf16.xpose.msra.mxu0 0
    %2327 = vmatprep.subr.bf16.mxu0 0
    %2328 = vmatpush1.bf16.xpose.msra.mxu0 0
    %2329 = vmatprep.subr.bf16.mxu0 0
    %2330 = vmatpush1.bf16.xpose.msra.mxu0 0
    %2331 = vmatprep.subr.bf16.mxu0 0
    %2332 = vmatpush1.bf16.xpose.msra.mxu0 0
    %2333 = vmatprep.subr.bf16.mxu0 0
    %2334 = vmatpush1.bf16.xpose.msra.mxu0 0
    %2335 = vmatprep.subr.bf16.mxu0 0
    %2336 = vmatpush1.bf16.xpose.msra.mxu0 0
    %2337 = vmatprep.subr.bf16.mxu0 0
    %2338 = vmatpush1.bf16.xpose.msra.mxu0 0
    %2339 = vmatprep.subr.bf16.mxu0 0
    %2340 = vmatpush1.bf16.xpose.msra.mxu0 0
    %2341 = vmatprep.subr.bf16.mxu0 0
    %2342 = vmatpush1.bf16.xpose.msra.mxu0 0
    %2343 = vmatprep.subr.bf16.mxu0 0
    %2344 = vmatpush1.bf16.xpose.msra.mxu0 0
    %2345 = vmatprep.subr.bf16.mxu0 0
    %2346 = vmatpush1.bf16.xpose.msra.mxu0 0
    %2347 = vmatprep.subr.bf16.mxu0 0
    %2348 = vmatpush1.bf16.xpose.msra.mxu0 0
    %2349 = vmatprep.subr.bf16.mxu0 0
    %2350 = vmatpush1.bf16.xpose.msra.mxu0 0
    %2351 = vmatprep.subr.bf16.mxu0 0
    %2352 = vmatpush1.bf16.xpose.msra.mxu0 0
    %2353 = vmatprep.mubr.bf16.mxu0 0
    %2354 = vmatmul.mubr.bf16.gmra.mrb[0].mxu0 %v2316
    %v2355 = vpop.f32.mrb[0].mxu0
    %v2356 = vadd.f32 %v1833, %v2355
    %v2357 = vpop.f32.mrb[0].mxu0
    %v2358 = vpop.f32.mrb[0].mxu0
    %v2359 = vadd.f32 %v1834, %v2358
    %v2360 = vpop.f32.mrb[0].mxu0
    %2361 = vdwg.mxu0
    %v2362 = vsel %vm617, %v2356, -inf
    %2363 = vmax.xlane.f32.xlu0 %v2362
    %v2364 = vpop.xlane.xlu0 %2363
    %v2365 = vsel %vm617, %v2359, -inf
    %2366 = vmax.xlane.f32.xlu0 %v2365
    %v2367 = vpop.xlane.xlu0 %2366
    %v2368 = vsub.f32 %v2356, %v2364
    %v2369 = vsub.f32 %v2359, %v2367
    %v2370 = vmul.f32 %v2368, 1.442695
    %v2371 = vpow.pop %v2370
    %v2372 = vmul.f32 %v2369, 1.442695
    %v2373 = vpow.pop %v2372
    %v2374 = vsel %vm617, %v2371, 0.0
    %2375 = vadd.xlane.f32.xlu0 %v2374
    %v2376 = vpop.xlane.xlu0 %2375
    %v2377 = vsel %vm617, %v2373, 0.0
    %2378 = vadd.xlane.f32.xlu0 %v2377
    %v2379 = vpop.xlane.xlu0 %2378
    %v2380 = vpack.c.bf16 %v2373, %v2371
    %2381 = vrot.lane.b32.xlu0 %v1948, 32
    %v2382 = vpop.permute.xlu0 %2381
    %v2385 = vsel %vm617, %v2380, 0
    %2387 = vmatprep.subr.bf16.mxu0 0
    %2388 = vmatpush1.bf16.msra.mxu0 %v2382
    %2389 = vmatprep.subr.bf16.mxu0 0
    %2390 = vmatpush1.bf16.msra.mxu0 0
    %2391 = vmatprep.subr.bf16.mxu0 0
    %2392 = vmatpush1.bf16.msra.mxu0 0
    %2393 = vmatprep.subr.bf16.mxu0 0
    %2394 = vmatpush1.bf16.msra.mxu0 0
    %2395 = vmatprep.subr.bf16.mxu0 0
    %2396 = vmatpush1.bf16.msra.mxu0 0
    %2397 = vmatprep.subr.bf16.mxu0 0
    %2398 = vmatpush1.bf16.msra.mxu0 0
    %2399 = vmatprep.subr.bf16.mxu0 0
    %2400 = vmatpush1.bf16.msra.mxu0 0
    %2401 = vmatprep.subr.bf16.mxu0 0
    %2402 = vmatpush1.bf16.msra.mxu0 0
    %2403 = vmatprep.subr.bf16.mxu0 0
    %2404 = vmatpush1.bf16.msra.mxu0 0
    %2405 = vmatprep.subr.bf16.mxu0 0
    %2406 = vmatpush1.bf16.msra.mxu0 0
    %2407 = vmatprep.subr.bf16.mxu0 0
    %2408 = vmatpush1.bf16.msra.mxu0 0
    %2409 = vmatprep.subr.bf16.mxu0 0
    %2410 = vmatpush1.bf16.msra.mxu0 0
    %2411 = vmatprep.subr.bf16.mxu0 0
    %2412 = vmatpush1.bf16.msra.mxu0 0
    %2413 = vmatprep.subr.bf16.mxu0 0
    %2414 = vmatpush1.bf16.msra.mxu0 0
    %2415 = vmatprep.subr.bf16.mxu0 0
    %2416 = vmatpush1.bf16.msra.mxu0 0
    %2417 = vmatprep.subr.bf16.mxu0 0
    %2418 = vmatpush1.bf16.msra.mxu0 0
    %2419 = vmatprep.mubr.bf16.mxu0 0
    %2420 = vmatmul.mubr.bf16.gmra.mrb[0].mxu0 %v2385
    %v2421 = vpop.f32.mrb[0].mxu0
    %v2422 = vadd.f32 0.0, %v2421
    %v2423 = vpop.f32.mrb[0].mxu0
    %v2424 = vpop.f32.mrb[0].mxu0
    %v2425 = vadd.f32 0.0, %v2424
    %v2426 = vpop.f32.mrb[0].mxu0
    %2427 = vdwg.mxu0
    %v2428 = vrcp.pop %v2376
    %v2429 = vrcp.pop %v2379
    %v2430 = vmul.f32 %v2422, %v2428
    %v2431 = vmul.f32 %v2425, %v2429
    %v2432 = vpack.c.bf16 %v2431, %v2430
    %2434 = vrot.lane.b32.xlu0 %v2188, 32
    %v2435 = vpop.permute.xlu0 %2434
    %2437 = vrot.lane.b32.xlu0 %v2310, 64
    %v2438 = vpop.permute.xlu0 %2437
    %2440 = vrot.lane.b32.xlu0 %v2432, 96
    %v2441 = vpop.permute.xlu0 %2440
    %v2444 = vsel %vm569, %v2063, %v2435
    %v2446 = vsel %vm1067, %v2444, %v2438
    %v2448 = vsel %vm1070, %v2446, %v2441
    %2450 = vmatprep.subr.bf16.mxu0 0
    %2451 = vmatpush1.bf16.msra.mxu0 %v1112
    %2452 = vmatprep.subr.bf16.mxu0 0
    %2453 = vmatpush1.bf16.msra.mxu0 %v1113
    %2454 = vmatprep.subr.bf16.mxu0 0
    %2455 = vmatpush1.bf16.msra.mxu0 %v1114
    %2456 = vmatprep.subr.bf16.mxu0 0
    %2457 = vmatpush1.bf16.msra.mxu0 %v1115
    %2458 = vmatprep.subr.bf16.mxu0 0
    %2459 = vmatpush1.bf16.msra.mxu0 %v1116
    %2460 = vmatprep.subr.bf16.mxu0 0
    %2461 = vmatpush1.bf16.msra.mxu0 %v1117
    %2462 = vmatprep.subr.bf16.mxu0 0
    %2463 = vmatpush1.bf16.msra.mxu0 %v1118
    %2464 = vmatprep.subr.bf16.mxu0 0
    %2465 = vmatpush1.bf16.msra.mxu0 %v1119
    %2466 = vmatprep.subr.bf16.mxu0 0
    %2467 = vmatpush1.bf16.msra.mxu0 0
    %2468 = vmatprep.subr.bf16.mxu0 0
    %2469 = vmatpush1.bf16.msra.mxu0 0
    %2470 = vmatprep.subr.bf16.mxu0 0
    %2471 = vmatpush1.bf16.msra.mxu0 0
    %2472 = vmatprep.subr.bf16.mxu0 0
    %2473 = vmatpush1.bf16.msra.mxu0 0
    %2474 = vmatprep.subr.bf16.mxu0 0
    %2475 = vmatpush1.bf16.msra.mxu0 0
    %2476 = vmatprep.subr.bf16.mxu0 0
    %2477 = vmatpush1.bf16.msra.mxu0 0
    %2478 = vmatprep.subr.bf16.mxu0 0
    %2479 = vmatpush1.bf16.msra.mxu0 0
    %2480 = vmatprep.subr.bf16.mxu0 0
    %2481 = vmatpush1.bf16.msra.mxu0 0
    %2482 = vmatprep.mubr.bf16.mxu0 0
    %2483 = vmatmul.mubr.bf16.gmra.mrb[0].mxu0 %v2448
    %v2484 = vpop.f32.mrb[0].mxu0
    %v2485 = vadd.f32 %v1078, %v2484
    %v2486 = vpop.f32.mrb[0].mxu0
    %v2487 = vpop.f32.mrb[0].mxu0
    %v2488 = vadd.f32 %v1078, %v2487
    %v2489 = vpop.f32.mrb[0].mxu0
    %2490 = vdwg.mxu0
    %v2491 = vadd.f32 %v1830, %v2485
    %v2492 = vadd.f32 %v1831, %v2488
    %2493 = vadd.xlane.f32.xlu0 %v2491
    %v2494 = vpop.xlane.xlu0 %2493
    %2495 = vadd.xlane.f32.xlu0 %v2492
    %v2496 = vpop.xlane.xlu0 %2495
    %v2497 = vmul.f32 %v2494, %v302
    %v2498 = vmul.f32 %v2496, %v302
    %v2499 = vsub.f32 %v2491, %v2497
    %v2500 = vsub.f32 %v2492, %v2498
    %v2501 = vmul.f32 %v2499, %v2499
    %v2502 = vmul.f32 %v2500, %v2500
    %2503 = vadd.xlane.f32.xlu0 %v2501
    %v2504 = vpop.xlane.xlu0 %2503
    %2505 = vadd.xlane.f32.xlu0 %v2502
    %v2506 = vpop.xlane.xlu0 %2505
    %v2507 = vmul.f32 %v2504, %v302
    %v2508 = vmul.f32 %v2506, %v302
    %v2509 = vadd.f32 %v2507, 1e-05
    %v2510 = vadd.f32 %v2508, 1e-05
    %v2511 = vrsqrt.pop %v2509
    %v2512 = vrsqrt.pop %v2510
    %v2513 = vmul.f32 %v2499, %v2511
    %v2514 = vmul.f32 %v2500, %v2512
    %v2515 = vmul.f32 %v2513, %v1197
    %v2516 = vmul.f32 %v2514, %v1197
    %v2517 = vadd.f32 %v2515, %v1205
    %v2518 = vadd.f32 %v2516, %v1205
    %v2519 = vpack.c.bf16 %v2518, %v2517
    %2520 = vmatprep.subr.bf16.mxu0 %v1328
    %2521 = vmatpush1.bf16.msra.mxu0 %v1327
    %2522 = vmatprep.subr.bf16.mxu0 %v1332
    %2523 = vmatpush1.bf16.msra.mxu0 %v1331
    %2524 = vmatprep.subr.bf16.mxu0 %v1336
    %2525 = vmatpush1.bf16.msra.mxu0 %v1335
    %2526 = vmatprep.subr.bf16.mxu0 %v1340
    %2527 = vmatpush1.bf16.msra.mxu0 %v1339
    %2528 = vmatprep.subr.bf16.mxu0 %v1344
    %2529 = vmatpush1.bf16.msra.mxu0 %v1343
    %2530 = vmatprep.subr.bf16.mxu0 %v1348
    %2531 = vmatpush1.bf16.msra.mxu0 %v1347
    %2532 = vmatprep.subr.bf16.mxu0 %v1352
    %2533 = vmatpush1.bf16.msra.mxu0 %v1351
    %2534 = vmatprep.subr.bf16.mxu0 %v1356
    %2535 = vmatpush1.bf16.msra.mxu0 %v1355
    %2536 = vmatprep.subr.bf16.mxu0 0
    %2537 = vmatpush1.bf16.msra.mxu0 0
    %2538 = vmatprep.subr.bf16.mxu0 0
    %2539 = vmatpush1.bf16.msra.mxu0 0
    %2540 = vmatprep.subr.bf16.mxu0 0
    %2541 = vmatpush1.bf16.msra.mxu0 0
    %2542 = vmatprep.subr.bf16.mxu0 0
    %2543 = vmatpush1.bf16.msra.mxu0 0
    %2544 = vmatprep.subr.bf16.mxu0 0
    %2545 = vmatpush1.bf16.msra.mxu0 0
    %2546 = vmatprep.subr.bf16.mxu0 0
    %2547 = vmatpush1.bf16.msra.mxu0 0
    %2548 = vmatprep.subr.bf16.mxu0 0
    %2549 = vmatpush1.bf16.msra.mxu0 0
    %2550 = vmatprep.subr.bf16.mxu0 0
    %2551 = vmatpush1.bf16.msra.mxu0 0
    %2552 = vmatprep.mubr.bf16.mxu0 0
    %2553 = vmatmul.mubr.bf16.gmra.mrb[0].mxu0 %v2519
    %v2554 = vpop.f32.mrb[0].mxu0
    %v2555 = vadd.f32 %v1214, %v2554
    %v2556 = vpop.f32.mrb[0].mxu0
    %v2557 = vadd.f32 %v1218, %v2556
    %v2558 = vpop.f32.mrb[0].mxu0
    %v2559 = vadd.f32 %v1214, %v2558
    %v2560 = vpop.f32.mrb[0].mxu0
    %v2561 = vadd.f32 %v1218, %v2560
    %2562 = vdwg.mxu0
    %2563 = vmatprep.subr.bf16.mxu0 %v1330
    %2564 = vmatpush1.bf16.msra.mxu0 %v1329
    %2565 = vmatprep.subr.bf16.mxu0 %v1334
    %2566 = vmatpush1.bf16.msra.mxu0 %v1333
    %2567 = vmatprep.subr.bf16.mxu0 %v1338
    %2568 = vmatpush1.bf16.msra.mxu0 %v1337
    %2569 = vmatprep.subr.bf16.mxu0 %v1342
    %2570 = vmatpush1.bf16.msra.mxu0 %v1341
    %2571 = vmatprep.subr.bf16.mxu0 %v1346
    %2572 = vmatpush1.bf16.msra.mxu0 %v1345
    %2573 = vmatprep.subr.bf16.mxu0 %v1350
    %2574 = vmatpush1.bf16.msra.mxu0 %v1349
    %2575 = vmatprep.subr.bf16.mxu0 %v1354
    %2576 = vmatpush1.bf16.msra.mxu0 %v1353
    %2577 = vmatprep.subr.bf16.mxu0 %v1358
    %2578 = vmatpush1.bf16.msra.mxu0 %v1357
    %2579 = vmatprep.subr.bf16.mxu0 0
    %2580 = vmatpush1.bf16.msra.mxu0 0
    %2581 = vmatprep.subr.bf16.mxu0 0
    %2582 = vmatpush1.bf16.msra.mxu0 0
    %2583 = vmatprep.subr.bf16.mxu0 0
    %2584 = vmatpush1.bf16.msra.mxu0 0
    %2585 = vmatprep.subr.bf16.mxu0 0
    %2586 = vmatpush1.bf16.msra.mxu0 0
    %2587 = vmatprep.subr.bf16.mxu0 0
    %2588 = vmatpush1.bf16.msra.mxu0 0
    %2589 = vmatprep.subr.bf16.mxu0 0
    %2590 = vmatpush1.bf16.msra.mxu0 0
    %2591 = vmatprep.subr.bf16.mxu0 0
    %2592 = vmatpush1.bf16.msra.mxu0 0
    %2593 = vmatprep.subr.bf16.mxu0 0
    %2594 = vmatpush1.bf16.msra.mxu0 0
    %2595 = vmatprep.mubr.bf16.mxu0 0
    %2596 = vmatmul.mubr.bf16.gmra.mrb[0].mxu0 %v2519
    %v2597 = vpop.f32.mrb[0].mxu0
    %v2598 = vadd.f32 %v1222, %v2597
    %v2599 = vpop.f32.mrb[0].mxu0
    %v2600 = vadd.f32 %v1226, %v2599
    %v2601 = vpop.f32.mrb[0].mxu0
    %v2602 = vadd.f32 %v1222, %v2601
    %v2603 = vpop.f32.mrb[0].mxu0
    %v2604 = vadd.f32 %v1226, %v2603
    %2605 = vdwg.mxu0
    %v2606 = vmul.f32 %v2555, 1.702
    %v2607 = vmul.f32 %v2557, 1.702
    %v2608 = vmul.f32 %v2598, 1.702
    %v2609 = vmul.f32 %v2600, 1.702
    %v2610 = vmul.f32 %v2559, 1.702
    %v2611 = vmul.f32 %v2561, 1.702
    %v2612 = vmul.f32 %v2602, 1.702
    %v2613 = vmul.f32 %v2604, 1.702
    %v2614 = vxor.u32 %v2606, 2147483648
    %v2615 = vxor.u32 %v2607, 2147483648
    %v2616 = vxor.u32 %v2608, 2147483648
    %v2617 = vxor.u32 %v2609, 2147483648
    %v2618 = vxor.u32 %v2610, 2147483648
    %v2619 = vxor.u32 %v2611, 2147483648
    %v2620 = vxor.u32 %v2612, 2147483648
    %v2621 = vxor.u32 %v2613, 2147483648
    %v2622 = vmul.f32 %v2614, 1.442695
    %v2623 = vpow.pop %v2622
    %v2624 = vmul.f32 %v2615, 1.442695
    %v2625 = vpow.pop %v2624
    %v2626 = vmul.f32 %v2616, 1.442695
    %v2627 = vpow.pop %v2626
    %v2628 = vmul.f32 %v2617, 1.442695
    %v2629 = vpow.pop %v2628
    %v2630 = vmul.f32 %v2618, 1.442695
    %v2631 = vpow.pop %v2630
    %v2632 = vmul.f32 %v2619, 1.442695
    %v2633 = vpow.pop %v2632
    %v2634 = vmul.f32 %v2620, 1.442695
    %v2635 = vpow.pop %v2634
    %v2636 = vmul.f32 %v2621, 1.442695
    %v2637 = vpow.pop %v2636
    %v2638 = vadd.f32 %v2623, 1.0
    %v2639 = vadd.f32 %v2625, 1.0
    %v2640 = vadd.f32 %v2627, 1.0
    %v2641 = vadd.f32 %v2629, 1.0
    %v2642 = vadd.f32 %v2631, 1.0
    %v2643 = vadd.f32 %v2633, 1.0
    %v2644 = vadd.f32 %v2635, 1.0
    %v2645 = vadd.f32 %v2637, 1.0
    %v2646 = vrcp.pop %v2638
    %v2647 = vmul.f32 1.0, %v2646
    %v2648 = vrcp.pop %v2639
    %v2649 = vmul.f32 1.0, %v2648
    %v2650 = vrcp.pop %v2640
    %v2651 = vmul.f32 1.0, %v2650
    %v2652 = vrcp.pop %v2641
    %v2653 = vmul.f32 1.0, %v2652
    %v2654 = vrcp.pop %v2642
    %v2655 = vmul.f32 1.0, %v2654
    %v2656 = vrcp.pop %v2643
    %v2657 = vmul.f32 1.0, %v2656
    %v2658 = vrcp.pop %v2644
    %v2659 = vmul.f32 1.0, %v2658
    %v2660 = vrcp.pop %v2645
    %v2661 = vmul.f32 1.0, %v2660
    %v2662 = vmul.f32 %v2555, %v2647
    %v2663 = vmul.f32 %v2557, %v2649
    %v2664 = vmul.f32 %v2598, %v2651
    %v2665 = vmul.f32 %v2600, %v2653
    %v2666 = vmul.f32 %v2559, %v2655
    %v2667 = vmul.f32 %v2561, %v2657
    %v2668 = vmul.f32 %v2602, %v2659
    %v2669 = vmul.f32 %v2604, %v2661
    %v2670 = vpack.c.bf16 %v2666, %v2662
    %v2671 = vpack.c.bf16 %v2667, %v2663
    %v2672 = vpack.c.bf16 %v2668, %v2664
    %v2673 = vpack.c.bf16 %v2669, %v2665
    %2674 = vmatprep.subr.bf16.mxu0 0
    %2675 = vmatpush1.bf16.msra.mxu0 %v1679
    %2676 = vmatprep.subr.bf16.mxu0 0
    %2677 = vmatpush1.bf16.msra.mxu0 %v1680
    %2678 = vmatprep.subr.bf16.mxu0 0
    %2679 = vmatpush1.bf16.msra.mxu0 %v1681
    %2680 = vmatprep.subr.bf16.mxu0 0
    %2681 = vmatpush1.bf16.msra.mxu0 %v1682
    %2682 = vmatprep.subr.bf16.mxu0 0
    %2683 = vmatpush1.bf16.msra.mxu0 %v1683
    %2684 = vmatprep.subr.bf16.mxu0 0
    %2685 = vmatpush1.bf16.msra.mxu0 %v1684
    %2686 = vmatprep.subr.bf16.mxu0 0
    %2687 = vmatpush1.bf16.msra.mxu0 %v1685
    %2688 = vmatprep.subr.bf16.mxu0 0
    %2689 = vmatpush1.bf16.msra.mxu0 %v1686
    %2690 = vmatprep.subr.bf16.mxu0 0
    %2691 = vmatpush1.bf16.msra.mxu0 %v1687
    %2692 = vmatprep.subr.bf16.mxu0 0
    %2693 = vmatpush1.bf16.msra.mxu0 %v1688
    %2694 = vmatprep.subr.bf16.mxu0 0
    %2695 = vmatpush1.bf16.msra.mxu0 %v1689
    %2696 = vmatprep.subr.bf16.mxu0 0
    %2697 = vmatpush1.bf16.msra.mxu0 %v1690
    %2698 = vmatprep.subr.bf16.mxu0 0
    %2699 = vmatpush1.bf16.msra.mxu0 %v1691
    %2700 = vmatprep.subr.bf16.mxu0 0
    %2701 = vmatpush1.bf16.msra.mxu0 %v1692
    %2702 = vmatprep.subr.bf16.mxu0 0
    %2703 = vmatpush1.bf16.msra.mxu0 %v1693
    %2704 = vmatprep.subr.bf16.mxu0 0
    %2705 = vmatpush1.bf16.msra.mxu0 %v1694
    %2706 = vmatprep.mubr.bf16.mxu0 %v2671
    %2707 = vmatmul.mubr.bf16.gmra.mrb[0].mxu0 %v2670
    %v2708 = vpop.f32.mrb[0].mxu0
    %v2709 = vadd.f32 %v1549, %v2708
    %v2710 = vpop.f32.mrb[0].mxu0
    %v2711 = vpop.f32.mrb[0].mxu0
    %v2712 = vadd.f32 %v1549, %v2711
    %v2713 = vpop.f32.mrb[0].mxu0
    %2714 = vdwg.mxu0
    %2715 = vmatprep.subr.bf16.mxu0 0
    %2716 = vmatpush1.bf16.msra.mxu0 %v1695
    %2717 = vmatprep.subr.bf16.mxu0 0
    %2718 = vmatpush1.bf16.msra.mxu0 %v1696
    %2719 = vmatprep.subr.bf16.mxu0 0
    %2720 = vmatpush1.bf16.msra.mxu0 %v1697
    %2721 = vmatprep.subr.bf16.mxu0 0
    %2722 = vmatpush1.bf16.msra.mxu0 %v1698
    %2723 = vmatprep.subr.bf16.mxu0 0
    %2724 = vmatpush1.bf16.msra.mxu0 %v1699
    %2725 = vmatprep.subr.bf16.mxu0 0
    %2726 = vmatpush1.bf16.msra.mxu0 %v1700
    %2727 = vmatprep.subr.bf16.mxu0 0
    %2728 = vmatpush1.bf16.msra.mxu0 %v1701
    %2729 = vmatprep.subr.bf16.mxu0 0
    %2730 = vmatpush1.bf16.msra.mxu0 %v1702
    %2731 = vmatprep.subr.bf16.mxu0 0
    %2732 = vmatpush1.bf16.msra.mxu0 %v1703
    %2733 = vmatprep.subr.bf16.mxu0 0
    %2734 = vmatpush1.bf16.msra.mxu0 %v1704
    %2735 = vmatprep.subr.bf16.mxu0 0
    %2736 = vmatpush1.bf16.msra.mxu0 %v1705
    %2737 = vmatprep.subr.bf16.mxu0 0
    %2738 = vmatpush1.bf16.msra.mxu0 %v1706
    %2739 = vmatprep.subr.bf16.mxu0 0
    %2740 = vmatpush1.bf16.msra.mxu0 %v1707
    %2741 = vmatprep.subr.bf16.mxu0 0
    %2742 = vmatpush1.bf16.msra.mxu0 %v1708
    %2743 = vmatprep.subr.bf16.mxu0 0
    %2744 = vmatpush1.bf16.msra.mxu0 %v1709
    %2745 = vmatprep.subr.bf16.mxu0 0
    %2746 = vmatpush1.bf16.msra.mxu0 %v1710
    %2747 = vmatprep.mubr.bf16.mxu0 %v2673
    %2748 = vmatmul.mubr.bf16.gmra.mrb[0].mxu0 %v2672
    %v2749 = vpop.f32.mrb[0].mxu0
    %v2750 = vadd.f32 %v2709, %v2749
    %v2751 = vpop.f32.mrb[0].mxu0
    %v2752 = vpop.f32.mrb[0].mxu0
    %v2753 = vadd.f32 %v2712, %v2752
    %v2754 = vpop.f32.mrb[0].mxu0
    %2755 = vdwg.mxu0
    %v2756 = vadd.f32 %v2491, %v2750
    %v2757 = vadd.f32 %v2492, %v2753
    %s2758 = scalar_lea.vmem [#allocation14], 16
    %2759 = vst [vmem:[%s2758] sm:$0xff] %v2756
    %2760 = vst [vmem:[%s2758 + $0x8] sm:$0xff] %v2757
    // Predicated region
    $region86: #{tpu_custom_call.1} parent=1 // pred_check
      _
    $region87: #{tpu_custom_call.1} parent=1 // pred_check_branch
      %2762 = sbr.rel (0) target = $region89
    $region88: #{tpu_custom_call.1} parent=1 // pred_region
      %s2764 = ssub.s32 512, 512
      %2765 = vsyncadd [#allocation4], %s2764
      %s2766 = sshll.u32 [#allocation14], 4
      %s2767 = int_to_ptr.vmem [resolvable:$true] %s2766
      %2772 = dma.vmem_to_hbm [thread:$0]  %s2767, 512, %s14, [#allocation4], 128, 128, 8
    $region89: #{tpu_custom_call.1} parent=1 // pred_fallthru
      _
    // Predicated region
    $region90: #{tpu_custom_call.1} parent=1 // pred_check
      _
    $region91: #{tpu_custom_call.1} parent=1 // pred_check_branch
      %2774 = sbr.rel (0) target = $region93
    $region92: #{tpu_custom_call.1} parent=1 // pred_region
      %2775 = dma.done [#allocation4], 512
    $region93: #{tpu_custom_call.1} parent=1 // pred_fallthru
      _
    %2776 = vsyncpa [#allocation3], 1
    %2777 = vsyncpa [#allocation6], 1
    %2778 = vsyncpa [#allocation9], 1
    %2779 = vsyncpa [#allocation12], 1
    %2780 = vsyncpa [#allocation4], 1

</llo_original>
